<compile_context>
chip_gen: v7x
topology: tpu7x:2x2x1
jax: 0.10.0
libtpu: 0.0.40
codegen_flags: <defaults>
</compile_context>

<pallas_src>
import functools

import numpy as np
import jax
import jax.numpy as jnp
from jax.experimental import pallas as pl
from jax.experimental.pallas import tpu as pltpu

ACT_DTYPE = jnp.bfloat16          # inter-layer activation / weight storage dtype
_EPS = 1e-5
_VMEM = pl.BlockSpec(memory_space=pltpu.MemorySpace.VMEM)


def _vmem_limit_bytes():
    """Per-generation scoped-VMEM budget: ~3/4 of physical VMEM, capped at 100 MiB.
    (-> ~96 MiB on 128-MiB v5e/v6e, 48 MiB on 64-MiB v7x; safe fallback otherwise)."""
    try:
        cap = int(pltpu.get_tpu_info().vmem_capacity_bytes)
    except Exception:
        cap = 64 * 1024 * 1024
    return int(max(32 * 1024 * 1024, min(100 * 1024 * 1024, cap * 3 // 4)))


# ----------------------------- Pallas kernels -----------------------------

def _unit_kernel(x_ref, scale_ref, shift_ref, w_ref, b_ref,
                 p_ref, stats_ref, xpad_ref, rm_ref,
                 *, H, W, Cin, Cout, apply_act):
    """One fused Unit step for a single image.

    x_ref:     (1, H, W, Cin)   previous layer's pooled PRE-BN output (or raw input)
    scale_ref: (1, Cin) f32     previous layer's BN scale  (unused if apply_act=False)
    shift_ref: (1, Cin) f32     previous layer's BN shift  (unused if apply_act=False)
    w_ref:     (9*Cin, Cout)    conv weights, tap-major / channel-minor K order
    b_ref:     (1, Cout) f32    conv bias
    p_ref:     (1, Ho, Wo, Cout) pooled (pre-BN) output (bf16)
    stats_ref: (1, 2, Cout) f32 per-image [sum, sum_sq] of pooled activations
    xpad_ref:  (H+2, W+2, Cin)  scratch: zero-halo padded, BN+ReLU'd input
    rm_ref:    (Ho, W, Cout) f32 scratch: row-pooled conv output
    """
    Ho, Wo = H // 2, W // 2

    # ---- previous layer's BatchNorm+ReLU fused here; halo stays exactly zero ----
    xpad_ref[...] = jnp.zeros_like(xpad_ref)     # re-zero each step (megacore-safe)
    x = x_ref[0].astype(jnp.float32)             # (H, W, Cin)
    if apply_act:
        x = jnp.maximum(x * scale_ref[...].reshape(1, 1, Cin)
                        + shift_ref[...].reshape(1, 1, Cin), 0.0)
    xpad_ref[pl.ds(1, H), pl.ds(1, W), :] = x.astype(xpad_ref.dtype)

    # ---- 3x3 conv: in-VMEM im2col along K (K = 9*Cin), ONE MXU contraction ----
    taps = []
    for kh in range(3):
        for kw in range(3):
            t = xpad_ref[kh:kh + H, kw:kw + W, :]          # (H, W, Cin)
            taps.append(t.reshape(H * W, Cin))
    col = jnp.concatenate(taps, axis=-1)                   # (H*W, 9*Cin)
    y = jnp.dot(col, w_ref[...].astype(col.dtype),
                preferred_element_type=jnp.float32) + b_ref[...]   # (H*W, Cout) f32

    # ---- 2x2 max-pool: row pairs straight from the accumulator value, column
    #      pairs via the small row-max scratch (no full conv-output materialization)
    y4 = y.reshape(Ho, 2, W, Cout)
    rm_ref[...] = jnp.maximum(y4[:, 0], y4[:, 1])                  # (Ho, W, Cout)
    p = jnp.maximum(rm_ref[:, pl.ds(0, Wo, 2), :],
                    rm_ref[:, pl.ds(1, Wo, 2), :])                 # (Ho, Wo, Cout)
    # TODO(synk): with Cout % 128 == 0 the column pool could be a contiguous
    #   (Ho, Wo, 2*Cout) reshape + lane slice, and the store lane-dense (Ho, Wo*Cout).

    pq = p.astype(p_ref.dtype)
    p_ref[...] = pq[None]

    # ---- per-image BN partial stats, from the SAME bf16-rounded values the
    #      consumer will normalize (keeps stats/normalization consistent) ----
    pf = pq.astype(jnp.float32)
    s = jnp.sum(jnp.sum(pf, axis=0), axis=0, keepdims=True)        # (1, Cout)
    q = jnp.sum(jnp.sum(pf * pf, axis=0), axis=0, keepdims=True)   # (1, Cout)
    stats_ref[...] = jnp.concatenate([s, q], axis=0)[None]         # (1, 2, Cout)


def _fc_kernel(x_ref, scale_ref, shift_ref, w_ref, b_ref, o_ref):
    """Last layer's BN+ReLU fused with the Linear head: o = relu(x*s + t) @ w + b."""
    x = x_ref[...].astype(jnp.float32)                             # (N, F)
    h = jnp.maximum(x * scale_ref[...] + shift_ref[...], 0.0)
    o_ref[...] = (jnp.dot(h, w_ref[...].astype(jnp.float32),
                          preferred_element_type=jnp.float32)
                  + b_ref[...]).astype(o_ref.dtype)


# ----------------------------- wrappers -----------------------------

def unit_forward(x, scale, shift, w2d, b, *, apply_act):
    """Fused [prev BN+ReLU] -> pad -> Conv3x3 -> MaxPool2x2 -> (pooled, BN stats).

    x: (N, H, W, Cin) bf16 pre-BN NHWC activations (or raw input for layer 0).
    Returns pooled (N, H//2, W//2, Cout) bf16 (PRE-BN) and stats (N, 2, Cout) f32.
    """
    N, H, W, Cin = x.shape
    Cout = w2d.shape[-1]
    assert H % 2 == 0 and W % 2 == 0 and W % 8 == 0, (H, W)
    Ho, Wo = H // 2, W // 2
    # bf16 packs 16 sublanes/vreg: keep the padded-tap scratch in f32 when W is not
    # a multiple of 16 so the (H,W,Cin)->(H*W,Cin) reshapes stay tile-aligned.
    pad_dt = ACT_DTYPE if (W % 16 == 0) else jnp.float32

    kern = functools.partial(_unit_kernel, H=H, W=W, Cin=Cin, Cout=Cout,
                             apply_act=apply_act)
    pooled, stats = pl.pallas_call(
        kern,
        out_shape=(jax.ShapeDtypeStruct((N, Ho, Wo, Cout), ACT_DTYPE),
                   jax.ShapeDtypeStruct((N, 2, Cout), jnp.float32)),
        grid_spec=pltpu.PrefetchScalarGridSpec(
            num_scalar_prefetch=0,
            grid=(N,),
            in_specs=[
                pl.BlockSpec((1, H, W, Cin), lambda n: (n, 0, 0, 0)),
                pl.BlockSpec((1, Cin), lambda n: (0, 0)),
                pl.BlockSpec((1, Cin), lambda n: (0, 0)),
                pl.BlockSpec((9 * Cin, Cout), lambda n: (0, 0)),
                pl.BlockSpec((1, Cout), lambda n: (0, 0)),
            ],
            out_specs=[
                pl.BlockSpec((1, Ho, Wo, Cout), lambda n: (n, 0, 0, 0)),
                pl.BlockSpec((1, 2, Cout), lambda n: (n, 0, 0)),
            ],
            scratch_shapes=[
                pltpu.VMEM((H + 2, W + 2, Cin), pad_dt),
                pltpu.VMEM((Ho, W, Cout), jnp.float32),
            ],
        ),
        compiler_params=pltpu.CompilerParams(
            dimension_semantics=("parallel",),
            vmem_limit_bytes=_vmem_limit_bytes()),
    )(x, scale, shift, w2d, b)
    return pooled, stats


def _bn_scale_shift(stats, gamma, beta, count):
    """Finish BatchNorm from per-image partial stats (tiny, plain JAX, computed once)."""
    s = jnp.sum(stats[:, 0, :], axis=0)
    q = jnp.sum(stats[:, 1, :], axis=0)
    mean = s / count
    var = jnp.maximum(q / count - mean * mean, 0.0)
    inv = jax.lax.rsqrt(var + _EPS)
    scale = gamma * inv
    shift = beta - mean * scale
    return scale, shift                                     # (C,), (C,)


def fc_forward(x, scale_f, shift_f, w_fo, b):
    """Fused final BN+ReLU + nn.Linear head (tiny -> single-shot VMEM call)."""
    N, _ = x.shape
    O = w_fo.shape[-1]
    return pl.pallas_call(
        _fc_kernel,
        out_shape=jax.ShapeDtypeStruct((N, O), jnp.float32),
        in_specs=[_VMEM, _VMEM, _VMEM, _VMEM, _VMEM],
        out_specs=_VMEM,
        compiler_params=pltpu.CompilerParams(vmem_limit_bytes=_vmem_limit_bytes()),
    )(x, scale_f, shift_f, w_fo, b)


# ----------------------------- model -----------------------------

class ClassifierPallas:
    def __init__(self, layers, base_nc=16, spatial=4, key=None):
        key = jax.random.PRNGKey(0) if key is None else key
        self.layers = layers
        self.units = []
        in_c, nc = 1, base_nc
        for _ in range(layers):
            key, k1, k2 = jax.random.split(key, 3)
            w = jax.random.normal(k1, (nc, in_c, 3, 3), jnp.float32) * 0.1
            b = jax.random.normal(k2, (nc,), jnp.float32) * 0.1
            # (Cout,Cin,3,3) -> (kh,kw,Cin,Cout) -> (9*Cin, Cout): matches the kernel's
            # tap-major / channel-minor im2col K ordering.
            w2d = jnp.transpose(w, (2, 3, 1, 0)).reshape(9 * in_c, nc).astype(ACT_DTYPE)
            gamma = jnp.ones((nc,), jnp.float32)
            beta = jnp.zeros((nc,), jnp.float32)
            self.units.append((w2d, b.reshape(1, nc), gamma, beta))
            in_c, nc = nc, nc * 2

        c_last = in_c
        # fc in_features = spatial*spatial*nc//2 (module formula with 100 -> spatial)
        in_features = spatial * spatial * nc // 2
        key, k1, k2 = jax.random.split(key, 3)
        fc_w = jax.random.normal(k1, (2, in_features), jnp.float32) * 0.05
        self.fc_b = (jax.random.normal(k2, (2,), jnp.float32) * 0.05).reshape(1, 2)
        # Pre-permute fc columns from PyTorch NCHW-flatten order to the NHWC-flatten
        # order our kernels produce, and pre-transpose to (F, O): no runtime
        # activation transpose or weight transpose is needed.
        perm = np.transpose(
            np.arange(in_features).reshape(c_last, spatial, spatial), (1, 2, 0)
        ).reshape(-1)
        self.fc_w = jnp.asarray(fc_w[:, perm].T, ACT_DTYPE)         # (F, 2)

    def __call__(self, x_nchw):
        # TODO(synk): input is quantized to bf16 relative to the f32 PyTorch reference.
        x = jnp.transpose(x_nchw, (0, 2, 3, 1)).astype(ACT_DTYPE)   # NCHW -> NHWC
        N = x.shape[0]
        Cin = x.shape[-1]
        scale = jnp.ones((1, Cin), jnp.float32)
        shift = jnp.zeros((1, Cin), jnp.float32)
        apply_act = False                      # layer 0 consumes the raw input
        for (w2d, b, gamma, beta) in self.units:
            pooled, stats = unit_forward(x, scale, shift, w2d, b, apply_act=apply_act)
            _, Ho, Wo, C = pooled.shape
            sc, sh = _bn_scale_shift(stats, gamma, beta, float(N * Ho * Wo))
            scale, shift = sc.reshape(1, C), sh.reshape(1, C)
            x = pooled
            apply_act = True

        # Final unit's BN+ReLU is fused into the fc kernel (per-feature scale/shift
        # broadcast in NHWC flatten order: channel is fastest-varying).
        _, Ho, Wo, C = x.shape
        Fdim = Ho * Wo * C
        scale_f = jnp.tile(scale.reshape(-1), Ho * Wo).reshape(1, Fdim)
        shift_f = jnp.tile(shift.reshape(-1), Ho * Wo).reshape(1, Fdim)
        x2 = x.reshape(N, Fdim)                # NHWC flatten (fc weights pre-permuted)
        return fc_forward(x2, scale_f, shift_f, self.fc_w, self.fc_b)


# ----------------------------- demo -----------------------------

if __name__ == "__main__":
    key = jax.random.PRNGKey(0)
    kx, kp = jax.random.split(key)

    N, H, W = 2, 16, 16
    layers = 2
    x = jax.random.normal(kx, (N, 1, H, W), jnp.float32)     # NCHW, like PyTorch

    model = ClassifierPallas(layers=layers, base_nc=16,
                             spatial=H // (2 ** layers), key=kp)
    fwd = jax.jit(lambda inp: model(inp))
    out = fwd(x)
    jax.block_until_ready(out)
    assert out.shape == (N, 2), out.shape
    print("KERNEL_OK")
</pallas_src>

<mosaic_0001>
module attributes {stable_mosaic.version = 11 : i64} {
  func.func @_unit_kernel(%arg0: i32, %arg1: memref<1x16x16x1xbf16, #tpu.memory_space<vmem>>, %arg2: memref<1x1xf32, #tpu.memory_space<vmem>>, %arg3: memref<1x1xf32, #tpu.memory_space<vmem>>, %arg4: memref<9x16xbf16, #tpu.memory_space<vmem>>, %arg5: memref<1x16xf32, #tpu.memory_space<vmem>>, %arg6: memref<1x8x8x16xbf16, #tpu.memory_space<vmem>>, %arg7: memref<1x2x16xf32, #tpu.memory_space<vmem>>, %arg8: memref<18x18x1xbf16, #tpu.memory_space<vmem>>, %arg9: memref<8x16x16xf32, #tpu.memory_space<vmem>>) attributes {dimension_semantics = [#tpu.dimension_semantics<parallel>], iteration_bounds = array<i64: 2>, scalar_prefetch = 0 : i64, scratch_operands = 2 : i64, tpu.core_type = #tpu.core_type<tc>, window_params = [{transform_indices = @transform_0, window_bounds = array<i64: 1, 16, 16, 1>}, {pipeline_mode = #tpu.pipeline_mode<synchronous>, transform_indices = @transform_1, window_bounds = array<i64: 1, 1>}, {pipeline_mode = #tpu.pipeline_mode<synchronous>, transform_indices = @transform_2, window_bounds = array<i64: 1, 1>}, {pipeline_mode = #tpu.pipeline_mode<synchronous>, transform_indices = @transform_3, window_bounds = array<i64: 9, 16>}, {pipeline_mode = #tpu.pipeline_mode<synchronous>, transform_indices = @transform_4, window_bounds = array<i64: 1, 16>}, {transform_indices = @transform_5, window_bounds = array<i64: 1, 8, 8, 16>}, {transform_indices = @transform_6, window_bounds = array<i64: 1, 2, 16>}]} {
    %cst = arith.constant 0.000000e+00 : bf16
    %0 = vector.broadcast %cst : bf16 to vector<18x18x1xbf16>
    %c0 = arith.constant 0 : index
    %c0_0 = arith.constant 0 : index
    %c0_1 = arith.constant 0 : index
    %1 = vector.load %arg8[%c0, %c0_0, %c0_1] : memref<18x18x1xbf16, #tpu.memory_space<vmem>>, vector<18x18x1xbf16>
    tpu.vector_store %arg8[%c0, %c0_0, %c0_1], %0 {strides = array<i32>} : memref<18x18x1xbf16, #tpu.memory_space<vmem>>, vector<18x18x1xbf16>,
    %c0_2 = arith.constant 0 : index
    %c0_3 = arith.constant 0 : index
    %c0_4 = arith.constant 0 : index
    %c0_5 = arith.constant 0 : index
    %2 = vector.load %arg1[%c0_2, %c0_3, %c0_4, %c0_5] : memref<1x16x16x1xbf16, #tpu.memory_space<vmem>>, vector<1x16x16x1xbf16>
    %3 = vector.shape_cast %2 : vector<1x16x16x1xbf16> to vector<16x16x1xbf16>
    %4 = arith.extf %3 : vector<16x16x1xbf16> to vector<16x16x1xf32>
    %5 = arith.truncf %4 : vector<16x16x1xf32> to vector<16x16x1xbf16>
    %c1 = arith.constant 1 : index
    %c1_6 = arith.constant 1 : index
    %c0_7 = arith.constant 0 : index
    %6 = vector.load %arg8[%c1, %c1_6, %c0_7] : memref<18x18x1xbf16, #tpu.memory_space<vmem>>, vector<16x16x1xbf16>
    tpu.vector_store %arg8[%c1, %c1_6, %c0_7], %5 {strides = array<i32>} : memref<18x18x1xbf16, #tpu.memory_space<vmem>>, vector<16x16x1xbf16>,
    %c0_8 = arith.constant 0 : index
    %c0_9 = arith.constant 0 : index
    %c0_10 = arith.constant 0 : index
    %7 = vector.load %arg8[%c0_8, %c0_9, %c0_10] : memref<18x18x1xbf16, #tpu.memory_space<vmem>>, vector<16x16x1xbf16>
    %8 = vector.shape_cast %7 : vector<16x16x1xbf16> to vector<256x1xbf16>
    %c0_11 = arith.constant 0 : index
    %c1_12 = arith.constant 1 : index
    %c0_13 = arith.constant 0 : index
    %9 = vector.load %arg8[%c0_11, %c1_12, %c0_13] : memref<18x18x1xbf16, #tpu.memory_space<vmem>>, vector<16x16x1xbf16>
    %10 = vector.shape_cast %9 : vector<16x16x1xbf16> to vector<256x1xbf16>
    %c0_14 = arith.constant 0 : index
    %c2 = arith.constant 2 : index
    %c0_15 = arith.constant 0 : index
    %11 = vector.load %arg8[%c0_14, %c2, %c0_15] : memref<18x18x1xbf16, #tpu.memory_space<vmem>>, vector<16x16x1xbf16>
    %12 = vector.shape_cast %11 : vector<16x16x1xbf16> to vector<256x1xbf16>
    %c1_16 = arith.constant 1 : index
    %c0_17 = arith.constant 0 : index
    %c0_18 = arith.constant 0 : index
    %13 = vector.load %arg8[%c1_16, %c0_17, %c0_18] : memref<18x18x1xbf16, #tpu.memory_space<vmem>>, vector<16x16x1xbf16>
    %14 = vector.shape_cast %13 : vector<16x16x1xbf16> to vector<256x1xbf16>
    %c1_19 = arith.constant 1 : index
    %c1_20 = arith.constant 1 : index
    %c0_21 = arith.constant 0 : index
    %15 = vector.load %arg8[%c1_19, %c1_20, %c0_21] : memref<18x18x1xbf16, #tpu.memory_space<vmem>>, vector<16x16x1xbf16>
    %16 = vector.shape_cast %15 : vector<16x16x1xbf16> to vector<256x1xbf16>
    %c1_22 = arith.constant 1 : index
    %c2_23 = arith.constant 2 : index
    %c0_24 = arith.constant 0 : index
    %17 = vector.load %arg8[%c1_22, %c2_23, %c0_24] : memref<18x18x1xbf16, #tpu.memory_space<vmem>>, vector<16x16x1xbf16>
    %18 = vector.shape_cast %17 : vector<16x16x1xbf16> to vector<256x1xbf16>
    %c2_25 = arith.constant 2 : index
    %c0_26 = arith.constant 0 : index
    %c0_27 = arith.constant 0 : index
    %19 = vector.load %arg8[%c2_25, %c0_26, %c0_27] : memref<18x18x1xbf16, #tpu.memory_space<vmem>>, vector<16x16x1xbf16>
    %20 = vector.shape_cast %19 : vector<16x16x1xbf16> to vector<256x1xbf16>
    %c2_28 = arith.constant 2 : index
    %c1_29 = arith.constant 1 : index
    %c0_30 = arith.constant 0 : index
    %21 = vector.load %arg8[%c2_28, %c1_29, %c0_30] : memref<18x18x1xbf16, #tpu.memory_space<vmem>>, vector<16x16x1xbf16>
    %22 = vector.shape_cast %21 : vector<16x16x1xbf16> to vector<256x1xbf16>
    %c2_31 = arith.constant 2 : index
    %c2_32 = arith.constant 2 : index
    %c0_33 = arith.constant 0 : index
    %23 = vector.load %arg8[%c2_31, %c2_32, %c0_33] : memref<18x18x1xbf16, #tpu.memory_space<vmem>>, vector<16x16x1xbf16>
    %24 = vector.shape_cast %23 : vector<16x16x1xbf16> to vector<256x1xbf16>
    %25 = tpu.concatenate %8, %10, %12, %14, %16, %18, %20, %22, %24 in 1 : vector<256x1xbf16>, vector<256x1xbf16>, vector<256x1xbf16>, vector<256x1xbf16>, vector<256x1xbf16>, vector<256x1xbf16>, vector<256x1xbf16>, vector<256x1xbf16>, vector<256x1xbf16> -> vector<256x9xbf16>
    %c0_34 = arith.constant 0 : index
    %c0_35 = arith.constant 0 : index
    %26 = vector.load %arg4[%c0_34, %c0_35] : memref<9x16xbf16, #tpu.memory_space<vmem>>, vector<9x16xbf16>
    %cst_36 = arith.constant dense<0.000000e+00> : vector<256x16xf32>
    %27 = tpu.matmul %25, %26, %cst_36 {dimension_numbers = #tpu.dot_dimension_numbers<[1], [0], [0], [1], [0, 0, 1, 1], [], []>} : vector<256x9xbf16>, vector<9x16xbf16>, vector<256x16xf32> -> vector<256x16xf32>
    %c0_37 = arith.constant 0 : index
    %c0_38 = arith.constant 0 : index
    %28 = vector.load %arg5[%c0_37, %c0_38] : memref<1x16xf32, #tpu.memory_space<vmem>>, vector<1x16xf32>
    %29 = vector.broadcast %28 : vector<1x16xf32> to vector<256x16xf32>
    %30 = arith.addf %27, %29 : vector<256x16xf32>
    %31 = vector.shape_cast %30 : vector<256x16xf32> to vector<8x2x16x16xf32>
    %32 = vector.extract_strided_slice %31 {offsets = [0, 0, 0, 0], sizes = [8, 1, 16, 16], strides = [1, 1, 1, 1]} : vector<8x2x16x16xf32> to vector<8x1x16x16xf32>
    %33 = vector.shape_cast %32 : vector<8x1x16x16xf32> to vector<8x16x16xf32>
    %34 = vector.extract_strided_slice %31 {offsets = [0, 1, 0, 0], sizes = [8, 1, 16, 16], strides = [1, 1, 1, 1]} : vector<8x2x16x16xf32> to vector<8x1x16x16xf32>
    %35 = vector.shape_cast %34 : vector<8x1x16x16xf32> to vector<8x16x16xf32>
    %36 = arith.maximumf %33, %35 : vector<8x16x16xf32>
    %c0_39 = arith.constant 0 : index
    %c0_40 = arith.constant 0 : index
    %c0_41 = arith.constant 0 : index
    %37 = vector.load %arg9[%c0_39, %c0_40, %c0_41] : memref<8x16x16xf32, #tpu.memory_space<vmem>>, vector<8x16x16xf32>
    tpu.vector_store %arg9[%c0_39, %c0_40, %c0_41], %36 {strides = array<i32>} : memref<8x16x16xf32, #tpu.memory_space<vmem>>, vector<8x16x16xf32>,
    %c0_42 = arith.constant 0 : index
    %c0_43 = arith.constant 0 : index
    %c0_44 = arith.constant 0 : index
    %38 = tpu.strided_load %arg9[%c0_42, %c0_43, %c0_44] {strides = array<i32: 1, 2, 1>} : memref<8x16x16xf32, #tpu.memory_space<vmem>>, vector<8x8x16xf32>
    %c0_45 = arith.constant 0 : index
    %c1_46 = arith.constant 1 : index
    %c0_47 = arith.constant 0 : index
    %39 = tpu.strided_load %arg9[%c0_45, %c1_46, %c0_47] {strides = array<i32: 1, 2, 1>} : memref<8x16x16xf32, #tpu.memory_space<vmem>>, vector<8x8x16xf32>
    %40 = arith.maximumf %38, %39 : vector<8x8x16xf32>
    %41 = arith.truncf %40 : vector<8x8x16xf32> to vector<8x8x16xbf16>
    %42 = vector.shape_cast %41 : vector<8x8x16xbf16> to vector<1x8x8x16xbf16>
    %c0_48 = arith.constant 0 : index
    %c0_49 = arith.constant 0 : index
    %c0_50 = arith.constant 0 : index
    %c0_51 = arith.constant 0 : index
    %43 = vector.load %arg6[%c0_48, %c0_49, %c0_50, %c0_51] : memref<1x8x8x16xbf16, #tpu.memory_space<vmem>>, vector<1x8x8x16xbf16>
    tpu.vector_store %arg6[%c0_48, %c0_49, %c0_50, %c0_51], %42 {strides = array<i32>} : memref<1x8x8x16xbf16, #tpu.memory_space<vmem>>, vector<1x8x8x16xbf16>,
    %44 = arith.extf %41 : vector<8x8x16xbf16> to vector<8x8x16xf32>
    %cst_52 = arith.constant dense<0.000000e+00> : vector<8x16xf32>
    %45 = vector.multi_reduction <add>, %44, %cst_52 [0] : vector<8x8x16xf32> to vector<8x16xf32>
    %cst_53 = arith.constant dense<0.000000e+00> : vector<16xf32>
    %46 = vector.multi_reduction <add>, %45, %cst_53 [0] : vector<8x16xf32> to vector<16xf32>
    %47 = vector.shape_cast %46 : vector<16xf32> to vector<1x16xf32>
    %48 = arith.mulf %44, %44 : vector<8x8x16xf32>
    %cst_54 = arith.constant dense<0.000000e+00> : vector<8x16xf32>
    %49 = vector.multi_reduction <add>, %48, %cst_54 [0] : vector<8x8x16xf32> to vector<8x16xf32>
    %cst_55 = arith.constant dense<0.000000e+00> : vector<16xf32>
    %50 = vector.multi_reduction <add>, %49, %cst_55 [0] : vector<8x16xf32> to vector<16xf32>
    %51 = vector.shape_cast %50 : vector<16xf32> to vector<1x16xf32>
    %52 = tpu.concatenate %47, %51 in 0 : vector<1x16xf32>, vector<1x16xf32> -> vector<2x16xf32>
    %53 = vector.shape_cast %52 : vector<2x16xf32> to vector<1x2x16xf32>
    %c0_56 = arith.constant 0 : index
    %c0_57 = arith.constant 0 : index
    %c0_58 = arith.constant 0 : index
    %54 = vector.load %arg7[%c0_56, %c0_57, %c0_58] : memref<1x2x16xf32, #tpu.memory_space<vmem>>, vector<1x2x16xf32>
    tpu.vector_store %arg7[%c0_56, %c0_57, %c0_58], %53 {strides = array<i32>} : memref<1x2x16xf32, #tpu.memory_space<vmem>>, vector<1x2x16xf32>,
    return
  }
  func.func @transform_0(%arg0: i32) -> (i32, i32, i32, i32) {
    %c0_i32 = arith.constant 0 : i32
    %c0_i32_0 = arith.constant 0 : i32
    %c0_i32_1 = arith.constant 0 : i32
    %c0_i32_2 = arith.constant 0 : i32
    return %arg0, %c0_i32, %c0_i32_0, %c0_i32_1 : i32, i32, i32, i32
  }
  func.func @transform_1(%arg0: i32) -> (i32, i32) {
    %c0_i32 = arith.constant 0 : i32
    %c0_i32_0 = arith.constant 0 : i32
    %c0_i32_1 = arith.constant 0 : i32
    return %c0_i32, %c0_i32_0 : i32, i32
  }
  func.func @transform_2(%arg0: i32) -> (i32, i32) {
    %c0_i32 = arith.constant 0 : i32
    %c0_i32_0 = arith.constant 0 : i32
    %c0_i32_1 = arith.constant 0 : i32
    return %c0_i32, %c0_i32_0 : i32, i32
  }
  func.func @transform_3(%arg0: i32) -> (i32, i32) {
    %c0_i32 = arith.constant 0 : i32
    %c0_i32_0 = arith.constant 0 : i32
    %c0_i32_1 = arith.constant 0 : i32
    return %c0_i32, %c0_i32_0 : i32, i32
  }
  func.func @transform_4(%arg0: i32) -> (i32, i32) {
    %c0_i32 = arith.constant 0 : i32
    %c0_i32_0 = arith.constant 0 : i32
    %c0_i32_1 = arith.constant 0 : i32
    return %c0_i32, %c0_i32_0 : i32, i32
  }
  func.func @transform_5(%arg0: i32) -> (i32, i32, i32, i32) {
    %c0_i32 = arith.constant 0 : i32
    %c0_i32_0 = arith.constant 0 : i32
    %c0_i32_1 = arith.constant 0 : i32
    %c0_i32_2 = arith.constant 0 : i32
    return %arg0, %c0_i32, %c0_i32_0, %c0_i32_1 : i32, i32, i32, i32
  }
  func.func @transform_6(%arg0: i32) -> (i32, i32, i32) {
    %c0_i32 = arith.constant 0 : i32
    %c0_i32_0 = arith.constant 0 : i32
    %c0_i32_1 = arith.constant 0 : i32
    return %arg0, %c0_i32, %c0_i32_0 : i32, i32, i32
  }
}

module attributes {stable_mosaic.version = 11 : i64} {
  func.func @_unit_kernel(%arg0: i32, %arg1: memref<1x8x8x16xbf16, #tpu.memory_space<vmem>>, %arg2: memref<1x16xf32, #tpu.memory_space<vmem>>, %arg3: memref<1x16xf32, #tpu.memory_space<vmem>>, %arg4: memref<144x32xbf16, #tpu.memory_space<vmem>>, %arg5: memref<1x32xf32, #tpu.memory_space<vmem>>, %arg6: memref<1x4x4x32xbf16, #tpu.memory_space<vmem>>, %arg7: memref<1x2x32xf32, #tpu.memory_space<vmem>>, %arg8: memref<10x10x16xf32, #tpu.memory_space<vmem>>, %arg9: memref<4x8x32xf32, #tpu.memory_space<vmem>>) attributes {dimension_semantics = [#tpu.dimension_semantics<parallel>], iteration_bounds = array<i64: 2>, scalar_prefetch = 0 : i64, scratch_operands = 2 : i64, tpu.core_type = #tpu.core_type<tc>, window_params = [{transform_indices = @transform_0, window_bounds = array<i64: 1, 8, 8, 16>}, {pipeline_mode = #tpu.pipeline_mode<synchronous>, transform_indices = @transform_1, window_bounds = array<i64: 1, 16>}, {pipeline_mode = #tpu.pipeline_mode<synchronous>, transform_indices = @transform_2, window_bounds = array<i64: 1, 16>}, {pipeline_mode = #tpu.pipeline_mode<synchronous>, transform_indices = @transform_3, window_bounds = array<i64: 144, 32>}, {pipeline_mode = #tpu.pipeline_mode<synchronous>, transform_indices = @transform_4, window_bounds = array<i64: 1, 32>}, {transform_indices = @transform_5, window_bounds = array<i64: 1, 4, 4, 32>}, {transform_indices = @transform_6, window_bounds = array<i64: 1, 2, 32>}]} {
    %cst = arith.constant 0.000000e+00 : f32
    %0 = vector.broadcast %cst : f32 to vector<10x10x16xf32>
    %c0 = arith.constant 0 : index
    %c0_0 = arith.constant 0 : index
    %c0_1 = arith.constant 0 : index
    %1 = vector.load %arg8[%c0, %c0_0, %c0_1] : memref<10x10x16xf32, #tpu.memory_space<vmem>>, vector<10x10x16xf32>
    tpu.vector_store %arg8[%c0, %c0_0, %c0_1], %0 {strides = array<i32>} : memref<10x10x16xf32, #tpu.memory_space<vmem>>, vector<10x10x16xf32>,
    %c0_2 = arith.constant 0 : index
    %c0_3 = arith.constant 0 : index
    %c0_4 = arith.constant 0 : index
    %c0_5 = arith.constant 0 : index
    %2 = vector.load %arg1[%c0_2, %c0_3, %c0_4, %c0_5] : memref<1x8x8x16xbf16, #tpu.memory_space<vmem>>, vector<1x8x8x16xbf16>
    %3 = vector.shape_cast %2 : vector<1x8x8x16xbf16> to vector<8x8x16xbf16>
    %4 = arith.extf %3 : vector<8x8x16xbf16> to vector<8x8x16xf32>
    %c0_6 = arith.constant 0 : index
    %c0_7 = arith.constant 0 : index
    %5 = vector.load %arg2[%c0_6, %c0_7] : memref<1x16xf32, #tpu.memory_space<vmem>>, vector<1x16xf32>
    %6 = vector.shape_cast %5 : vector<1x16xf32> to vector<1x1x16xf32>
    %7 = vector.broadcast %6 : vector<1x1x16xf32> to vector<8x8x16xf32>
    %8 = arith.mulf %4, %7 : vector<8x8x16xf32>
    %c0_8 = arith.constant 0 : index
    %c0_9 = arith.constant 0 : index
    %9 = vector.load %arg3[%c0_8, %c0_9] : memref<1x16xf32, #tpu.memory_space<vmem>>, vector<1x16xf32>
    %10 = vector.shape_cast %9 : vector<1x16xf32> to vector<1x1x16xf32>
    %11 = vector.broadcast %10 : vector<1x1x16xf32> to vector<8x8x16xf32>
    %12 = arith.addf %8, %11 : vector<8x8x16xf32>
    %cst_10 = arith.constant 0.000000e+00 : f32
    %13 = vector.broadcast %cst_10 : f32 to vector<8x8x16xf32>
    %14 = arith.maximumf %12, %13 : vector<8x8x16xf32>
    %c1 = arith.constant 1 : index
    %c1_11 = arith.constant 1 : index
    %c0_12 = arith.constant 0 : index
    %15 = vector.load %arg8[%c1, %c1_11, %c0_12] : memref<10x10x16xf32, #tpu.memory_space<vmem>>, vector<8x8x16xf32>
    tpu.vector_store %arg8[%c1, %c1_11, %c0_12], %14 {strides = array<i32>} : memref<10x10x16xf32, #tpu.memory_space<vmem>>, vector<8x8x16xf32>,
    %c0_13 = arith.constant 0 : index
    %c0_14 = arith.constant 0 : index
    %c0_15 = arith.constant 0 : index
    %16 = vector.load %arg8[%c0_13, %c0_14, %c0_15] : memref<10x10x16xf32, #tpu.memory_space<vmem>>, vector<8x8x16xf32>
    %17 = vector.shape_cast %16 : vector<8x8x16xf32> to vector<64x16xf32>
    %c0_16 = arith.constant 0 : index
    %c1_17 = arith.constant 1 : index
    %c0_18 = arith.constant 0 : index
    %18 = vector.load %arg8[%c0_16, %c1_17, %c0_18] : memref<10x10x16xf32, #tpu.memory_space<vmem>>, vector<8x8x16xf32>
    %19 = vector.shape_cast %18 : vector<8x8x16xf32> to vector<64x16xf32>
    %c0_19 = arith.constant 0 : index
    %c2 = arith.constant 2 : index
    %c0_20 = arith.constant 0 : index
    %20 = vector.load %arg8[%c0_19, %c2, %c0_20] : memref<10x10x16xf32, #tpu.memory_space<vmem>>, vector<8x8x16xf32>
    %21 = vector.shape_cast %20 : vector<8x8x16xf32> to vector<64x16xf32>
    %c1_21 = arith.constant 1 : index
    %c0_22 = arith.constant 0 : index
    %c0_23 = arith.constant 0 : index
    %22 = vector.load %arg8[%c1_21, %c0_22, %c0_23] : memref<10x10x16xf32, #tpu.memory_space<vmem>>, vector<8x8x16xf32>
    %23 = vector.shape_cast %22 : vector<8x8x16xf32> to vector<64x16xf32>
    %c1_24 = arith.constant 1 : index
    %c1_25 = arith.constant 1 : index
    %c0_26 = arith.constant 0 : index
    %24 = vector.load %arg8[%c1_24, %c1_25, %c0_26] : memref<10x10x16xf32, #tpu.memory_space<vmem>>, vector<8x8x16xf32>
    %25 = vector.shape_cast %24 : vector<8x8x16xf32> to vector<64x16xf32>
    %c1_27 = arith.constant 1 : index
    %c2_28 = arith.constant 2 : index
    %c0_29 = arith.constant 0 : index
    %26 = vector.load %arg8[%c1_27, %c2_28, %c0_29] : memref<10x10x16xf32, #tpu.memory_space<vmem>>, vector<8x8x16xf32>
    %27 = vector.shape_cast %26 : vector<8x8x16xf32> to vector<64x16xf32>
    %c2_30 = arith.constant 2 : index
    %c0_31 = arith.constant 0 : index
    %c0_32 = arith.constant 0 : index
    %28 = vector.load %arg8[%c2_30, %c0_31, %c0_32] : memref<10x10x16xf32, #tpu.memory_space<vmem>>, vector<8x8x16xf32>
    %29 = vector.shape_cast %28 : vector<8x8x16xf32> to vector<64x16xf32>
    %c2_33 = arith.constant 2 : index
    %c1_34 = arith.constant 1 : index
    %c0_35 = arith.constant 0 : index
    %30 = vector.load %arg8[%c2_33, %c1_34, %c0_35] : memref<10x10x16xf32, #tpu.memory_space<vmem>>, vector<8x8x16xf32>
    %31 = vector.shape_cast %30 : vector<8x8x16xf32> to vector<64x16xf32>
    %c2_36 = arith.constant 2 : index
    %c2_37 = arith.constant 2 : index
    %c0_38 = arith.constant 0 : index
    %32 = vector.load %arg8[%c2_36, %c2_37, %c0_38] : memref<10x10x16xf32, #tpu.memory_space<vmem>>, vector<8x8x16xf32>
    %33 = vector.shape_cast %32 : vector<8x8x16xf32> to vector<64x16xf32>
    %34 = tpu.concatenate %17, %19, %21, %23, %25, %27, %29, %31, %33 in 1 : vector<64x16xf32>, vector<64x16xf32>, vector<64x16xf32>, vector<64x16xf32>, vector<64x16xf32>, vector<64x16xf32>, vector<64x16xf32>, vector<64x16xf32>, vector<64x16xf32> -> vector<64x144xf32>
    %c0_39 = arith.constant 0 : index
    %c0_40 = arith.constant 0 : index
    %35 = vector.load %arg4[%c0_39, %c0_40] : memref<144x32xbf16, #tpu.memory_space<vmem>>, vector<144x32xbf16>
    %36 = arith.extf %35 : vector<144x32xbf16> to vector<144x32xf32>
    %cst_41 = arith.constant dense<0.000000e+00> : vector<64x32xf32>
    %37 = tpu.matmul %34, %36, %cst_41 {dimension_numbers = #tpu.dot_dimension_numbers<[1], [0], [0], [1], [0, 0, 1, 1], [], []>} : vector<64x144xf32>, vector<144x32xf32>, vector<64x32xf32> -> vector<64x32xf32>
    %c0_42 = arith.constant 0 : index
    %c0_43 = arith.constant 0 : index
    %38 = vector.load %arg5[%c0_42, %c0_43] : memref<1x32xf32, #tpu.memory_space<vmem>>, vector<1x32xf32>
    %39 = vector.broadcast %38 : vector<1x32xf32> to vector<64x32xf32>
    %40 = arith.addf %37, %39 : vector<64x32xf32>
    %41 = vector.shape_cast %40 : vector<64x32xf32> to vector<4x2x8x32xf32>
    %42 = vector.extract_strided_slice %41 {offsets = [0, 0, 0, 0], sizes = [4, 1, 8, 32], strides = [1, 1, 1, 1]} : vector<4x2x8x32xf32> to vector<4x1x8x32xf32>
    %43 = vector.shape_cast %42 : vector<4x1x8x32xf32> to vector<4x8x32xf32>
    %44 = vector.extract_strided_slice %41 {offsets = [0, 1, 0, 0], sizes = [4, 1, 8, 32], strides = [1, 1, 1, 1]} : vector<4x2x8x32xf32> to vector<4x1x8x32xf32>
    %45 = vector.shape_cast %44 : vector<4x1x8x32xf32> to vector<4x8x32xf32>
    %46 = arith.maximumf %43, %45 : vector<4x8x32xf32>
    %c0_44 = arith.constant 0 : index
    %c0_45 = arith.constant 0 : index
    %c0_46 = arith.constant 0 : index
    %47 = vector.load %arg9[%c0_44, %c0_45, %c0_46] : memref<4x8x32xf32, #tpu.memory_space<vmem>>, vector<4x8x32xf32>
    tpu.vector_store %arg9[%c0_44, %c0_45, %c0_46], %46 {strides = array<i32>} : memref<4x8x32xf32, #tpu.memory_space<vmem>>, vector<4x8x32xf32>,
    %c0_47 = arith.constant 0 : index
    %c0_48 = arith.constant 0 : index
    %c0_49 = arith.constant 0 : index
    %48 = tpu.strided_load %arg9[%c0_47, %c0_48, %c0_49] {strides = array<i32: 1, 2, 1>} : memref<4x8x32xf32, #tpu.memory_space<vmem>>, vector<4x4x32xf32>
    %c0_50 = arith.constant 0 : index
    %c1_51 = arith.constant 1 : index
    %c0_52 = arith.constant 0 : index
    %49 = tpu.strided_load %arg9[%c0_50, %c1_51, %c0_52] {strides = array<i32: 1, 2, 1>} : memref<4x8x32xf32, #tpu.memory_space<vmem>>, vector<4x4x32xf32>
    %50 = arith.maximumf %48, %49 : vector<4x4x32xf32>
    %51 = arith.truncf %50 : vector<4x4x32xf32> to vector<4x4x32xbf16>
    %52 = vector.shape_cast %51 : vector<4x4x32xbf16> to vector<1x4x4x32xbf16>
    %c0_53 = arith.constant 0 : index
    %c0_54 = arith.constant 0 : index
    %c0_55 = arith.constant 0 : index
    %c0_56 = arith.constant 0 : index
    %53 = vector.load %arg6[%c0_53, %c0_54, %c0_55, %c0_56] : memref<1x4x4x32xbf16, #tpu.memory_space<vmem>>, vector<1x4x4x32xbf16>
    tpu.vector_store %arg6[%c0_53, %c0_54, %c0_55, %c0_56], %52 {strides = array<i32>} : memref<1x4x4x32xbf16, #tpu.memory_space<vmem>>, vector<1x4x4x32xbf16>,
    %54 = arith.extf %51 : vector<4x4x32xbf16> to vector<4x4x32xf32>
    %cst_57 = arith.constant dense<0.000000e+00> : vector<4x32xf32>
    %55 = vector.multi_reduction <add>, %54, %cst_57 [0] : vector<4x4x32xf32> to vector<4x32xf32>
    %cst_58 = arith.constant dense<0.000000e+00> : vector<32xf32>
    %56 = vector.multi_reduction <add>, %55, %cst_58 [0] : vector<4x32xf32> to vector<32xf32>
    %57 = vector.shape_cast %56 : vector<32xf32> to vector<1x32xf32>
    %58 = arith.mulf %54, %54 : vector<4x4x32xf32>
    %cst_59 = arith.constant dense<0.000000e+00> : vector<4x32xf32>
    %59 = vector.multi_reduction <add>, %58, %cst_59 [0] : vector<4x4x32xf32> to vector<4x32xf32>
    %cst_60 = arith.constant dense<0.000000e+00> : vector<32xf32>
    %60 = vector.multi_reduction <add>, %59, %cst_60 [0] : vector<4x32xf32> to vector<32xf32>
    %61 = vector.shape_cast %60 : vector<32xf32> to vector<1x32xf32>
    %62 = tpu.concatenate %57, %61 in 0 : vector<1x32xf32>, vector<1x32xf32> -> vector<2x32xf32>
    %63 = vector.shape_cast %62 : vector<2x32xf32> to vector<1x2x32xf32>
    %c0_61 = arith.constant 0 : index
    %c0_62 = arith.constant 0 : index
    %c0_63 = arith.constant 0 : index
    %64 = vector.load %arg7[%c0_61, %c0_62, %c0_63] : memref<1x2x32xf32, #tpu.memory_space<vmem>>, vector<1x2x32xf32>
    tpu.vector_store %arg7[%c0_61, %c0_62, %c0_63], %63 {strides = array<i32>} : memref<1x2x32xf32, #tpu.memory_space<vmem>>, vector<1x2x32xf32>,
    return
  }
  func.func @transform_0(%arg0: i32) -> (i32, i32, i32, i32) {
    %c0_i32 = arith.constant 0 : i32
    %c0_i32_0 = arith.constant 0 : i32
    %c0_i32_1 = arith.constant 0 : i32
    %c0_i32_2 = arith.constant 0 : i32
    return %arg0, %c0_i32, %c0_i32_0, %c0_i32_1 : i32, i32, i32, i32
  }
  func.func @transform_1(%arg0: i32) -> (i32, i32) {
    %c0_i32 = arith.constant 0 : i32
    %c0_i32_0 = arith.constant 0 : i32
    %c0_i32_1 = arith.constant 0 : i32
    return %c0_i32, %c0_i32_0 : i32, i32
  }
  func.func @transform_2(%arg0: i32) -> (i32, i32) {
    %c0_i32 = arith.constant 0 : i32
    %c0_i32_0 = arith.constant 0 : i32
    %c0_i32_1 = arith.constant 0 : i32
    return %c0_i32, %c0_i32_0 : i32, i32
  }
  func.func @transform_3(%arg0: i32) -> (i32, i32) {
    %c0_i32 = arith.constant 0 : i32
    %c0_i32_0 = arith.constant 0 : i32
    %c0_i32_1 = arith.constant 0 : i32
    return %c0_i32, %c0_i32_0 : i32, i32
  }
  func.func @transform_4(%arg0: i32) -> (i32, i32) {
    %c0_i32 = arith.constant 0 : i32
    %c0_i32_0 = arith.constant 0 : i32
    %c0_i32_1 = arith.constant 0 : i32
    return %c0_i32, %c0_i32_0 : i32, i32
  }
  func.func @transform_5(%arg0: i32) -> (i32, i32, i32, i32) {
    %c0_i32 = arith.constant 0 : i32
    %c0_i32_0 = arith.constant 0 : i32
    %c0_i32_1 = arith.constant 0 : i32
    %c0_i32_2 = arith.constant 0 : i32
    return %arg0, %c0_i32, %c0_i32_0, %c0_i32_1 : i32, i32, i32, i32
  }
  func.func @transform_6(%arg0: i32) -> (i32, i32, i32) {
    %c0_i32 = arith.constant 0 : i32
    %c0_i32_0 = arith.constant 0 : i32
    %c0_i32_1 = arith.constant 0 : i32
    return %arg0, %c0_i32, %c0_i32_0 : i32, i32, i32
  }
}

module attributes {stable_mosaic.version = 11 : i64} {
  func.func @_fc_kernel(%arg0: memref<2x512xbf16, #tpu.memory_space<vmem>>, %arg1: memref<1x512xf32, #tpu.memory_space<vmem>>, %arg2: memref<1x512xf32, #tpu.memory_space<vmem>>, %arg3: memref<512x2xbf16, #tpu.memory_space<vmem>>, %arg4: memref<1x2xf32, #tpu.memory_space<vmem>>, %arg5: memref<2x2xf32, #tpu.memory_space<vmem>>) attributes {dimension_semantics = [], scalar_prefetch = 0 : i64, scratch_operands = 0 : i64, tpu.core_type = #tpu.core_type<tc>} {
    %c0 = arith.constant 0 : index
    %c0_0 = arith.constant 0 : index
    %0 = vector.load %arg0[%c0, %c0_0] : memref<2x512xbf16, #tpu.memory_space<vmem>>, vector<2x512xbf16>
    %1 = arith.extf %0 : vector<2x512xbf16> to vector<2x512xf32>
    %c0_1 = arith.constant 0 : index
    %c0_2 = arith.constant 0 : index
    %2 = vector.load %arg1[%c0_1, %c0_2] : memref<1x512xf32, #tpu.memory_space<vmem>>, vector<1x512xf32>
    %3 = vector.broadcast %2 : vector<1x512xf32> to vector<2x512xf32>
    %4 = arith.mulf %1, %3 : vector<2x512xf32>
    %c0_3 = arith.constant 0 : index
    %c0_4 = arith.constant 0 : index
    %5 = vector.load %arg2[%c0_3, %c0_4] : memref<1x512xf32, #tpu.memory_space<vmem>>, vector<1x512xf32>
    %6 = vector.broadcast %5 : vector<1x512xf32> to vector<2x512xf32>
    %7 = arith.addf %4, %6 : vector<2x512xf32>
    %cst = arith.constant 0.000000e+00 : f32
    %8 = vector.broadcast %cst : f32 to vector<2x512xf32>
    %9 = arith.maximumf %7, %8 : vector<2x512xf32>
    %c0_5 = arith.constant 0 : index
    %c0_6 = arith.constant 0 : index
    %10 = vector.load %arg3[%c0_5, %c0_6] : memref<512x2xbf16, #tpu.memory_space<vmem>>, vector<512x2xbf16>
    %11 = arith.extf %10 : vector<512x2xbf16> to vector<512x2xf32>
    %cst_7 = arith.constant dense<0.000000e+00> : vector<2x2xf32>
    %12 = tpu.matmul %9, %11, %cst_7 {dimension_numbers = #tpu.dot_dimension_numbers<[1], [0], [0], [1], [0, 0, 1, 1], [], []>} : vector<2x512xf32>, vector<512x2xf32>, vector<2x2xf32> -> vector<2x2xf32>
    %c0_8 = arith.constant 0 : index
    %c0_9 = arith.constant 0 : index
    %13 = vector.load %arg4[%c0_8, %c0_9] : memref<1x2xf32, #tpu.memory_space<vmem>>, vector<1x2xf32>
    %14 = vector.broadcast %13 : vector<1x2xf32> to vector<2x2xf32>
    %15 = arith.addf %12, %14 : vector<2x2xf32>
    %c0_10 = arith.constant 0 : index
    %c0_11 = arith.constant 0 : index
    %16 = vector.load %arg5[%c0_10, %c0_11] : memref<2x2xf32, #tpu.memory_space<vmem>>, vector<2x2xf32>
    tpu.vector_store %arg5[%c0_10, %c0_11], %15 {strides = array<i32>} : memref<2x2xf32, #tpu.memory_space<vmem>>, vector<2x2xf32>,
    return
  }
}

</mosaic_0001>

<llo_original>
// kernel: tile.14
$region0: #{tile.14}
  #allocation0 [shape = 's32[1]{0}', space=sflag, size = 0x4, scoped, tag = 'scoped memory for tile.14']
  %s0 = inlined_call_operand.vmem [shape: f32[32], index: 0, kind: input, shape index: {}]
  %s1 = inlined_call_operand.vmem [shape: f32[16,32], index: 1, kind: output, shape index: {}]
  // Predicated region
  $region2: #{tile.14} parent=0 // pred_check
    _
  $region3: #{tile.14} parent=0 // pred_check_branch
    %3 = sbr.rel (0) target = $region5
  $region4: #{tile.14} parent=0 // pred_region
    _
  $region5: #{tile.14} parent=0 // pred_fallthru
    _
  %v4 = vld [vmem:[%s0] ss:$0 sm:$0xff]
  %5 = vst [vmem:[%s1] sm:$0xff] %v4
  %s6 = scalar_lea.vmem %s1, 8
  %7 = vst [vmem:[%s6] sm:$0xff] %v4

// kernel: tile.15
$region0: #{tile.15}
  %s0 = inlined_call_operand.vmem [shape: f32[16,32], index: 0, kind: input, shape index: {}]
  %s1 = inlined_call_operand.vmem [shape: f32[1,512], index: 1, kind: output, shape index: {}]
  $region1: #{tile.15} parent=0
    #allocation0 [shape = 'u8[16384]{0}', space=vmem, size = 0x4000, scoped, tag = 'scoped mem for output reshape']
    %v2 = vld [vmem:[%s0] ss:$4 sm:$0xf]
    %vm3 = vcmask 261120
    %4 = vst.msk [vmem:[#allocation0] ss:$8 sm:$0xf] %vm3, %v2
    %s5 = scalar_lea.vmem %s0, 3
    %v6 = vld [vmem:[%s5] ss:$4 sm:$0xf]
    %7 = vrot.lane.b32.xlu0 %v6, 96
    %v8 = vpop.permute.xlu0 %7
    %vm9 = vcmask 1048320
    %10 = vst.msk [vmem:[#allocation0] ss:$8 sm:$0xf] %vm9, %v8
    %s11 = scalar_lea.vmem %s0, 2
    %v12 = vld [vmem:[%s11] ss:$4 sm:$0xf]
    %13 = vrot.lane.b32.xlu0 %v12, 64
    %v14 = vpop.permute.xlu0 %13
    %vm15 = vcmask 785920
    %16 = vst.msk [vmem:[#allocation0] ss:$8 sm:$0xf] %vm15, %v14
    %s17 = scalar_lea.vmem %s0, 1
    %v18 = vld [vmem:[%s17] ss:$4 sm:$0xf]
    %19 = vrot.lane.b32.xlu0 %v18, 32
    %v20 = vpop.permute.xlu0 %19
    %vm21 = vcmask 523520
    %22 = vst.msk [vmem:[#allocation0] ss:$8 sm:$0xf] %vm21, %v20
    %s24 = sshllo.u32 0, 1
    %v26 = vld [vmem:[#allocation0] sm:%s24]
    %s27 = sshllo.u32 0, 1
    %28 = vst [vmem:[%s1] sm:%s27] %v26
    %s29 = scalar_lea.vmem [#allocation0], 8
    %v30 = vld [vmem:[%s29] sm:%s24]
    %s31 = sshllo.u32 0, 1
    %s32 = scalar_lea.vmem %s1, 1
    %33 = vst [vmem:[%s32] sm:%s31] %v30
    %s34 = scalar_lea.vmem [#allocation0], 16
    %v35 = vld [vmem:[%s34] sm:%s24]
    %s36 = sshllo.u32 0, 1
    %s37 = smul.addr 1, 2
    %s38 = scalar_lea.vmem %s1, %s37
    %39 = vst [vmem:[%s38] sm:%s36] %v35
    %s40 = scalar_lea.vmem [#allocation0], 24
    %v41 = vld [vmem:[%s40] sm:%s24]
    %s42 = sshllo.u32 0, 1
    %s43 = smul.addr 1, 3
    %s44 = scalar_lea.vmem %s1, %s43
    %45 = vst [vmem:[%s44] sm:%s42] %v41

// kernel: _lambda_.5
$region0: #{_lambda_.5}
  #allocation0 [shape = 'u32[]', space=smem, size = 0x4, offset = 0x4, fixed_abs, tag = 'smem constant byte address 0x4 - core index']
  #allocation1 [shape = 'u32[144,128]{1,0:T(1,128)}', space=vmem, size = 0x12000, scoped, tag = 'internal scratch']
  %s0 = inlined_call_operand.vmem [shape: bf16[2,512], index: 0, kind: input, shape index: {}]
  %s1 = inlined_call_operand.vmem [shape: f32[1,512], index: 1, kind: input, shape index: {}]
  %s2 = inlined_call_operand.vmem [shape: f32[1,512], index: 2, kind: input, shape index: {}]
  %s3 = inlined_call_operand.vmem [shape: bf16[512,2], index: 3, kind: input, shape index: {}]
  %s4 = inlined_call_operand.vmem [shape: f32[1,2], index: 4, kind: input, shape index: {}]
  %s5 = inlined_call_operand.hbm [shape: f32[2,2], index: 5, kind: output, shape index: {}]
  %s6 = sld [smem:[#allocation0]]
  $region30: #{_lambda_.5} parent=0
    _
  %s8 = ssub.s32 1, %s6
  %s9 = scalar_select 0, %s8, %s6
  $region1: #{_lambda_.5} parent=0
    #allocation2 [shape = 'u8[1024]{0}', space=vmem, size = 0x400, scoped, tag = 'output window, operand 0, single buffered']
    #allocation3 [shape = 's32[1]{0}', space=sflag, size = 0x4, scoped, tag = 'scoped memory for _lambda_.5']
    %10 = vsyncpa [#allocation3], 0
    // Predicated region
    $region2: #{_lambda_.5} parent=1 // pred_check
      _
    $region3: #{_lambda_.5} parent=1 // pred_check_branch
      %12 = sbr.rel (0) target = $region5
    $region4: #{_lambda_.5} parent=1 // pred_region
      _
    $region5: #{_lambda_.5} parent=1 // pred_fallthru
      _
    // Predicated region
    $region6: #{_lambda_.5} parent=1 // pred_check
      _
    $region7: #{_lambda_.5} parent=1 // pred_check_branch
      %14 = sbr.rel (0) target = $region9
    $region8: #{_lambda_.5} parent=1 // pred_region
      _
    $region9: #{_lambda_.5} parent=1 // pred_fallthru
      _
    // Predicated region
    $region10: #{_lambda_.5} parent=1 // pred_check
      _
    $region11: #{_lambda_.5} parent=1 // pred_check_branch
      %16 = sbr.rel (0) target = $region13
    $region12: #{_lambda_.5} parent=1 // pred_region
      _
    $region13: #{_lambda_.5} parent=1 // pred_fallthru
      _
    // Predicated region
    $region14: #{_lambda_.5} parent=1 // pred_check
      _
    $region15: #{_lambda_.5} parent=1 // pred_check_branch
      %18 = sbr.rel (0) target = $region17
    $region16: #{_lambda_.5} parent=1 // pred_region
      _
    $region17: #{_lambda_.5} parent=1 // pred_fallthru
      _
    // Predicated region
    $region18: #{_lambda_.5} parent=1 // pred_check
      _
    $region19: #{_lambda_.5} parent=1 // pred_check_branch
      %20 = sbr.rel (0) target = $region21
    $region20: #{_lambda_.5} parent=1 // pred_region
      _
    $region21: #{_lambda_.5} parent=1 // pred_fallthru
      _
    %v21 = vld [vmem:[%s0] sm:$0xf]
    %v22 = vunpack.c.l.bf16 %v21
    %v23 = vld [vmem:[%s1] sm:$0xf]
    %v25 = vlaneseq
    %v26 = vshrl.u32 %v25, 7
    %v27 = vsub.s32 0, %v26
    %v28 = vrot.slane %v23, %v27
    %v29 = vlaneseq
    %v30 = vshrl.u32 %v29, 7
    %v31 = vsub.s32 1, %v30
    %v32 = vrot.slane %v23, %v31
    %v33 = vlaneseq
    %v34 = vshrl.u32 %v33, 7
    %v35 = vsub.s32 2, %v34
    %v36 = vrot.slane %v23, %v35
    %v37 = vlaneseq
    %v38 = vshrl.u32 %v37, 7
    %v39 = vsub.s32 3, %v38
    %v40 = vrot.slane %v23, %v39
    %v41 = vcombine.low %v28, %v32
    %v42 = vcombine.low %v36, %v40
    %v44 = vunpack.c.l.s4 1983009808
    %v45 = vunpack.c.0.s8 %v44
    %v46 = vlaneseq
    %v47 = vshrl.u32 %v46, 7
    %v48 = vsub.s32 %v45, %v47
    %v49 = vrot.slane %v41, %v48
    %v51 = vunpack.c.l.s4 1983009808
    %v52 = vunpack.c.0.s8 %v51
    %v53 = vlaneseq
    %v54 = vshrl.u32 %v53, 7
    %v55 = vsub.s32 %v52, %v54
    %v56 = vrot.slane %v42, %v55
    %v57 = vcombine.low %v49, %v56
    %v59 = vmul.f32 %v22, %v57
    %v60 = vld [vmem:[%s2] sm:$0xf]
    %v62 = vlaneseq
    %v63 = vshrl.u32 %v62, 7
    %v64 = vsub.s32 0, %v63
    %v65 = vrot.slane %v60, %v64
    %v66 = vlaneseq
    %v67 = vshrl.u32 %v66, 7
    %v68 = vsub.s32 1, %v67
    %v69 = vrot.slane %v60, %v68
    %v70 = vlaneseq
    %v71 = vshrl.u32 %v70, 7
    %v72 = vsub.s32 2, %v71
    %v73 = vrot.slane %v60, %v72
    %v74 = vlaneseq
    %v75 = vshrl.u32 %v74, 7
    %v76 = vsub.s32 3, %v75
    %v77 = vrot.slane %v60, %v76
    %v78 = vcombine.low %v65, %v69
    %v79 = vcombine.low %v73, %v77
    %v81 = vunpack.c.l.s4 1983009808
    %v82 = vunpack.c.0.s8 %v81
    %v83 = vlaneseq
    %v84 = vshrl.u32 %v83, 7
    %v85 = vsub.s32 %v82, %v84
    %v86 = vrot.slane %v78, %v85
    %v88 = vunpack.c.l.s4 1983009808
    %v89 = vunpack.c.0.s8 %v88
    %v90 = vlaneseq
    %v91 = vshrl.u32 %v90, 7
    %v92 = vsub.s32 %v89, %v91
    %v93 = vrot.slane %v79, %v92
    %v94 = vcombine.low %v86, %v93
    %v96 = vadd.f32 %v59, %v94
    %v97 = vmax.f32 %v96, 0.0
    %v98 = vld [vmem:[%s3] sm:$0xf]
    %v99 = vld [vmem:[%s3 + $0x4] sm:$0xf]
    %v100 = vld [vmem:[%s3 + $0x8] sm:$0xf]
    %v101 = vld [vmem:[%s3 + $0xc] sm:$0xf]
    %v102 = vld [vmem:[%s3 + $0x10] sm:$0xf]
    %v103 = vld [vmem:[%s3 + $0x14] sm:$0xf]
    %v104 = vld [vmem:[%s3 + $0x18] sm:$0xf]
    %v105 = vld [vmem:[%s3 + $0x1c] sm:$0xf]
    %v106 = vld [vmem:[%s3 + $0x20] sm:$0xf]
    %v107 = vld [vmem:[%s3 + $0x24] sm:$0xf]
    %v108 = vld [vmem:[%s3 + $0x28] sm:$0xf]
    %v109 = vld [vmem:[%s3 + $0x2c] sm:$0xf]
    %v110 = vld [vmem:[%s3 + $0x30] sm:$0xf]
    %v111 = vld [vmem:[%s3 + $0x34] sm:$0xf]
    %v112 = vld [vmem:[%s3 + $0x38] sm:$0xf]
    %v113 = vld [vmem:[%s3 + $0x3c] sm:$0xf]
    %v114 = vld [vmem:[%s3 + $0x40] sm:$0xf]
    %v115 = vld [vmem:[%s3 + $0x44] sm:$0xf]
    %v116 = vld [vmem:[%s3 + $0x48] sm:$0xf]
    %v117 = vld [vmem:[%s3 + $0x4c] sm:$0xf]
    %v118 = vld [vmem:[%s3 + $0x50] sm:$0xf]
    %v119 = vld [vmem:[%s3 + $0x54] sm:$0xf]
    %v120 = vld [vmem:[%s3 + $0x58] sm:$0xf]
    %v121 = vld [vmem:[%s3 + $0x5c] sm:$0xf]
    %v122 = vld [vmem:[%s3 + $0x60] sm:$0xf]
    %v123 = vld [vmem:[%s3 + $0x64] sm:$0xf]
    %v124 = vld [vmem:[%s3 + $0x68] sm:$0xf]
    %v125 = vld [vmem:[%s3 + $0x6c] sm:$0xf]
    %v126 = vld [vmem:[%s3 + $0x70] sm:$0xf]
    %v127 = vld [vmem:[%s3 + $0x74] sm:$0xf]
    %v128 = vld [vmem:[%s3 + $0x78] sm:$0xf]
    %v129 = vld [vmem:[%s3 + $0x7c] sm:$0xf]
    %v130 = vld [vmem:[%s3 + $0x80] sm:$0xf]
    %v131 = vld [vmem:[%s3 + $0x84] sm:$0xf]
    %v132 = vld [vmem:[%s3 + $0x88] sm:$0xf]
    %v133 = vld [vmem:[%s3 + $0x8c] sm:$0xf]
    %v134 = vld [vmem:[%s3 + $0x90] sm:$0xf]
    %v135 = vld [vmem:[%s3 + $0x94] sm:$0xf]
    %v136 = vld [vmem:[%s3 + $0x98] sm:$0xf]
    %v137 = vld [vmem:[%s3 + $0x9c] sm:$0xf]
    %v138 = vld [vmem:[%s3 + $0xa0] sm:$0xf]
    %v139 = vld [vmem:[%s3 + $0xa4] sm:$0xf]
    %v140 = vld [vmem:[%s3 + $0xa8] sm:$0xf]
    %v141 = vld [vmem:[%s3 + $0xac] sm:$0xf]
    %v142 = vld [vmem:[%s3 + $0xb0] sm:$0xf]
    %v143 = vld [vmem:[%s3 + $0xb4] sm:$0xf]
    %v144 = vld [vmem:[%s3 + $0xb8] sm:$0xf]
    %v145 = vld [vmem:[%s3 + $0xbc] sm:$0xf]
    %v146 = vld [vmem:[%s3 + $0xc0] sm:$0xf]
    %v147 = vld [vmem:[%s3 + $0xc4] sm:$0xf]
    %v148 = vld [vmem:[%s3 + $0xc8] sm:$0xf]
    %v149 = vld [vmem:[%s3 + $0xcc] sm:$0xf]
    %v150 = vld [vmem:[%s3 + $0xd0] sm:$0xf]
    %v151 = vld [vmem:[%s3 + $0xd4] sm:$0xf]
    %v152 = vld [vmem:[%s3 + $0xd8] sm:$0xf]
    %v153 = vld [vmem:[%s3 + $0xdc] sm:$0xf]
    %v154 = vld [vmem:[%s3 + $0xe0] sm:$0xf]
    %v155 = vld [vmem:[%s3 + $0xe4] sm:$0xf]
    %v156 = vld [vmem:[%s3 + $0xe8] sm:$0xf]
    %v157 = vld [vmem:[%s3 + $0xec] sm:$0xf]
    %v158 = vld [vmem:[%s3 + $0xf0] sm:$0xf]
    %v159 = vld [vmem:[%s3 + $0xf4] sm:$0xf]
    %v160 = vld [vmem:[%s3 + $0xf8] sm:$0xf]
    %v161 = vld [vmem:[%s3 + $0xfc] sm:$0xf]
    %v162 = vunpack.c.l.bf16 %v98
    %v163 = vunpack.c.l.bf16 %v99
    %v164 = vunpack.c.l.bf16 %v100
    %v165 = vunpack.c.l.bf16 %v101
    %v166 = vunpack.c.l.bf16 %v102
    %v167 = vunpack.c.l.bf16 %v103
    %v168 = vunpack.c.l.bf16 %v104
    %v169 = vunpack.c.l.bf16 %v105
    %v170 = vunpack.c.l.bf16 %v106
    %v171 = vunpack.c.l.bf16 %v107
    %v172 = vunpack.c.l.bf16 %v108
    %v173 = vunpack.c.l.bf16 %v109
    %v174 = vunpack.c.l.bf16 %v110
    %v175 = vunpack.c.l.bf16 %v111
    %v176 = vunpack.c.l.bf16 %v112
    %v177 = vunpack.c.l.bf16 %v113
    %v178 = vunpack.c.l.bf16 %v114
    %v179 = vunpack.c.l.bf16 %v115
    %v180 = vunpack.c.l.bf16 %v116
    %v181 = vunpack.c.l.bf16 %v117
    %v182 = vunpack.c.l.bf16 %v118
    %v183 = vunpack.c.l.bf16 %v119
    %v184 = vunpack.c.l.bf16 %v120
    %v185 = vunpack.c.l.bf16 %v121
    %v186 = vunpack.c.l.bf16 %v122
    %v187 = vunpack.c.l.bf16 %v123
    %v188 = vunpack.c.l.bf16 %v124
    %v189 = vunpack.c.l.bf16 %v125
    %v190 = vunpack.c.l.bf16 %v126
    %v191 = vunpack.c.l.bf16 %v127
    %v192 = vunpack.c.l.bf16 %v128
    %v193 = vunpack.c.l.bf16 %v129
    %v194 = vunpack.c.l.bf16 %v130
    %v195 = vunpack.c.l.bf16 %v131
    %v196 = vunpack.c.l.bf16 %v132
    %v197 = vunpack.c.l.bf16 %v133
    %v198 = vunpack.c.l.bf16 %v134
    %v199 = vunpack.c.l.bf16 %v135
    %v200 = vunpack.c.l.bf16 %v136
    %v201 = vunpack.c.l.bf16 %v137
    %v202 = vunpack.c.l.bf16 %v138
    %v203 = vunpack.c.l.bf16 %v139
    %v204 = vunpack.c.l.bf16 %v140
    %v205 = vunpack.c.l.bf16 %v141
    %v206 = vunpack.c.l.bf16 %v142
    %v207 = vunpack.c.l.bf16 %v143
    %v208 = vunpack.c.l.bf16 %v144
    %v209 = vunpack.c.l.bf16 %v145
    %v210 = vunpack.c.l.bf16 %v146
    %v211 = vunpack.c.l.bf16 %v147
    %v212 = vunpack.c.l.bf16 %v148
    %v213 = vunpack.c.l.bf16 %v149
    %v214 = vunpack.c.l.bf16 %v150
    %v215 = vunpack.c.l.bf16 %v151
    %v216 = vunpack.c.l.bf16 %v152
    %v217 = vunpack.c.l.bf16 %v153
    %v218 = vunpack.c.l.bf16 %v154
    %v219 = vunpack.c.l.bf16 %v155
    %v220 = vunpack.c.l.bf16 %v156
    %v221 = vunpack.c.l.bf16 %v157
    %v222 = vunpack.c.l.bf16 %v158
    %v223 = vunpack.c.l.bf16 %v159
    %v224 = vunpack.c.l.bf16 %v160
    %v225 = vunpack.c.l.bf16 %v161
    %v226 = vld [vmem:[%s4] sm:$0x1]
    %v228 = vlaneseq
    %v229 = vshrl.u32 %v228, 7
    %v230 = vsub.s32 0, %v229
    %v231 = vrot.slane %v226, %v230
    %v234 = vcombine.high %v97, %v97
    %v236 = vunpack.c.l.s4 1983009808
    %v237 = vunpack.c.0.s8 %v236
    %v238 = vlaneseq
    %v239 = vshrl.u32 %v238, 7
    %v240 = vsub.s32 %v237, %v239
    %v241 = vrot.slane %v97, %v240
    %v243 = vunpack.c.l.s4 1983009808
    %v244 = vunpack.c.0.s8 %v243
    %v245 = vlaneseq
    %v246 = vshrl.u32 %v245, 7
    %v247 = vsub.s32 %v244, %v246
    %v248 = vrot.slane %v234, %v247
    %v249 = vcombine.high %v241, %v241
    %v250 = vcombine.high %v248, %v248
    %255 = vmatprep.subr.mxu0 0.0
    %256 = vmatpush1.msra.mxu0 %v162
    %257 = vmatprep.subr.mxu0 0.0
    %258 = vmatpush1.msra.mxu0 %v163
    %259 = vmatprep.subr.mxu0 0.0
    %260 = vmatpush1.msra.mxu0 %v164
    %261 = vmatprep.subr.mxu0 0.0
    %262 = vmatpush1.msra.mxu0 %v165
    %263 = vmatprep.subr.mxu0 0.0
    %264 = vmatpush1.msra.mxu0 %v166
    %265 = vmatprep.subr.mxu0 0.0
    %266 = vmatpush1.msra.mxu0 %v167
    %267 = vmatprep.subr.mxu0 0.0
    %268 = vmatpush1.msra.mxu0 %v168
    %269 = vmatprep.subr.mxu0 0.0
    %270 = vmatpush1.msra.mxu0 %v169
    %271 = vmatprep.subr.mxu0 0.0
    %272 = vmatpush1.msra.mxu0 %v170
    %273 = vmatprep.subr.mxu0 0.0
    %274 = vmatpush1.msra.mxu0 %v171
    %275 = vmatprep.subr.mxu0 0.0
    %276 = vmatpush1.msra.mxu0 %v172
    %277 = vmatprep.subr.mxu0 0.0
    %278 = vmatpush1.msra.mxu0 %v173
    %279 = vmatprep.subr.mxu0 0.0
    %280 = vmatpush1.msra.mxu0 %v174
    %281 = vmatprep.subr.mxu0 0.0
    %282 = vmatpush1.msra.mxu0 %v175
    %283 = vmatprep.subr.mxu0 0.0
    %284 = vmatpush1.msra.mxu0 %v176
    %285 = vmatprep.subr.mxu0 0.0
    %286 = vmatpush1.msra.mxu0 %v177
    %287 = vmatprep.subr.mxu0 0.0
    %288 = vmatpush1.msra.mxu0 %v178
    %289 = vmatprep.subr.mxu0 0.0
    %290 = vmatpush1.msra.mxu0 %v179
    %291 = vmatprep.subr.mxu0 0.0
    %292 = vmatpush1.msra.mxu0 %v180
    %293 = vmatprep.subr.mxu0 0.0
    %294 = vmatpush1.msra.mxu0 %v181
    %295 = vmatprep.subr.mxu0 0.0
    %296 = vmatpush1.msra.mxu0 %v182
    %297 = vmatprep.subr.mxu0 0.0
    %298 = vmatpush1.msra.mxu0 %v183
    %299 = vmatprep.subr.mxu0 0.0
    %300 = vmatpush1.msra.mxu0 %v184
    %301 = vmatprep.subr.mxu0 0.0
    %302 = vmatpush1.msra.mxu0 %v185
    %303 = vmatprep.subr.mxu0 0.0
    %304 = vmatpush1.msra.mxu0 %v186
    %305 = vmatprep.subr.mxu0 0.0
    %306 = vmatpush1.msra.mxu0 %v187
    %307 = vmatprep.subr.mxu0 0.0
    %308 = vmatpush1.msra.mxu0 %v188
    %309 = vmatprep.subr.mxu0 0.0
    %310 = vmatpush1.msra.mxu0 %v189
    %311 = vmatprep.subr.mxu0 0.0
    %312 = vmatpush1.msra.mxu0 %v190
    %313 = vmatprep.subr.mxu0 0.0
    %314 = vmatpush1.msra.mxu0 %v191
    %315 = vmatprep.subr.mxu0 0.0
    %316 = vmatpush1.msra.mxu0 %v192
    %317 = vmatprep.subr.mxu0 0.0
    %318 = vmatpush1.msra.mxu0 %v193
    %319 = vmatprep.mubr.f32.mxu0 %v249
    %320 = vmatmul.mubr.f32.gmra.mrb[0].mxu0 %v241
    %v321 = vpop.f32.mrb[0].mxu0
    %v322 = vadd.f32 %v231, %v321
    %v323 = vpop.f32.mrb[0].mxu0
    %324 = vdwg.mxu0
    %325 = vmatprep.subr.mxu0 0.0
    %326 = vmatpush1.msra.mxu0 %v194
    %327 = vmatprep.subr.mxu0 0.0
    %328 = vmatpush1.msra.mxu0 %v195
    %329 = vmatprep.subr.mxu0 0.0
    %330 = vmatpush1.msra.mxu0 %v196
    %331 = vmatprep.subr.mxu0 0.0
    %332 = vmatpush1.msra.mxu0 %v197
    %333 = vmatprep.subr.mxu0 0.0
    %334 = vmatpush1.msra.mxu0 %v198
    %335 = vmatprep.subr.mxu0 0.0
    %336 = vmatpush1.msra.mxu0 %v199
    %337 = vmatprep.subr.mxu0 0.0
    %338 = vmatpush1.msra.mxu0 %v200
    %339 = vmatprep.subr.mxu0 0.0
    %340 = vmatpush1.msra.mxu0 %v201
    %341 = vmatprep.subr.mxu0 0.0
    %342 = vmatpush1.msra.mxu0 %v202
    %343 = vmatprep.subr.mxu0 0.0
    %344 = vmatpush1.msra.mxu0 %v203
    %345 = vmatprep.subr.mxu0 0.0
    %346 = vmatpush1.msra.mxu0 %v204
    %347 = vmatprep.subr.mxu0 0.0
    %348 = vmatpush1.msra.mxu0 %v205
    %349 = vmatprep.subr.mxu0 0.0
    %350 = vmatpush1.msra.mxu0 %v206
    %351 = vmatprep.subr.mxu0 0.0
    %352 = vmatpush1.msra.mxu0 %v207
    %353 = vmatprep.subr.mxu0 0.0
    %354 = vmatpush1.msra.mxu0 %v208
    %355 = vmatprep.subr.mxu0 0.0
    %356 = vmatpush1.msra.mxu0 %v209
    %357 = vmatprep.subr.mxu0 0.0
    %358 = vmatpush1.msra.mxu0 %v210
    %359 = vmatprep.subr.mxu0 0.0
    %360 = vmatpush1.msra.mxu0 %v211
    %361 = vmatprep.subr.mxu0 0.0
    %362 = vmatpush1.msra.mxu0 %v212
    %363 = vmatprep.subr.mxu0 0.0
    %364 = vmatpush1.msra.mxu0 %v213
    %365 = vmatprep.subr.mxu0 0.0
    %366 = vmatpush1.msra.mxu0 %v214
    %367 = vmatprep.subr.mxu0 0.0
    %368 = vmatpush1.msra.mxu0 %v215
    %369 = vmatprep.subr.mxu0 0.0
    %370 = vmatpush1.msra.mxu0 %v216
    %371 = vmatprep.subr.mxu0 0.0
    %372 = vmatpush1.msra.mxu0 %v217
    %373 = vmatprep.subr.mxu0 0.0
    %374 = vmatpush1.msra.mxu0 %v218
    %375 = vmatprep.subr.mxu0 0.0
    %376 = vmatpush1.msra.mxu0 %v219
    %377 = vmatprep.subr.mxu0 0.0
    %378 = vmatpush1.msra.mxu0 %v220
    %379 = vmatprep.subr.mxu0 0.0
    %380 = vmatpush1.msra.mxu0 %v221
    %381 = vmatprep.subr.mxu0 0.0
    %382 = vmatpush1.msra.mxu0 %v222
    %383 = vmatprep.subr.mxu0 0.0
    %384 = vmatpush1.msra.mxu0 %v223
    %385 = vmatprep.subr.mxu0 0.0
    %386 = vmatpush1.msra.mxu0 %v224
    %387 = vmatprep.subr.mxu0 0.0
    %388 = vmatpush1.msra.mxu0 %v225
    %389 = vmatprep.mubr.f32.mxu0 %v250
    %390 = vmatmul.mubr.f32.gmra.mrb[0].mxu0 %v248
    %v391 = vpop.f32.mrb[0].mxu0
    %v392 = vadd.f32 %v322, %v391
    %v393 = vpop.f32.mrb[0].mxu0
    %394 = vdwg.mxu0
    %vm395 = vcmask 9216
    %396 = vst.msk [vmem:[#allocation2] sm:$0x3] %vm395, %v392
    // Predicated region
    $region22: #{_lambda_.5} parent=1 // pred_check
      _
    $region23: #{_lambda_.5} parent=1 // pred_check_branch
      %398 = sbr.rel (0) target = $region25
    $region24: #{_lambda_.5} parent=1 // pred_region
      %s400 = ssub.s32 32, 32
      %401 = vsyncadd [#allocation3], %s400
      %s403 = sshll.u32 [#allocation2], 4
      %s404 = int_to_ptr.vmem [resolvable:$true] %s403
      %406 = dma.vmem_to_hbm [thread:$0]  %s404, 32, %s5, [#allocation3]
    $region25: #{_lambda_.5} parent=1 // pred_fallthru
      _
    // Predicated region
    $region26: #{_lambda_.5} parent=1 // pred_check
      _
    $region27: #{_lambda_.5} parent=1 // pred_check_branch
      %408 = sbr.rel (0) target = $region29
    $region28: #{_lambda_.5} parent=1 // pred_region
      %409 = dma.done [#allocation3], 32
    $region29: #{_lambda_.5} parent=1 // pred_fallthru
      _
    %410 = vsyncpa [#allocation3], 1

// kernel: _lambda_.4
$region0: #{_lambda_.4}
  #allocation0 [shape = 'u32[]', space=smem, size = 0x4, offset = 0x4, fixed_abs, tag = 'smem constant byte address 0x4 - core index']
  #allocation1 [shape = 'u32[144,128]{1,0:T(1,128)}', space=vmem, size = 0x12000, scoped, tag = 'internal scratch']
  #allocation2 [shape = 'f32[10,10,16]{2,1,0:T(8,128)}', space=vmem, size = 0x14000, scoped, tag = 'scratch operand']
  #allocation3 [shape = 'f32[4,8,32]{2,1,0:T(8,128)}', space=vmem, size = 0x4000, scoped, tag = 'scratch operand']
  %s0 = inlined_call_operand.vmem [shape: bf16[2,8,8,16], index: 0, kind: input, shape index: {}]
  %s1 = inlined_call_operand.vmem [shape: f32[1,16], index: 1, kind: input, shape index: {}]
  %s2 = inlined_call_operand.vmem [shape: f32[1,16], index: 2, kind: input, shape index: {}]
  %s3 = inlined_call_operand.vmem [shape: bf16[144,32], index: 3, kind: input, shape index: {}]
  %s4 = inlined_call_operand.vmem [shape: f32[1,32], index: 4, kind: input, shape index: {}]
  %s5 = inlined_call_operand.vmem [shape: bf16[2,4,4,32], index: 5, kind: output, shape index: {0}]
  %s6 = inlined_call_operand.vmem [shape: f32[2,2,32], index: 6, kind: output, shape index: {1}]
  %7 = xla_tuple %s5, %s6
  %s8 = sld [smem:[#allocation0]]
  $region61: #{_lambda_.4} parent=0
    _
  %s10 = ssub.s32 1, %s8
  %s11 = scalar_select 0, %s10, %s8
  loop: start=0, step=1, limit=4
  $region2: #{_lambda_.4} parent=0 // loop_pre_header
    _
  $region3: #{_lambda_.4} parent=0 // loop_header
    %s13 = sphi 0, %s17
    %p14 = scmp.ge.s32.totalorder %s13, 4
    %s23 = sphi 0, %s25
    %s26 = sphi 0, %s23
    %s27 = sphi 0, %s26
    %s43 = sphi 0, %s27
    %s47 = sphi 0, %s47
    %s49 = sphi 0, %s47
    %s50 = sphi 0, %s49
    %s64 = sphi 0, %s50
    %s68 = sphi 0, %s68
    %s70 = sphi 0, %s68
    %s71 = sphi 0, %s70
    %s85 = sphi 0, %s71
    %s89 = sphi 0, %s89
    %s91 = sphi 0, %s89
    %s92 = sphi 0, %s91
    %s106 = sphi 0, %s92
    %s110 = sphi 0, %s110
    %s112 = sphi 0, %s110
    %s113 = sphi 0, %s112
    %s127 = sphi 0, %s113
    %s133 = sphi 0, %s135
    %s136 = sphi 0, %s133
    %s137 = sphi 0, %s136
    %s153 = sphi 0, %s137
    %s159 = sphi 0, %s161
    %s162 = sphi 0, %s159
    %s163 = sphi 0, %s162
    %s179 = sphi 0, %s163
  $region4: #{_lambda_.4} parent=0 // loop_header_branch
    %16 = sbr.rel (%p14) target = $region8
  $region5: #{_lambda_.4} parent=0 // loop_body
    %s18 = ssub.s32 %s13, 1
    %s19 = ssub.s32 %s13, 2
    %s20 = sadd.s32 %s13, 1
    %s21 = ssub.s32 %s13, %s20
    %p22 = scmp.eq.s32.totalorder %s21, 0
    %s24 = sadd.s32 %s23, 1
    %s25 = scalar_select %p22, %s23, %s24
    %p28 = pneg %p22
    %p29 = scmp.eq.s32.totalorder %s13, 1
    %p30 = por %p28, %p29
    %p31 = scmp.ne.s32.totalorder %s23, %s26
    %p32 = scmp.eq.s32.totalorder %s13, 0
    %p33 = por %p31, %p32
    %p34 = scmp.ne.s32.totalorder %s23, %s26
    %p35 = scmp.eq.s32.totalorder %s18, 1
    %p36 = por %p34, %p35
    %p37 = scmp.ne.s32.totalorder %s26, %s27
    %p38 = scmp.eq.s32.totalorder %s18, 0
    %p39 = por %p37, %p38
    %p40 = scmp.ne.s32.totalorder %s26, %s27
    %p41 = scmp.eq.s32.totalorder %s19, 1
    %p42 = por %p40, %p41
    %p44 = scmp.ne.s32.totalorder %s27, %s43
    %p45 = scmp.eq.s32.totalorder %s19, 0
    %p46 = por %p44, %p45
    %s48 = sadd.s32 %s47, 1
    %p51 = scmp.eq.s32.totalorder %s13, 1
    %p52 = scmp.ne.s32.totalorder %s47, %s49
    %p53 = scmp.eq.s32.totalorder %s13, 0
    %p54 = por %p52, %p53
    %p55 = scmp.ne.s32.totalorder %s47, %s49
    %p56 = scmp.eq.s32.totalorder %s18, 1
    %p57 = por %p55, %p56
    %p58 = scmp.ne.s32.totalorder %s49, %s50
    %p59 = scmp.eq.s32.totalorder %s18, 0
    %p60 = por %p58, %p59
    %p61 = scmp.ne.s32.totalorder %s49, %s50
    %p62 = scmp.eq.s32.totalorder %s19, 1
    %p63 = por %p61, %p62
    %p65 = scmp.ne.s32.totalorder %s50, %s64
    %p66 = scmp.eq.s32.totalorder %s19, 0
    %p67 = por %p65, %p66
    %s69 = sadd.s32 %s68, 1
    %p72 = scmp.eq.s32.totalorder %s13, 1
    %p73 = scmp.ne.s32.totalorder %s68, %s70
    %p74 = scmp.eq.s32.totalorder %s13, 0
    %p75 = por %p73, %p74
    %p76 = scmp.ne.s32.totalorder %s68, %s70
    %p77 = scmp.eq.s32.totalorder %s18, 1
    %p78 = por %p76, %p77
    %p79 = scmp.ne.s32.totalorder %s70, %s71
    %p80 = scmp.eq.s32.totalorder %s18, 0
    %p81 = por %p79, %p80
    %p82 = scmp.ne.s32.totalorder %s70, %s71
    %p83 = scmp.eq.s32.totalorder %s19, 1
    %p84 = por %p82, %p83
    %p86 = scmp.ne.s32.totalorder %s71, %s85
    %p87 = scmp.eq.s32.totalorder %s19, 0
    %p88 = por %p86, %p87
    %s90 = sadd.s32 %s89, 1
    %p93 = scmp.eq.s32.totalorder %s13, 1
    %p94 = scmp.ne.s32.totalorder %s89, %s91
    %p95 = scmp.eq.s32.totalorder %s13, 0
    %p96 = por %p94, %p95
    %p97 = scmp.ne.s32.totalorder %s89, %s91
    %p98 = scmp.eq.s32.totalorder %s18, 1
    %p99 = por %p97, %p98
    %p100 = scmp.ne.s32.totalorder %s91, %s92
    %p101 = scmp.eq.s32.totalorder %s18, 0
    %p102 = por %p100, %p101
    %p103 = scmp.ne.s32.totalorder %s91, %s92
    %p104 = scmp.eq.s32.totalorder %s19, 1
    %p105 = por %p103, %p104
    %p107 = scmp.ne.s32.totalorder %s92, %s106
    %p108 = scmp.eq.s32.totalorder %s19, 0
    %p109 = por %p107, %p108
    %s111 = sadd.s32 %s110, 1
    %p114 = scmp.eq.s32.totalorder %s13, 1
    %p115 = scmp.ne.s32.totalorder %s110, %s112
    %p116 = scmp.eq.s32.totalorder %s13, 0
    %p117 = por %p115, %p116
    %p118 = scmp.ne.s32.totalorder %s110, %s112
    %p119 = scmp.eq.s32.totalorder %s18, 1
    %p120 = por %p118, %p119
    %p121 = scmp.ne.s32.totalorder %s112, %s113
    %p122 = scmp.eq.s32.totalorder %s18, 0
    %p123 = por %p121, %p122
    %p124 = scmp.ne.s32.totalorder %s112, %s113
    %p125 = scmp.eq.s32.totalorder %s19, 1
    %p126 = por %p124, %p125
    %p128 = scmp.ne.s32.totalorder %s113, %s127
    %p129 = scmp.eq.s32.totalorder %s19, 0
    %p130 = por %p128, %p129
    %s131 = ssub.s32 %s13, %s20
    %p132 = scmp.eq.s32.totalorder %s131, 0
    %s134 = sadd.s32 %s133, 1
    %s135 = scalar_select %p132, %s133, %s134
    %p138 = pneg %p132
    %p139 = scmp.eq.s32.totalorder %s13, 1
    %p140 = por %p138, %p139
    %p141 = scmp.ne.s32.totalorder %s133, %s136
    %p142 = scmp.eq.s32.totalorder %s13, 0
    %p143 = por %p141, %p142
    %p144 = scmp.ne.s32.totalorder %s133, %s136
    %p145 = scmp.eq.s32.totalorder %s18, 1
    %p146 = por %p144, %p145
    %p147 = scmp.ne.s32.totalorder %s136, %s137
    %p148 = scmp.eq.s32.totalorder %s18, 0
    %p149 = por %p147, %p148
    %p150 = scmp.ne.s32.totalorder %s136, %s137
    %p151 = scmp.eq.s32.totalorder %s19, 1
    %p152 = por %p150, %p151
    %p154 = scmp.ne.s32.totalorder %s137, %s153
    %p155 = scmp.eq.s32.totalorder %s19, 0
    %p156 = por %p154, %p155
    %s157 = ssub.s32 %s13, %s20
    %p158 = scmp.eq.s32.totalorder %s157, 0
    %s160 = sadd.s32 %s159, 1
    %s161 = scalar_select %p158, %s159, %s160
    %p164 = pneg %p158
    %p165 = scmp.eq.s32.totalorder %s13, 1
    %p166 = por %p164, %p165
    %p167 = scmp.ne.s32.totalorder %s159, %s162
    %p168 = scmp.eq.s32.totalorder %s13, 0
    %p169 = por %p167, %p168
    %p170 = scmp.ne.s32.totalorder %s159, %s162
    %p171 = scmp.eq.s32.totalorder %s18, 1
    %p172 = por %p170, %p171
    %p173 = scmp.ne.s32.totalorder %s162, %s163
    %p174 = scmp.eq.s32.totalorder %s18, 0
    %p175 = por %p173, %p174
    %p176 = scmp.ne.s32.totalorder %s162, %s163
    %p177 = scmp.eq.s32.totalorder %s19, 1
    %p178 = por %p176, %p177
    %p180 = scmp.ne.s32.totalorder %s163, %s179
    %p181 = scmp.eq.s32.totalorder %s19, 0
    %p182 = por %p180, %p181
    %p183 = scmp.le.s32.totalorder 1, %s13
    %p184 = scmp.lt.s32.totalorder %s13, 3
    %p185 = pnand %p183, %p184
    %p186 = pneg %p185
    // Predicated region
    $region9: #{_lambda_.4} parent=5 // pred_check
      _
    $region10: #{_lambda_.4} parent=5 // pred_check_branch
      %188 = sbr.rel (%p185) target = $region12
    $region11: #{_lambda_.4} parent=5 // pred_region
      %s189 = ssub.s32 %s13, 1
      // Predicated region
      $region13: #{_lambda_.4} parent=11 // pred_check
        %p190 = pneg %p60
      $region14: #{_lambda_.4} parent=11 // pred_check_branch
        %192 = sbr.rel (%p190) target = $region16
      $region15: #{_lambda_.4} parent=11 // pred_region
        _
      $region16: #{_lambda_.4} parent=11 // pred_fallthru
        _
      // Predicated region
      $region17: #{_lambda_.4} parent=11 // pred_check
        %p193 = pneg %p81
      $region18: #{_lambda_.4} parent=11 // pred_check_branch
        %195 = sbr.rel (%p193) target = $region20
      $region19: #{_lambda_.4} parent=11 // pred_region
        _
      $region20: #{_lambda_.4} parent=11 // pred_fallthru
        _
      // Predicated region
      $region21: #{_lambda_.4} parent=11 // pred_check
        %p196 = pneg %p102
      $region22: #{_lambda_.4} parent=11 // pred_check_branch
        %198 = sbr.rel (%p196) target = $region24
      $region23: #{_lambda_.4} parent=11 // pred_region
        _
      $region24: #{_lambda_.4} parent=11 // pred_fallthru
        _
      // Predicated region
      $region25: #{_lambda_.4} parent=11 // pred_check
        %p199 = pneg %p123
      $region26: #{_lambda_.4} parent=11 // pred_check_branch
        %201 = sbr.rel (%p199) target = $region28
      $region27: #{_lambda_.4} parent=11 // pred_region
        _
      $region28: #{_lambda_.4} parent=11 // pred_fallthru
        _
    $region12: #{_lambda_.4} parent=5 // pred_fallthru
      _
    %p202 = scmp.lt.s32.totalorder %s13, 2
    // Predicated region
    $region29: #{_lambda_.4} parent=5 // pred_check
      %p203 = pneg %p202
    $region30: #{_lambda_.4} parent=5 // pred_check_branch
      %205 = sbr.rel (%p203) target = $region32
    $region31: #{_lambda_.4} parent=5 // pred_region
      // Predicated region
      $region33: #{_lambda_.4} parent=31 // pred_check
        %p206 = pneg %p33
      $region34: #{_lambda_.4} parent=31 // pred_check_branch
        %208 = sbr.rel (%p206) target = $region36
      $region35: #{_lambda_.4} parent=31 // pred_region
        %p209 = scmp.lt.s32.totalorder %s13, 1
        %s210 = scalar_select %p209, %s13, 1
        %s211 = smul.addr %s210, 8
        %s212 = smul.addr %s211, 4
        %s213 = scalar_lea.vmem %s0, %s212
      $region36: #{_lambda_.4} parent=31 // pred_fallthru
        _
    $region32: #{_lambda_.4} parent=5 // pred_fallthru
      _
    %p214 = scmp.le.s32.totalorder 1, %s13
    %p215 = scmp.lt.s32.totalorder %s13, 3
    %p216 = pnand %p214, %p215
    %p217 = pneg %p216
    // Predicated region
    $region37: #{_lambda_.4} parent=5 // pred_check
      _
    $region38: #{_lambda_.4} parent=5 // pred_check_branch
      %219 = sbr.rel (%p216) target = $region40
    $region39: #{_lambda_.4} parent=5 // pred_region
      %s220 = ssub.s32 %s13, 1
      %p221 = scmp.lt.s32.totalorder %s18, 1
      %s222 = scalar_select %p221, %s18, 1
      %s223 = smul.addr %s222, 8
      %s224 = smul.addr %s223, 4
      %s225 = scalar_lea.vmem %s0, %s224
      %p226 = pneg %p39
      %p227 = pneg %p36
      %p228 = pneg %p60
      %p229 = pneg %p57
      %p230 = pneg %p81
      %p231 = pneg %p78
      %p232 = pneg %p102
      %p233 = pneg %p99
      %p234 = pneg %p123
      %p235 = pneg %p120
      %p236 = pneg %p149
      %p237 = pneg %p146
      %p238 = scmp.lt.s32.totalorder %s18, 1
      %s239 = scalar_select %p238, %s18, 1
      %s240 = smul.addr %s239, 4
      %s241 = smul.addr %s240, 2
      %s242 = scalar_lea.vmem %s5, %s241
      %p243 = pneg %p175
      %p244 = pneg %p172
      %p245 = scmp.lt.s32.totalorder %s18, 1
      %s246 = scalar_select %p245, %s18, 1
      %s247 = smul.addr %s246, 2
      %s248 = scalar_lea.vmem %s6, %s247
      %p249 = scmp.lt.s32.totalorder %s18, 1
      %s250 = scalar_select %p249, %s18, 1
      %s251 = smul.addr %s250, 8
      %s252 = smul.addr %s251, 4
      %s253 = scalar_lea.vmem %s0, %s252
      %p254 = scmp.lt.s32.totalorder %s18, 1
      %s255 = scalar_select %p254, %s18, 1
      %s256 = smul.addr %s255, 4
      %s257 = smul.addr %s256, 2
      %s258 = scalar_lea.vmem %s5, %s257
      %p259 = scmp.lt.s32.totalorder %s18, 1
      %s260 = scalar_select %p259, %s18, 1
      %s261 = smul.addr %s260, 2
      %s262 = scalar_lea.vmem %s6, %s261
      %vm263 = vcmask 130048
      %264 = vst.msk [vmem:[#allocation2] sm:$0xff] %vm263, 0.0
      %vm265 = vcmask 123904
      %266 = vst.msk [vmem:[#allocation2 + $0x8] sm:$0x3] %vm265, 0.0
      %267 = vst.msk [vmem:[#allocation2 + $0x10] sm:$0xff] %vm263, 0.0
      %268 = vst.msk [vmem:[#allocation2 + $0x18] sm:$0x3] %vm265, 0.0
      %269 = vst.msk [vmem:[#allocation2 + $0x20] sm:$0xff] %vm263, 0.0
      %270 = vst.msk [vmem:[#allocation2 + $0x28] sm:$0x3] %vm265, 0.0
      %271 = vst.msk [vmem:[#allocation2 + $0x30] sm:$0xff] %vm263, 0.0
      %272 = vst.msk [vmem:[#allocation2 + $0x38] sm:$0x3] %vm265, 0.0
      %273 = vst.msk [vmem:[#allocation2 + $0x40] sm:$0xff] %vm263, 0.0
      %274 = vst.msk [vmem:[#allocation2 + $0x48] sm:$0x3] %vm265, 0.0
      %275 = vst.msk [vmem:[#allocation2 + $0x50] sm:$0xff] %vm263, 0.0
      %276 = vst.msk [vmem:[#allocation2 + $0x58] sm:$0x3] %vm265, 0.0
      %277 = vst.msk [vmem:[#allocation2 + $0x60] sm:$0xff] %vm263, 0.0
      %278 = vst.msk [vmem:[#allocation2 + $0x68] sm:$0x3] %vm265, 0.0
      %279 = vst.msk [vmem:[#allocation2 + $0x70] sm:$0xff] %vm263, 0.0
      %280 = vst.msk [vmem:[#allocation2 + $0x78] sm:$0x3] %vm265, 0.0
      %281 = vst.msk [vmem:[#allocation2 + $0x80] sm:$0xff] %vm263, 0.0
      %282 = vst.msk [vmem:[#allocation2 + $0x88] sm:$0x3] %vm265, 0.0
      %283 = vst.msk [vmem:[#allocation2 + $0x90] sm:$0xff] %vm263, 0.0
      %284 = vst.msk [vmem:[#allocation2 + $0x98] sm:$0x3] %vm265, 0.0
      %v285 = vld [vmem:[%s253] sm:$0xf]
      %v286 = vld [vmem:[%s253 + $0x4] sm:$0xf]
      %v287 = vld [vmem:[%s253 + $0x8] sm:$0xf]
      %v288 = vld [vmem:[%s253 + $0xc] sm:$0xf]
      %v289 = vld [vmem:[%s253 + $0x10] sm:$0xf]
      %v290 = vld [vmem:[%s253 + $0x14] sm:$0xf]
      %v291 = vld [vmem:[%s253 + $0x18] sm:$0xf]
      %v292 = vld [vmem:[%s253 + $0x1c] sm:$0xf]
      %v293 = vunpack.c.l.bf16 %v285
      %v294 = vunpack.c.l.bf16 %v286
      %v295 = vunpack.c.l.bf16 %v287
      %v296 = vunpack.c.l.bf16 %v288
      %v297 = vunpack.c.l.bf16 %v289
      %v298 = vunpack.c.l.bf16 %v290
      %v299 = vunpack.c.l.bf16 %v291
      %v300 = vunpack.c.l.bf16 %v292
      %v301 = vld [vmem:[%s1] sm:$0x1]
      %v303 = vlaneseq
      %v304 = vshrl.u32 %v303, 7
      %v305 = vsub.s32 0, %v304
      %v306 = vrot.slane %v301, %v305
      %v308 = vmul.f32 %v293, %v306
      %v309 = vmul.f32 %v294, %v306
      %v310 = vmul.f32 %v295, %v306
      %v311 = vmul.f32 %v296, %v306
      %v312 = vmul.f32 %v297, %v306
      %v313 = vmul.f32 %v298, %v306
      %v314 = vmul.f32 %v299, %v306
      %v315 = vmul.f32 %v300, %v306
      %v316 = vld [vmem:[%s2] sm:$0x1]
      %v318 = vlaneseq
      %v319 = vshrl.u32 %v318, 7
      %v320 = vsub.s32 0, %v319
      %v321 = vrot.slane %v316, %v320
      %v323 = vadd.f32 %v308, %v321
      %v324 = vadd.f32 %v309, %v321
      %v325 = vadd.f32 %v310, %v321
      %v326 = vadd.f32 %v311, %v321
      %v327 = vadd.f32 %v312, %v321
      %v328 = vadd.f32 %v313, %v321
      %v329 = vadd.f32 %v314, %v321
      %v330 = vadd.f32 %v315, %v321
      %v331 = vmax.f32 %v323, 0.0
      %v332 = vmax.f32 %v324, 0.0
      %v333 = vmax.f32 %v325, 0.0
      %v334 = vmax.f32 %v326, 0.0
      %v335 = vmax.f32 %v327, 0.0
      %v336 = vmax.f32 %v328, 0.0
      %v337 = vmax.f32 %v329, 0.0
      %v338 = vmax.f32 %v330, 0.0
      %s339 = scalar_lea.vmem [#allocation2], 16
      %340 = vst.msk [vmem:[%s339 + $0x1] sm:$0xff] %vm263, %v331
      %341 = vst.msk [vmem:[%s339 + $0x11] sm:$0xff] %vm263, %v332
      %342 = vst.msk [vmem:[%s339 + $0x21] sm:$0xff] %vm263, %v333
      %343 = vst.msk [vmem:[%s339 + $0x31] sm:$0xff] %vm263, %v334
      %344 = vst.msk [vmem:[%s339 + $0x41] sm:$0xff] %vm263, %v335
      %345 = vst.msk [vmem:[%s339 + $0x51] sm:$0xff] %vm263, %v336
      %346 = vst.msk [vmem:[%s339 + $0x61] sm:$0xff] %vm263, %v337
      %347 = vst.msk [vmem:[%s339 + $0x71] sm:$0xff] %vm263, %v338
      %v348 = vld [vmem:[#allocation2] sm:$0xff]
      %v349 = vld [vmem:[#allocation2 + $0x10] sm:$0xff]
      %v350 = vld [vmem:[#allocation2 + $0x20] sm:$0xff]
      %v351 = vld [vmem:[#allocation2 + $0x30] sm:$0xff]
      %v352 = vld [vmem:[#allocation2 + $0x40] sm:$0xff]
      %v353 = vld [vmem:[#allocation2 + $0x50] sm:$0xff]
      %v354 = vld [vmem:[#allocation2 + $0x60] sm:$0xff]
      %v355 = vld [vmem:[#allocation2 + $0x70] sm:$0xff]
      %v356 = vld [vmem:[#allocation2 + $0x1] sm:$0xff]
      %v357 = vld [vmem:[#allocation2 + $0x11] sm:$0xff]
      %v358 = vld [vmem:[#allocation2 + $0x21] sm:$0xff]
      %v359 = vld [vmem:[#allocation2 + $0x31] sm:$0xff]
      %v360 = vld [vmem:[#allocation2 + $0x41] sm:$0xff]
      %v361 = vld [vmem:[#allocation2 + $0x51] sm:$0xff]
      %v362 = vld [vmem:[#allocation2 + $0x61] sm:$0xff]
      %v363 = vld [vmem:[#allocation2 + $0x71] sm:$0xff]
      %v364 = vld [vmem:[#allocation2 + $0x2] sm:$0xff]
      %v365 = vld [vmem:[#allocation2 + $0x12] sm:$0xff]
      %v366 = vld [vmem:[#allocation2 + $0x22] sm:$0xff]
      %v367 = vld [vmem:[#allocation2 + $0x32] sm:$0xff]
      %v368 = vld [vmem:[#allocation2 + $0x42] sm:$0xff]
      %v369 = vld [vmem:[#allocation2 + $0x52] sm:$0xff]
      %v370 = vld [vmem:[#allocation2 + $0x62] sm:$0xff]
      %v371 = vld [vmem:[#allocation2 + $0x72] sm:$0xff]
      %v372 = vld [vmem:[%s339] sm:$0xff]
      %v373 = vld [vmem:[%s339 + $0x10] sm:$0xff]
      %v374 = vld [vmem:[%s339 + $0x20] sm:$0xff]
      %v375 = vld [vmem:[%s339 + $0x30] sm:$0xff]
      %v376 = vld [vmem:[%s339 + $0x40] sm:$0xff]
      %v377 = vld [vmem:[%s339 + $0x50] sm:$0xff]
      %v378 = vld [vmem:[%s339 + $0x60] sm:$0xff]
      %v379 = vld [vmem:[%s339 + $0x70] sm:$0xff]
      %v380 = vld [vmem:[%s339 + $0x1] sm:$0xff]
      %v381 = vld [vmem:[%s339 + $0x11] sm:$0xff]
      %v382 = vld [vmem:[%s339 + $0x21] sm:$0xff]
      %v383 = vld [vmem:[%s339 + $0x31] sm:$0xff]
      %v384 = vld [vmem:[%s339 + $0x41] sm:$0xff]
      %v385 = vld [vmem:[%s339 + $0x51] sm:$0xff]
      %v386 = vld [vmem:[%s339 + $0x61] sm:$0xff]
      %v387 = vld [vmem:[%s339 + $0x71] sm:$0xff]
      %v388 = vld [vmem:[%s339 + $0x2] sm:$0xff]
      %v389 = vld [vmem:[%s339 + $0x12] sm:$0xff]
      %v390 = vld [vmem:[%s339 + $0x22] sm:$0xff]
      %v391 = vld [vmem:[%s339 + $0x32] sm:$0xff]
      %v392 = vld [vmem:[%s339 + $0x42] sm:$0xff]
      %v393 = vld [vmem:[%s339 + $0x52] sm:$0xff]
      %v394 = vld [vmem:[%s339 + $0x62] sm:$0xff]
      %v395 = vld [vmem:[%s339 + $0x72] sm:$0xff]
      %s396 = scalar_lea.vmem [#allocation2], 32
      %v397 = vld [vmem:[%s396] sm:$0xff]
      %v398 = vld [vmem:[%s396 + $0x10] sm:$0xff]
      %v399 = vld [vmem:[%s396 + $0x20] sm:$0xff]
      %v400 = vld [vmem:[%s396 + $0x30] sm:$0xff]
      %v401 = vld [vmem:[%s396 + $0x40] sm:$0xff]
      %v402 = vld [vmem:[%s396 + $0x50] sm:$0xff]
      %v403 = vld [vmem:[%s396 + $0x60] sm:$0xff]
      %v404 = vld [vmem:[%s396 + $0x70] sm:$0xff]
      %v405 = vld [vmem:[%s396 + $0x1] sm:$0xff]
      %v406 = vld [vmem:[%s396 + $0x11] sm:$0xff]
      %v407 = vld [vmem:[%s396 + $0x21] sm:$0xff]
      %v408 = vld [vmem:[%s396 + $0x31] sm:$0xff]
      %v409 = vld [vmem:[%s396 + $0x41] sm:$0xff]
      %v410 = vld [vmem:[%s396 + $0x51] sm:$0xff]
      %v411 = vld [vmem:[%s396 + $0x61] sm:$0xff]
      %v412 = vld [vmem:[%s396 + $0x71] sm:$0xff]
      %v413 = vld [vmem:[%s396 + $0x2] sm:$0xff]
      %v414 = vld [vmem:[%s396 + $0x12] sm:$0xff]
      %v415 = vld [vmem:[%s396 + $0x22] sm:$0xff]
      %v416 = vld [vmem:[%s396 + $0x32] sm:$0xff]
      %v417 = vld [vmem:[%s396 + $0x42] sm:$0xff]
      %v418 = vld [vmem:[%s396 + $0x52] sm:$0xff]
      %v419 = vld [vmem:[%s396 + $0x62] sm:$0xff]
      %v420 = vld [vmem:[%s396 + $0x72] sm:$0xff]
      %429 = vrot.lane.b32.xlu0 %v356, 16
      %v430 = vpop.permute.xlu0 %429
      %431 = vrot.lane.b32.xlu0 %v357, 16
      %v432 = vpop.permute.xlu0 %431
      %433 = vrot.lane.b32.xlu0 %v358, 16
      %v434 = vpop.permute.xlu0 %433
      %435 = vrot.lane.b32.xlu0 %v359, 16
      %v436 = vpop.permute.xlu0 %435
      %437 = vrot.lane.b32.xlu0 %v360, 16
      %v438 = vpop.permute.xlu0 %437
      %439 = vrot.lane.b32.xlu0 %v361, 16
      %v440 = vpop.permute.xlu0 %439
      %441 = vrot.lane.b32.xlu0 %v362, 16
      %v442 = vpop.permute.xlu0 %441
      %443 = vrot.lane.b32.xlu0 %v363, 16
      %v444 = vpop.permute.xlu0 %443
      %461 = vrot.lane.b32.xlu0 %v364, 32
      %v462 = vpop.permute.xlu0 %461
      %463 = vrot.lane.b32.xlu0 %v365, 32
      %v464 = vpop.permute.xlu0 %463
      %465 = vrot.lane.b32.xlu0 %v366, 32
      %v466 = vpop.permute.xlu0 %465
      %467 = vrot.lane.b32.xlu0 %v367, 32
      %v468 = vpop.permute.xlu0 %467
      %469 = vrot.lane.b32.xlu0 %v368, 32
      %v470 = vpop.permute.xlu0 %469
      %471 = vrot.lane.b32.xlu0 %v369, 32
      %v472 = vpop.permute.xlu0 %471
      %473 = vrot.lane.b32.xlu0 %v370, 32
      %v474 = vpop.permute.xlu0 %473
      %475 = vrot.lane.b32.xlu0 %v371, 32
      %v476 = vpop.permute.xlu0 %475
      %493 = vrot.lane.b32.xlu0 %v372, 48
      %v494 = vpop.permute.xlu0 %493
      %495 = vrot.lane.b32.xlu0 %v373, 48
      %v496 = vpop.permute.xlu0 %495
      %497 = vrot.lane.b32.xlu0 %v374, 48
      %v498 = vpop.permute.xlu0 %497
      %499 = vrot.lane.b32.xlu0 %v375, 48
      %v500 = vpop.permute.xlu0 %499
      %501 = vrot.lane.b32.xlu0 %v376, 48
      %v502 = vpop.permute.xlu0 %501
      %503 = vrot.lane.b32.xlu0 %v377, 48
      %v504 = vpop.permute.xlu0 %503
      %505 = vrot.lane.b32.xlu0 %v378, 48
      %v506 = vpop.permute.xlu0 %505
      %507 = vrot.lane.b32.xlu0 %v379, 48
      %v508 = vpop.permute.xlu0 %507
      %525 = vrot.lane.b32.xlu0 %v380, 64
      %v526 = vpop.permute.xlu0 %525
      %527 = vrot.lane.b32.xlu0 %v381, 64
      %v528 = vpop.permute.xlu0 %527
      %529 = vrot.lane.b32.xlu0 %v382, 64
      %v530 = vpop.permute.xlu0 %529
      %531 = vrot.lane.b32.xlu0 %v383, 64
      %v532 = vpop.permute.xlu0 %531
      %533 = vrot.lane.b32.xlu0 %v384, 64
      %v534 = vpop.permute.xlu0 %533
      %535 = vrot.lane.b32.xlu0 %v385, 64
      %v536 = vpop.permute.xlu0 %535
      %537 = vrot.lane.b32.xlu0 %v386, 64
      %v538 = vpop.permute.xlu0 %537
      %539 = vrot.lane.b32.xlu0 %v387, 64
      %v540 = vpop.permute.xlu0 %539
      %557 = vrot.lane.b32.xlu0 %v388, 80
      %v558 = vpop.permute.xlu0 %557
      %559 = vrot.lane.b32.xlu0 %v389, 80
      %v560 = vpop.permute.xlu0 %559
      %561 = vrot.lane.b32.xlu0 %v390, 80
      %v562 = vpop.permute.xlu0 %561
      %563 = vrot.lane.b32.xlu0 %v391, 80
      %v564 = vpop.permute.xlu0 %563
      %565 = vrot.lane.b32.xlu0 %v392, 80
      %v566 = vpop.permute.xlu0 %565
      %567 = vrot.lane.b32.xlu0 %v393, 80
      %v568 = vpop.permute.xlu0 %567
      %569 = vrot.lane.b32.xlu0 %v394, 80
      %v570 = vpop.permute.xlu0 %569
      %571 = vrot.lane.b32.xlu0 %v395, 80
      %v572 = vpop.permute.xlu0 %571
      %589 = vrot.lane.b32.xlu0 %v397, 96
      %v590 = vpop.permute.xlu0 %589
      %591 = vrot.lane.b32.xlu0 %v398, 96
      %v592 = vpop.permute.xlu0 %591
      %593 = vrot.lane.b32.xlu0 %v399, 96
      %v594 = vpop.permute.xlu0 %593
      %595 = vrot.lane.b32.xlu0 %v400, 96
      %v596 = vpop.permute.xlu0 %595
      %597 = vrot.lane.b32.xlu0 %v401, 96
      %v598 = vpop.permute.xlu0 %597
      %599 = vrot.lane.b32.xlu0 %v402, 96
      %v600 = vpop.permute.xlu0 %599
      %601 = vrot.lane.b32.xlu0 %v403, 96
      %v602 = vpop.permute.xlu0 %601
      %603 = vrot.lane.b32.xlu0 %v404, 96
      %v604 = vpop.permute.xlu0 %603
      %621 = vrot.lane.b32.xlu0 %v405, 112
      %v622 = vpop.permute.xlu0 %621
      %623 = vrot.lane.b32.xlu0 %v406, 112
      %v624 = vpop.permute.xlu0 %623
      %625 = vrot.lane.b32.xlu0 %v407, 112
      %v626 = vpop.permute.xlu0 %625
      %627 = vrot.lane.b32.xlu0 %v408, 112
      %v628 = vpop.permute.xlu0 %627
      %629 = vrot.lane.b32.xlu0 %v409, 112
      %v630 = vpop.permute.xlu0 %629
      %631 = vrot.lane.b32.xlu0 %v410, 112
      %v632 = vpop.permute.xlu0 %631
      %633 = vrot.lane.b32.xlu0 %v411, 112
      %v634 = vpop.permute.xlu0 %633
      %635 = vrot.lane.b32.xlu0 %v412, 112
      %v636 = vpop.permute.xlu0 %635
      %v645 = vsel %vm263, %v348, %v430
      %v646 = vsel %vm263, %v349, %v432
      %v647 = vsel %vm263, %v350, %v434
      %v648 = vsel %vm263, %v351, %v436
      %v649 = vsel %vm263, %v352, %v438
      %v650 = vsel %vm263, %v353, %v440
      %v651 = vsel %vm263, %v354, %v442
      %v652 = vsel %vm263, %v355, %v444
      %vm653 = vcmask 261120
      %v654 = vsel %vm653, %v645, %v462
      %v655 = vsel %vm653, %v646, %v464
      %v656 = vsel %vm653, %v647, %v466
      %v657 = vsel %vm653, %v648, %v468
      %v658 = vsel %vm653, %v649, %v470
      %v659 = vsel %vm653, %v650, %v472
      %v660 = vsel %vm653, %v651, %v474
      %v661 = vsel %vm653, %v652, %v476
      %vm662 = vcmask 392192
      %v663 = vsel %vm662, %v654, %v494
      %v664 = vsel %vm662, %v655, %v496
      %v665 = vsel %vm662, %v656, %v498
      %v666 = vsel %vm662, %v657, %v500
      %v667 = vsel %vm662, %v658, %v502
      %v668 = vsel %vm662, %v659, %v504
      %v669 = vsel %vm662, %v660, %v506
      %v670 = vsel %vm662, %v661, %v508
      %vm671 = vcmask 523264
      %v672 = vsel %vm671, %v663, %v526
      %v673 = vsel %vm671, %v664, %v528
      %v674 = vsel %vm671, %v665, %v530
      %v675 = vsel %vm671, %v666, %v532
      %v676 = vsel %vm671, %v667, %v534
      %v677 = vsel %vm671, %v668, %v536
      %v678 = vsel %vm671, %v669, %v538
      %v679 = vsel %vm671, %v670, %v540
      %vm680 = vcmask 654336
      %v681 = vsel %vm680, %v672, %v558
      %v682 = vsel %vm680, %v673, %v560
      %v683 = vsel %vm680, %v674, %v562
      %v684 = vsel %vm680, %v675, %v564
      %v685 = vsel %vm680, %v676, %v566
      %v686 = vsel %vm680, %v677, %v568
      %v687 = vsel %vm680, %v678, %v570
      %v688 = vsel %vm680, %v679, %v572
      %vm689 = vcmask 785408
      %v690 = vsel %vm689, %v681, %v590
      %v691 = vsel %vm689, %v682, %v592
      %v692 = vsel %vm689, %v683, %v594
      %v693 = vsel %vm689, %v684, %v596
      %v694 = vsel %vm689, %v685, %v598
      %v695 = vsel %vm689, %v686, %v600
      %v696 = vsel %vm689, %v687, %v602
      %v697 = vsel %vm689, %v688, %v604
      %vm698 = vcmask 916480
      %v699 = vsel %vm698, %v690, %v622
      %v700 = vsel %vm698, %v691, %v624
      %v701 = vsel %vm698, %v692, %v626
      %v702 = vsel %vm698, %v693, %v628
      %v703 = vsel %vm698, %v694, %v630
      %v704 = vsel %vm698, %v695, %v632
      %v705 = vsel %vm698, %v696, %v634
      %v706 = vsel %vm698, %v697, %v636
      %v707 = vld [vmem:[%s3] sm:$0xf]
      %v708 = vld [vmem:[%s3 + $0x4] sm:$0xf]
      %v709 = vld [vmem:[%s3 + $0x8] sm:$0xf]
      %v710 = vld [vmem:[%s3 + $0xc] sm:$0xf]
      %v711 = vld [vmem:[%s3 + $0x10] sm:$0xf]
      %v712 = vld [vmem:[%s3 + $0x14] sm:$0xf]
      %v713 = vld [vmem:[%s3 + $0x18] sm:$0xf]
      %v714 = vld [vmem:[%s3 + $0x1c] sm:$0xf]
      %v715 = vld [vmem:[%s3 + $0x20] sm:$0xf]
      %v716 = vld [vmem:[%s3 + $0x24] sm:$0xf]
      %v717 = vld [vmem:[%s3 + $0x28] sm:$0xf]
      %v718 = vld [vmem:[%s3 + $0x2c] sm:$0xf]
      %v719 = vld [vmem:[%s3 + $0x30] sm:$0xf]
      %v720 = vld [vmem:[%s3 + $0x34] sm:$0xf]
      %v721 = vld [vmem:[%s3 + $0x38] sm:$0xf]
      %v722 = vld [vmem:[%s3 + $0x3c] sm:$0xf]
      %v723 = vld [vmem:[%s3 + $0x40] sm:$0xf]
      %v724 = vld [vmem:[%s3 + $0x44] sm:$0xf]
      %v725 = vunpack.c.l.bf16 %v707
      %v726 = vunpack.c.l.bf16 %v708
      %v727 = vunpack.c.l.bf16 %v709
      %v728 = vunpack.c.l.bf16 %v710
      %v729 = vunpack.c.l.bf16 %v711
      %v730 = vunpack.c.l.bf16 %v712
      %v731 = vunpack.c.l.bf16 %v713
      %v732 = vunpack.c.l.bf16 %v714
      %v733 = vunpack.c.l.bf16 %v715
      %v734 = vunpack.c.l.bf16 %v716
      %v735 = vunpack.c.l.bf16 %v717
      %v736 = vunpack.c.l.bf16 %v718
      %v737 = vunpack.c.l.bf16 %v719
      %v738 = vunpack.c.l.bf16 %v720
      %v739 = vunpack.c.l.bf16 %v721
      %v740 = vunpack.c.l.bf16 %v722
      %v741 = vunpack.c.l.bf16 %v723
      %v742 = vunpack.c.l.bf16 %v724
      %v743 = vld [vmem:[%s4] sm:$0x1]
      %v745 = vlaneseq
      %v746 = vshrl.u32 %v745, 7
      %v747 = vsub.s32 0, %v746
      %v748 = vrot.slane %v743, %v747
      %v751 = vsel %vm263, %v413, 0
      %v754 = vsel %vm263, %v414, 0
      %v757 = vsel %vm263, %v415, 0
      %v760 = vsel %vm263, %v416, 0
      %v763 = vsel %vm263, %v417, 0
      %v766 = vsel %vm263, %v418, 0
      %v769 = vsel %vm263, %v419, 0
      %v772 = vsel %vm263, %v420, 0
      %774 = vmatprep.subr.mxu0 0.0
      %775 = vmatpush1.msra.mxu0 %v725
      %776 = vmatprep.subr.mxu0 0.0
      %777 = vmatpush1.msra.mxu0 %v726
      %778 = vmatprep.subr.mxu0 0.0
      %779 = vmatpush1.msra.mxu0 %v727
      %780 = vmatprep.subr.mxu0 0.0
      %781 = vmatpush1.msra.mxu0 %v728
      %782 = vmatprep.subr.mxu0 0.0
      %783 = vmatpush1.msra.mxu0 %v729
      %784 = vmatprep.subr.mxu0 0.0
      %785 = vmatpush1.msra.mxu0 %v730
      %786 = vmatprep.subr.mxu0 0.0
      %787 = vmatpush1.msra.mxu0 %v731
      %788 = vmatprep.subr.mxu0 0.0
      %789 = vmatpush1.msra.mxu0 %v732
      %790 = vmatprep.subr.mxu0 0.0
      %791 = vmatpush1.msra.mxu0 %v733
      %792 = vmatprep.subr.mxu0 0.0
      %793 = vmatpush1.msra.mxu0 %v734
      %794 = vmatprep.subr.mxu0 0.0
      %795 = vmatpush1.msra.mxu0 %v735
      %796 = vmatprep.subr.mxu0 0.0
      %797 = vmatpush1.msra.mxu0 %v736
      %798 = vmatprep.subr.mxu0 0.0
      %799 = vmatpush1.msra.mxu0 %v737
      %800 = vmatprep.subr.mxu0 0.0
      %801 = vmatpush1.msra.mxu0 %v738
      %802 = vmatprep.subr.mxu0 0.0
      %803 = vmatpush1.msra.mxu0 %v739
      %804 = vmatprep.subr.mxu0 0.0
      %805 = vmatpush1.msra.mxu0 %v740
      %806 = vmatprep.subr.mxu0 0.0
      %807 = vmatpush1.msra.mxu0 %v741
      %808 = vmatprep.subr.mxu0 0.0
      %809 = vmatpush1.msra.mxu0 %v742
      %810 = vmatprep.subr.mxu0 0.0
      %811 = vmatpush1.msra.mxu0 0.0
      %812 = vmatprep.subr.mxu0 0.0
      %813 = vmatpush1.msra.mxu0 0.0
      %814 = vmatprep.subr.mxu0 0.0
      %815 = vmatpush1.msra.mxu0 0.0
      %816 = vmatprep.subr.mxu0 0.0
      %817 = vmatpush1.msra.mxu0 0.0
      %818 = vmatprep.subr.mxu0 0.0
      %819 = vmatpush1.msra.mxu0 0.0
      %820 = vmatprep.subr.mxu0 0.0
      %821 = vmatpush1.msra.mxu0 0.0
      %822 = vmatprep.subr.mxu0 0.0
      %823 = vmatpush1.msra.mxu0 0.0
      %824 = vmatprep.subr.mxu0 0.0
      %825 = vmatpush1.msra.mxu0 0.0
      %826 = vmatprep.subr.mxu0 0.0
      %827 = vmatpush1.msra.mxu0 0.0
      %828 = vmatprep.subr.mxu0 0.0
      %829 = vmatpush1.msra.mxu0 0.0
      %830 = vmatprep.subr.mxu0 0.0
      %831 = vmatpush1.msra.mxu0 0.0
      %832 = vmatprep.subr.mxu0 0.0
      %833 = vmatpush1.msra.mxu0 0.0
      %834 = vmatprep.subr.mxu0 0.0
      %835 = vmatpush1.msra.mxu0 0.0
      %836 = vmatprep.subr.mxu0 0.0
      %837 = vmatpush1.msra.mxu0 0.0
      %838 = vmatprep.mubr.f32.mxu0 %v751
      %839 = vmatmul.mubr.f32.gmra.mrb[0].mxu0 %v699
      %v840 = vpop.f32.mrb[0].mxu0
      %v841 = vadd.f32 %v748, %v840
      %v842 = vpop.f32.mrb[0].mxu0
      %843 = vmatprep.mubr.f32.mxu0 %v754
      %844 = vmatmul.mubr.f32.gmra.mrb[0].mxu0 %v700
      %v845 = vpop.f32.mrb[0].mxu0
      %v846 = vadd.f32 %v748, %v845
      %v847 = vpop.f32.mrb[0].mxu0
      %848 = vmatprep.mubr.f32.mxu0 %v757
      %849 = vmatmul.mubr.f32.gmra.mrb[0].mxu0 %v701
      %v850 = vpop.f32.mrb[0].mxu0
      %v851 = vadd.f32 %v748, %v850
      %v852 = vpop.f32.mrb[0].mxu0
      %853 = vmatprep.mubr.f32.mxu0 %v760
      %854 = vmatmul.mubr.f32.gmra.mrb[0].mxu0 %v702
      %v855 = vpop.f32.mrb[0].mxu0
      %v856 = vadd.f32 %v748, %v855
      %v857 = vpop.f32.mrb[0].mxu0
      %858 = vmatprep.mubr.f32.mxu0 %v763
      %859 = vmatmul.mubr.f32.gmra.mrb[0].mxu0 %v703
      %v860 = vpop.f32.mrb[0].mxu0
      %v861 = vadd.f32 %v748, %v860
      %v862 = vpop.f32.mrb[0].mxu0
      %863 = vmatprep.mubr.f32.mxu0 %v766
      %864 = vmatmul.mubr.f32.gmra.mrb[0].mxu0 %v704
      %v865 = vpop.f32.mrb[0].mxu0
      %v866 = vadd.f32 %v748, %v865
      %v867 = vpop.f32.mrb[0].mxu0
      %868 = vmatprep.mubr.f32.mxu0 %v769
      %869 = vmatmul.mubr.f32.gmra.mrb[0].mxu0 %v705
      %v870 = vpop.f32.mrb[0].mxu0
      %v871 = vadd.f32 %v748, %v870
      %v872 = vpop.f32.mrb[0].mxu0
      %873 = vmatprep.mubr.f32.mxu0 %v772
      %874 = vmatmul.mubr.f32.gmra.mrb[0].mxu0 %v706
      %v875 = vpop.f32.mrb[0].mxu0
      %v876 = vadd.f32 %v748, %v875
      %v877 = vpop.f32.mrb[0].mxu0
      %878 = vdwg.mxu0
      %v879 = vmax.f32 %v841, %v846
      %v880 = vmax.f32 %v851, %v856
      %v881 = vmax.f32 %v861, %v866
      %v882 = vmax.f32 %v871, %v876
      %883 = vst.msk [vmem:[#allocation3] sm:$0xff] %vm653, %v879
      %884 = vst.msk [vmem:[#allocation3 + $0x8] sm:$0xff] %vm653, %v880
      %885 = vst.msk [vmem:[#allocation3 + $0x10] sm:$0xff] %vm653, %v881
      %886 = vst.msk [vmem:[#allocation3 + $0x18] sm:$0xff] %vm653, %v882
      %v887 = vld [vmem:[#allocation3] ss:$2 sm:$0xf]
      %s888 = scalar_lea.vmem [#allocation3], 8
      %v889 = vld [vmem:[%s888] ss:$2 sm:$0xf]
      %s890 = scalar_lea.vmem [#allocation3], 16
      %v891 = vld [vmem:[%s890] ss:$2 sm:$0xf]
      %s892 = scalar_lea.vmem [#allocation3], 24
      %v893 = vld [vmem:[%s892] ss:$2 sm:$0xf]
      %s894 = scalar_lea.vmem [#allocation3], 1
      %v895 = vld [vmem:[%s894] ss:$2 sm:$0xf]
      %s896 = scalar_lea.vmem [#allocation3], 9
      %v897 = vld [vmem:[%s896] ss:$2 sm:$0xf]
      %s898 = scalar_lea.vmem [#allocation3], 17
      %v899 = vld [vmem:[%s898] ss:$2 sm:$0xf]
      %s900 = scalar_lea.vmem [#allocation3], 25
      %v901 = vld [vmem:[%s900] ss:$2 sm:$0xf]
      %v902 = vmax.f32 %v887, %v895
      %v903 = vmax.f32 %v889, %v897
      %v904 = vmax.f32 %v891, %v899
      %v905 = vmax.f32 %v893, %v901
      %v906 = vpack.c.bf16 %v902, %v902
      %v907 = vpack.c.bf16 %v903, %v903
      %v908 = vpack.c.bf16 %v904, %v904
      %v909 = vpack.c.bf16 %v905, %v905
      %vm910 = vcmask 254976
      %911 = vst.msk [vmem:[%s258] sm:$0x3] %vm910, %v906
      %912 = vst.msk [vmem:[%s258 + $0x2] sm:$0x3] %vm910, %v907
      %913 = vst.msk [vmem:[%s258 + $0x4] sm:$0x3] %vm910, %v908
      %914 = vst.msk [vmem:[%s258 + $0x6] sm:$0x3] %vm910, %v909
      %v915 = vunpack.c.l.bf16 %v906
      %v916 = vunpack.c.l.bf16 %v907
      %v917 = vunpack.c.l.bf16 %v908
      %v918 = vunpack.c.l.bf16 %v909
      %vm919 = vcmask 257024
      %v920 = vsel %vm919, %v915, 0.0
      %v921 = vsel %vm919, %v916, 0.0
      %v922 = vadd.f32 %v920, %v921
      %v923 = vsel %vm919, %v917, 0.0
      %v924 = vadd.f32 %v922, %v923
      %v925 = vsel %vm919, %v918, 0.0
      %v926 = vadd.f32 %v924, %v925
      %v927 = vsel %vm919, %v926, 0.0
      %v928 = vrot.slane %v927, 4
      %v929 = vadd.f32 %v927, %v928
      %v930 = vrot.slane %v929, 2
      %v931 = vadd.f32 %v929, %v930
      %v932 = vrot.slane %v931, 1
      %v933 = vadd.f32 %v931, %v932
      %v934 = vmul.f32 %v915, %v915
      %v935 = vmul.f32 %v916, %v916
      %v936 = vmul.f32 %v917, %v917
      %v937 = vmul.f32 %v918, %v918
      %v938 = vsel %vm919, %v934, 0.0
      %v939 = vsel %vm919, %v935, 0.0
      %v940 = vadd.f32 %v938, %v939
      %v941 = vsel %vm919, %v936, 0.0
      %v942 = vadd.f32 %v940, %v941
      %v943 = vsel %vm919, %v937, 0.0
      %v944 = vadd.f32 %v942, %v943
      %v945 = vsel %vm919, %v944, 0.0
      %v946 = vrot.slane %v945, 4
      %v947 = vadd.f32 %v945, %v946
      %v948 = vrot.slane %v947, 2
      %v949 = vadd.f32 %v947, %v948
      %v950 = vrot.slane %v949, 1
      %v951 = vadd.f32 %v949, %v950
      %vm952 = vcmask 1040384
      %v953 = vsel %vm952, %v933, %v951
      %954 = vst.msk [vmem:[%s262] sm:$0x3] %vm910, %v953
      %p955 = scmp.lt.s32.totalorder %s18, 1
      %s956 = scalar_select %p955, %s18, 1
      %s957 = smul.addr %s956, 4
      %s958 = smul.addr %s957, 2
      %s959 = scalar_lea.vmem %s5, %s958
      %p960 = scmp.lt.s32.totalorder %s18, 1
      %s961 = scalar_select %p960, %s18, 1
      %s962 = smul.addr %s961, 2
      %s963 = scalar_lea.vmem %s6, %s962
      // Predicated region
      $region41: #{_lambda_.4} parent=39 // pred_check
        %p964 = pneg %p146
      $region42: #{_lambda_.4} parent=39 // pred_check_branch
        %966 = sbr.rel (%p964) target = $region44
      $region43: #{_lambda_.4} parent=39 // pred_region
        _
      $region44: #{_lambda_.4} parent=39 // pred_fallthru
        _
      // Predicated region
      $region45: #{_lambda_.4} parent=39 // pred_check
        %p967 = pneg %p172
      $region46: #{_lambda_.4} parent=39 // pred_check_branch
        %969 = sbr.rel (%p967) target = $region48
      $region47: #{_lambda_.4} parent=39 // pred_region
        _
      $region48: #{_lambda_.4} parent=39 // pred_fallthru
        _
    $region40: #{_lambda_.4} parent=5 // pred_fallthru
      _
    %p970 = scmp.le.s32.totalorder 2, %s13
    // Predicated region
    $region49: #{_lambda_.4} parent=5 // pred_check
      %p971 = pneg %p970
    $region50: #{_lambda_.4} parent=5 // pred_check_branch
      %973 = sbr.rel (%p971) target = $region52
    $region51: #{_lambda_.4} parent=5 // pred_region
      %s974 = ssub.s32 %s13, 2
      // Predicated region
      $region53: #{_lambda_.4} parent=51 // pred_check
        %p975 = pneg %p152
      $region54: #{_lambda_.4} parent=51 // pred_check_branch
        %977 = sbr.rel (%p975) target = $region56
      $region55: #{_lambda_.4} parent=51 // pred_region
        %p978 = scmp.lt.s32.totalorder %s19, 1
        %s979 = scalar_select %p978, %s19, 1
        %s980 = smul.addr %s979, 4
        %s981 = smul.addr %s980, 2
        %s982 = scalar_lea.vmem %s5, %s981
      $region56: #{_lambda_.4} parent=51 // pred_fallthru
        _
      // Predicated region
      $region57: #{_lambda_.4} parent=51 // pred_check
        %p983 = pneg %p178
      $region58: #{_lambda_.4} parent=51 // pred_check_branch
        %985 = sbr.rel (%p983) target = $region60
      $region59: #{_lambda_.4} parent=51 // pred_region
        %p986 = scmp.lt.s32.totalorder %s19, 1
        %s987 = scalar_select %p986, %s19, 1
        %s988 = smul.addr %s987, 2
        %s989 = scalar_lea.vmem %s6, %s988
      $region60: #{_lambda_.4} parent=51 // pred_fallthru
        _
    $region52: #{_lambda_.4} parent=5 // pred_fallthru
      _
  $region6: #{_lambda_.4} parent=0 // loop_footer
    %s17 = sadd.s32 1, %s13
  $region7: #{_lambda_.4} parent=0 // loop_footer_branch
    %12 = sbr.rel target = $region3
  $region8: #{_lambda_.4} parent=0 // loop_exit
    _

// kernel: _lambda_.3
$region0: #{_lambda_.3}
  #allocation0 [shape = 'u32[]', space=smem, size = 0x4, offset = 0x4, fixed_abs, tag = 'smem constant byte address 0x4 - core index']
  #allocation1 [shape = 'u32[144,128]{1,0:T(1,128)}', space=vmem, size = 0x12000, scoped, tag = 'internal scratch']
  #allocation2 [shape = 'bf16[18,18,1]{2,1,0:T(8,128)(2,1)}', space=vmem, size = 0x1b000, scoped, tag = 'scratch operand']
  #allocation3 [shape = 'f32[8,16,16]{2,1,0:T(8,128)}', space=vmem, size = 0x10000, scoped, tag = 'scratch operand']
  #allocation4 [shape = 'f32[1,1]{1,0:T(1,128)S(1)}', space=vmem, size = 0x200, scoped, tag = 'scoped memory for _lambda_.3']
  #allocation5 [shape = 'f32[1,1]{1,0:T(1,128)S(1)}', space=vmem, size = 0x200, scoped, tag = 'scoped memory for _lambda_.3']
  %s0 = inlined_call_operand.vmem [shape: bf16[2,16,16,1], index: 0, kind: input, shape index: {}]
  %s1 = inlined_call_operand.<no memory space> [shape: f32[1,1], index: 1, kind: input, shape index: {}]
  %s2 = inlined_call_operand.<no memory space> [shape: f32[1,1], index: 2, kind: input, shape index: {}]
  %s3 = inlined_call_operand.vmem [shape: bf16[9,16], index: 3, kind: input, shape index: {}]
  %s4 = inlined_call_operand.vmem [shape: f32[1,16], index: 4, kind: input, shape index: {}]
  %s5 = inlined_call_operand.vmem [shape: bf16[2,8,8,16], index: 5, kind: output, shape index: {0}]
  %s6 = inlined_call_operand.vmem [shape: f32[2,2,16], index: 6, kind: output, shape index: {1}]
  %7 = xla_tuple %s5, %s6
  %s8 = sld [smem:[#allocation0]]
  $region61: #{_lambda_.3} parent=0
    _
  %s10 = ssub.s32 1, %s8
  %s11 = scalar_select 0, %s10, %s8
  %v12 = vstv %s1
  %13 = vst [vmem:[#allocation4] sm:$0x1] %v12
  %v14 = vstv %s2
  %15 = vst [vmem:[#allocation5] sm:$0x1] %v14
  loop: start=0, step=1, limit=4
  $region2: #{_lambda_.3} parent=0 // loop_pre_header
    _
  $region3: #{_lambda_.3} parent=0 // loop_header
    %s17 = sphi 0, %s21
    %p18 = scmp.ge.s32.totalorder %s17, 4
    %s27 = sphi 0, %s29
    %s30 = sphi 0, %s27
    %s31 = sphi 0, %s30
    %s47 = sphi 0, %s31
    %s51 = sphi 0, %s51
    %s53 = sphi 0, %s51
    %s54 = sphi 0, %s53
    %s68 = sphi 0, %s54
    %s72 = sphi 0, %s72
    %s74 = sphi 0, %s72
    %s75 = sphi 0, %s74
    %s89 = sphi 0, %s75
    %s93 = sphi 0, %s93
    %s95 = sphi 0, %s93
    %s96 = sphi 0, %s95
    %s110 = sphi 0, %s96
    %s114 = sphi 0, %s114
    %s116 = sphi 0, %s114
    %s117 = sphi 0, %s116
    %s131 = sphi 0, %s117
    %s137 = sphi 0, %s139
    %s140 = sphi 0, %s137
    %s141 = sphi 0, %s140
    %s157 = sphi 0, %s141
    %s163 = sphi 0, %s165
    %s166 = sphi 0, %s163
    %s167 = sphi 0, %s166
    %s183 = sphi 0, %s167
  $region4: #{_lambda_.3} parent=0 // loop_header_branch
    %20 = sbr.rel (%p18) target = $region8
  $region5: #{_lambda_.3} parent=0 // loop_body
    %s22 = ssub.s32 %s17, 1
    %s23 = ssub.s32 %s17, 2
    %s24 = sadd.s32 %s17, 1
    %s25 = ssub.s32 %s17, %s24
    %p26 = scmp.eq.s32.totalorder %s25, 0
    %s28 = sadd.s32 %s27, 1
    %s29 = scalar_select %p26, %s27, %s28
    %p32 = pneg %p26
    %p33 = scmp.eq.s32.totalorder %s17, 1
    %p34 = por %p32, %p33
    %p35 = scmp.ne.s32.totalorder %s27, %s30
    %p36 = scmp.eq.s32.totalorder %s17, 0
    %p37 = por %p35, %p36
    %p38 = scmp.ne.s32.totalorder %s27, %s30
    %p39 = scmp.eq.s32.totalorder %s22, 1
    %p40 = por %p38, %p39
    %p41 = scmp.ne.s32.totalorder %s30, %s31
    %p42 = scmp.eq.s32.totalorder %s22, 0
    %p43 = por %p41, %p42
    %p44 = scmp.ne.s32.totalorder %s30, %s31
    %p45 = scmp.eq.s32.totalorder %s23, 1
    %p46 = por %p44, %p45
    %p48 = scmp.ne.s32.totalorder %s31, %s47
    %p49 = scmp.eq.s32.totalorder %s23, 0
    %p50 = por %p48, %p49
    %s52 = sadd.s32 %s51, 1
    %p55 = scmp.eq.s32.totalorder %s17, 1
    %p56 = scmp.ne.s32.totalorder %s51, %s53
    %p57 = scmp.eq.s32.totalorder %s17, 0
    %p58 = por %p56, %p57
    %p59 = scmp.ne.s32.totalorder %s51, %s53
    %p60 = scmp.eq.s32.totalorder %s22, 1
    %p61 = por %p59, %p60
    %p62 = scmp.ne.s32.totalorder %s53, %s54
    %p63 = scmp.eq.s32.totalorder %s22, 0
    %p64 = por %p62, %p63
    %p65 = scmp.ne.s32.totalorder %s53, %s54
    %p66 = scmp.eq.s32.totalorder %s23, 1
    %p67 = por %p65, %p66
    %p69 = scmp.ne.s32.totalorder %s54, %s68
    %p70 = scmp.eq.s32.totalorder %s23, 0
    %p71 = por %p69, %p70
    %s73 = sadd.s32 %s72, 1
    %p76 = scmp.eq.s32.totalorder %s17, 1
    %p77 = scmp.ne.s32.totalorder %s72, %s74
    %p78 = scmp.eq.s32.totalorder %s17, 0
    %p79 = por %p77, %p78
    %p80 = scmp.ne.s32.totalorder %s72, %s74
    %p81 = scmp.eq.s32.totalorder %s22, 1
    %p82 = por %p80, %p81
    %p83 = scmp.ne.s32.totalorder %s74, %s75
    %p84 = scmp.eq.s32.totalorder %s22, 0
    %p85 = por %p83, %p84
    %p86 = scmp.ne.s32.totalorder %s74, %s75
    %p87 = scmp.eq.s32.totalorder %s23, 1
    %p88 = por %p86, %p87
    %p90 = scmp.ne.s32.totalorder %s75, %s89
    %p91 = scmp.eq.s32.totalorder %s23, 0
    %p92 = por %p90, %p91
    %s94 = sadd.s32 %s93, 1
    %p97 = scmp.eq.s32.totalorder %s17, 1
    %p98 = scmp.ne.s32.totalorder %s93, %s95
    %p99 = scmp.eq.s32.totalorder %s17, 0
    %p100 = por %p98, %p99
    %p101 = scmp.ne.s32.totalorder %s93, %s95
    %p102 = scmp.eq.s32.totalorder %s22, 1
    %p103 = por %p101, %p102
    %p104 = scmp.ne.s32.totalorder %s95, %s96
    %p105 = scmp.eq.s32.totalorder %s22, 0
    %p106 = por %p104, %p105
    %p107 = scmp.ne.s32.totalorder %s95, %s96
    %p108 = scmp.eq.s32.totalorder %s23, 1
    %p109 = por %p107, %p108
    %p111 = scmp.ne.s32.totalorder %s96, %s110
    %p112 = scmp.eq.s32.totalorder %s23, 0
    %p113 = por %p111, %p112
    %s115 = sadd.s32 %s114, 1
    %p118 = scmp.eq.s32.totalorder %s17, 1
    %p119 = scmp.ne.s32.totalorder %s114, %s116
    %p120 = scmp.eq.s32.totalorder %s17, 0
    %p121 = por %p119, %p120
    %p122 = scmp.ne.s32.totalorder %s114, %s116
    %p123 = scmp.eq.s32.totalorder %s22, 1
    %p124 = por %p122, %p123
    %p125 = scmp.ne.s32.totalorder %s116, %s117
    %p126 = scmp.eq.s32.totalorder %s22, 0
    %p127 = por %p125, %p126
    %p128 = scmp.ne.s32.totalorder %s116, %s117
    %p129 = scmp.eq.s32.totalorder %s23, 1
    %p130 = por %p128, %p129
    %p132 = scmp.ne.s32.totalorder %s117, %s131
    %p133 = scmp.eq.s32.totalorder %s23, 0
    %p134 = por %p132, %p133
    %s135 = ssub.s32 %s17, %s24
    %p136 = scmp.eq.s32.totalorder %s135, 0
    %s138 = sadd.s32 %s137, 1
    %s139 = scalar_select %p136, %s137, %s138
    %p142 = pneg %p136
    %p143 = scmp.eq.s32.totalorder %s17, 1
    %p144 = por %p142, %p143
    %p145 = scmp.ne.s32.totalorder %s137, %s140
    %p146 = scmp.eq.s32.totalorder %s17, 0
    %p147 = por %p145, %p146
    %p148 = scmp.ne.s32.totalorder %s137, %s140
    %p149 = scmp.eq.s32.totalorder %s22, 1
    %p150 = por %p148, %p149
    %p151 = scmp.ne.s32.totalorder %s140, %s141
    %p152 = scmp.eq.s32.totalorder %s22, 0
    %p153 = por %p151, %p152
    %p154 = scmp.ne.s32.totalorder %s140, %s141
    %p155 = scmp.eq.s32.totalorder %s23, 1
    %p156 = por %p154, %p155
    %p158 = scmp.ne.s32.totalorder %s141, %s157
    %p159 = scmp.eq.s32.totalorder %s23, 0
    %p160 = por %p158, %p159
    %s161 = ssub.s32 %s17, %s24
    %p162 = scmp.eq.s32.totalorder %s161, 0
    %s164 = sadd.s32 %s163, 1
    %s165 = scalar_select %p162, %s163, %s164
    %p168 = pneg %p162
    %p169 = scmp.eq.s32.totalorder %s17, 1
    %p170 = por %p168, %p169
    %p171 = scmp.ne.s32.totalorder %s163, %s166
    %p172 = scmp.eq.s32.totalorder %s17, 0
    %p173 = por %p171, %p172
    %p174 = scmp.ne.s32.totalorder %s163, %s166
    %p175 = scmp.eq.s32.totalorder %s22, 1
    %p176 = por %p174, %p175
    %p177 = scmp.ne.s32.totalorder %s166, %s167
    %p178 = scmp.eq.s32.totalorder %s22, 0
    %p179 = por %p177, %p178
    %p180 = scmp.ne.s32.totalorder %s166, %s167
    %p181 = scmp.eq.s32.totalorder %s23, 1
    %p182 = por %p180, %p181
    %p184 = scmp.ne.s32.totalorder %s167, %s183
    %p185 = scmp.eq.s32.totalorder %s23, 0
    %p186 = por %p184, %p185
    %p187 = scmp.le.s32.totalorder 1, %s17
    %p188 = scmp.lt.s32.totalorder %s17, 3
    %p189 = pnand %p187, %p188
    %p190 = pneg %p189
    // Predicated region
    $region9: #{_lambda_.3} parent=5 // pred_check
      _
    $region10: #{_lambda_.3} parent=5 // pred_check_branch
      %192 = sbr.rel (%p189) target = $region12
    $region11: #{_lambda_.3} parent=5 // pred_region
      %s193 = ssub.s32 %s17, 1
      // Predicated region
      $region13: #{_lambda_.3} parent=11 // pred_check
        %p194 = pneg %p64
      $region14: #{_lambda_.3} parent=11 // pred_check_branch
        %196 = sbr.rel (%p194) target = $region16
      $region15: #{_lambda_.3} parent=11 // pred_region
        _
      $region16: #{_lambda_.3} parent=11 // pred_fallthru
        _
      // Predicated region
      $region17: #{_lambda_.3} parent=11 // pred_check
        %p197 = pneg %p85
      $region18: #{_lambda_.3} parent=11 // pred_check_branch
        %199 = sbr.rel (%p197) target = $region20
      $region19: #{_lambda_.3} parent=11 // pred_region
        _
      $region20: #{_lambda_.3} parent=11 // pred_fallthru
        _
      // Predicated region
      $region21: #{_lambda_.3} parent=11 // pred_check
        %p200 = pneg %p106
      $region22: #{_lambda_.3} parent=11 // pred_check_branch
        %202 = sbr.rel (%p200) target = $region24
      $region23: #{_lambda_.3} parent=11 // pred_region
        _
      $region24: #{_lambda_.3} parent=11 // pred_fallthru
        _
      // Predicated region
      $region25: #{_lambda_.3} parent=11 // pred_check
        %p203 = pneg %p127
      $region26: #{_lambda_.3} parent=11 // pred_check_branch
        %205 = sbr.rel (%p203) target = $region28
      $region27: #{_lambda_.3} parent=11 // pred_region
        _
      $region28: #{_lambda_.3} parent=11 // pred_fallthru
        _
    $region12: #{_lambda_.3} parent=5 // pred_fallthru
      _
    %p206 = scmp.lt.s32.totalorder %s17, 2
    // Predicated region
    $region29: #{_lambda_.3} parent=5 // pred_check
      %p207 = pneg %p206
    $region30: #{_lambda_.3} parent=5 // pred_check_branch
      %209 = sbr.rel (%p207) target = $region32
    $region31: #{_lambda_.3} parent=5 // pred_region
      // Predicated region
      $region33: #{_lambda_.3} parent=31 // pred_check
        %p210 = pneg %p37
      $region34: #{_lambda_.3} parent=31 // pred_check_branch
        %212 = sbr.rel (%p210) target = $region36
      $region35: #{_lambda_.3} parent=31 // pred_region
        %p213 = scmp.lt.s32.totalorder %s17, 1
        %s214 = scalar_select %p213, %s17, 1
        %s215 = smul.addr %s214, 32
        %s216 = smul.addr %s215, 4
        %s217 = scalar_lea.vmem %s0, %s216
      $region36: #{_lambda_.3} parent=31 // pred_fallthru
        _
    $region32: #{_lambda_.3} parent=5 // pred_fallthru
      _
    %p218 = scmp.le.s32.totalorder 1, %s17
    %p219 = scmp.lt.s32.totalorder %s17, 3
    %p220 = pnand %p218, %p219
    %p221 = pneg %p220
    // Predicated region
    $region37: #{_lambda_.3} parent=5 // pred_check
      _
    $region38: #{_lambda_.3} parent=5 // pred_check_branch
      %223 = sbr.rel (%p220) target = $region40
    $region39: #{_lambda_.3} parent=5 // pred_region
      %s224 = ssub.s32 %s17, 1
      %p225 = scmp.lt.s32.totalorder %s22, 1
      %s226 = scalar_select %p225, %s22, 1
      %s227 = smul.addr %s226, 32
      %s228 = smul.addr %s227, 4
      %s229 = scalar_lea.vmem %s0, %s228
      %p230 = pneg %p43
      %p231 = pneg %p40
      %p232 = pneg %p64
      %p233 = pneg %p61
      %p234 = pneg %p85
      %p235 = pneg %p82
      %p236 = pneg %p106
      %p237 = pneg %p103
      %p238 = pneg %p127
      %p239 = pneg %p124
      %p240 = pneg %p153
      %p241 = pneg %p150
      %p242 = scmp.lt.s32.totalorder %s22, 1
      %s243 = scalar_select %p242, %s22, 1
      %s244 = smul.addr %s243, 8
      %s245 = smul.addr %s244, 4
      %s246 = scalar_lea.vmem %s5, %s245
      %p247 = pneg %p179
      %p248 = pneg %p176
      %p249 = scmp.lt.s32.totalorder %s22, 1
      %s250 = scalar_select %p249, %s22, 1
      %s251 = smul.addr %s250, 2
      %s252 = scalar_lea.vmem %s6, %s251
      %p253 = scmp.lt.s32.totalorder %s22, 1
      %s254 = scalar_select %p253, %s22, 1
      %s255 = smul.addr %s254, 32
      %s256 = smul.addr %s255, 4
      %s257 = scalar_lea.vmem %s0, %s256
      %p258 = scmp.lt.s32.totalorder %s22, 1
      %s259 = scalar_select %p258, %s22, 1
      %s260 = smul.addr %s259, 8
      %s261 = smul.addr %s260, 4
      %s262 = scalar_lea.vmem %s5, %s261
      %p263 = scmp.lt.s32.totalorder %s22, 1
      %s264 = scalar_select %p263, %s22, 1
      %s265 = smul.addr %s264, 2
      %s266 = scalar_lea.vmem %s6, %s265
      %vm268 = vcmask 3072
      %269 = vst.msk [vmem:[#allocation2] sm:$0xf] %vm268, 0
      %270 = vst.msk [vmem:[#allocation2 + $0x4] sm:$0xf] %vm268, 0
      %vm271 = vcmask 0
      %272 = vst.msk [vmem:[#allocation2 + $0x8] sm:$0x1] %vm271, 0
      %273 = vst.msk [vmem:[#allocation2 + $0xc] sm:$0xf] %vm268, 0
      %274 = vst.msk [vmem:[#allocation2 + $0x10] sm:$0xf] %vm268, 0
      %275 = vst.msk [vmem:[#allocation2 + $0x14] sm:$0x1] %vm271, 0
      %276 = vst.msk [vmem:[#allocation2 + $0x18] sm:$0xf] %vm268, 0
      %277 = vst.msk [vmem:[#allocation2 + $0x1c] sm:$0xf] %vm268, 0
      %278 = vst.msk [vmem:[#allocation2 + $0x20] sm:$0x1] %vm271, 0
      %279 = vst.msk [vmem:[#allocation2 + $0x24] sm:$0xf] %vm268, 0
      %280 = vst.msk [vmem:[#allocation2 + $0x28] sm:$0xf] %vm268, 0
      %281 = vst.msk [vmem:[#allocation2 + $0x2c] sm:$0x1] %vm271, 0
      %282 = vst.msk [vmem:[#allocation2 + $0x30] sm:$0xf] %vm268, 0
      %283 = vst.msk [vmem:[#allocation2 + $0x34] sm:$0xf] %vm268, 0
      %284 = vst.msk [vmem:[#allocation2 + $0x38] sm:$0x1] %vm271, 0
      %285 = vst.msk [vmem:[#allocation2 + $0x3c] sm:$0xf] %vm268, 0
      %286 = vst.msk [vmem:[#allocation2 + $0x40] sm:$0xf] %vm268, 0
      %287 = vst.msk [vmem:[#allocation2 + $0x44] sm:$0x1] %vm271, 0
      %288 = vst.msk [vmem:[#allocation2 + $0x48] sm:$0xf] %vm268, 0
      %289 = vst.msk [vmem:[#allocation2 + $0x4c] sm:$0xf] %vm268, 0
      %290 = vst.msk [vmem:[#allocation2 + $0x50] sm:$0x1] %vm271, 0
      %291 = vst.msk [vmem:[#allocation2 + $0x54] sm:$0xf] %vm268, 0
      %292 = vst.msk [vmem:[#allocation2 + $0x58] sm:$0xf] %vm268, 0
      %293 = vst.msk [vmem:[#allocation2 + $0x5c] sm:$0x1] %vm271, 0
      %294 = vst.msk [vmem:[#allocation2 + $0x60] sm:$0xf] %vm268, 0
      %295 = vst.msk [vmem:[#allocation2 + $0x64] sm:$0xf] %vm268, 0
      %296 = vst.msk [vmem:[#allocation2 + $0x68] sm:$0x1] %vm271, 0
      %297 = vst.msk [vmem:[#allocation2 + $0x6c] sm:$0xf] %vm268, 0
      %298 = vst.msk [vmem:[#allocation2 + $0x70] sm:$0xf] %vm268, 0
      %299 = vst.msk [vmem:[#allocation2 + $0x74] sm:$0x1] %vm271, 0
      %300 = vst.msk [vmem:[#allocation2 + $0x78] sm:$0xf] %vm268, 0
      %301 = vst.msk [vmem:[#allocation2 + $0x7c] sm:$0xf] %vm268, 0
      %302 = vst.msk [vmem:[#allocation2 + $0x80] sm:$0x1] %vm271, 0
      %303 = vst.msk [vmem:[#allocation2 + $0x84] sm:$0xf] %vm268, 0
      %304 = vst.msk [vmem:[#allocation2 + $0x88] sm:$0xf] %vm268, 0
      %305 = vst.msk [vmem:[#allocation2 + $0x8c] sm:$0x1] %vm271, 0
      %306 = vst.msk [vmem:[#allocation2 + $0x90] sm:$0xf] %vm268, 0
      %307 = vst.msk [vmem:[#allocation2 + $0x94] sm:$0xf] %vm268, 0
      %308 = vst.msk [vmem:[#allocation2 + $0x98] sm:$0x1] %vm271, 0
      %309 = vst.msk [vmem:[#allocation2 + $0x9c] sm:$0xf] %vm268, 0
      %310 = vst.msk [vmem:[#allocation2 + $0xa0] sm:$0xf] %vm268, 0
      %311 = vst.msk [vmem:[#allocation2 + $0xa4] sm:$0x1] %vm271, 0
      %312 = vst.msk [vmem:[#allocation2 + $0xa8] sm:$0xf] %vm268, 0
      %313 = vst.msk [vmem:[#allocation2 + $0xac] sm:$0xf] %vm268, 0
      %314 = vst.msk [vmem:[#allocation2 + $0xb0] sm:$0x1] %vm271, 0
      %315 = vst.msk [vmem:[#allocation2 + $0xb4] sm:$0xf] %vm268, 0
      %316 = vst.msk [vmem:[#allocation2 + $0xb8] sm:$0xf] %vm268, 0
      %317 = vst.msk [vmem:[#allocation2 + $0xbc] sm:$0x1] %vm271, 0
      %318 = vst.msk [vmem:[#allocation2 + $0xc0] sm:$0xf] %vm268, 0
      %319 = vst.msk [vmem:[#allocation2 + $0xc4] sm:$0xf] %vm268, 0
      %320 = vst.msk [vmem:[#allocation2 + $0xc8] sm:$0x1] %vm271, 0
      %321 = vst.msk [vmem:[#allocation2 + $0xcc] sm:$0xf] %vm268, 0
      %322 = vst.msk [vmem:[#allocation2 + $0xd0] sm:$0xf] %vm268, 0
      %323 = vst.msk [vmem:[#allocation2 + $0xd4] sm:$0x1] %vm271, 0
      %v324 = vld [vmem:[%s257] sm:$0xf]
      %v325 = vld [vmem:[%s257 + $0x4] sm:$0xf]
      %v326 = vld [vmem:[%s257 + $0x8] sm:$0xf]
      %v327 = vld [vmem:[%s257 + $0xc] sm:$0xf]
      %v328 = vld [vmem:[%s257 + $0x10] sm:$0xf]
      %v329 = vld [vmem:[%s257 + $0x14] sm:$0xf]
      %v330 = vld [vmem:[%s257 + $0x18] sm:$0xf]
      %v331 = vld [vmem:[%s257 + $0x1c] sm:$0xf]
      %v332 = vld [vmem:[%s257 + $0x20] sm:$0xf]
      %v333 = vld [vmem:[%s257 + $0x24] sm:$0xf]
      %v334 = vld [vmem:[%s257 + $0x28] sm:$0xf]
      %v335 = vld [vmem:[%s257 + $0x2c] sm:$0xf]
      %v336 = vld [vmem:[%s257 + $0x30] sm:$0xf]
      %v337 = vld [vmem:[%s257 + $0x34] sm:$0xf]
      %v338 = vld [vmem:[%s257 + $0x38] sm:$0xf]
      %v339 = vld [vmem:[%s257 + $0x3c] sm:$0xf]
      %v340 = vld [vmem:[%s257 + $0x40] sm:$0xf]
      %v341 = vld [vmem:[%s257 + $0x44] sm:$0xf]
      %v342 = vld [vmem:[%s257 + $0x48] sm:$0xf]
      %v343 = vld [vmem:[%s257 + $0x4c] sm:$0xf]
      %v344 = vld [vmem:[%s257 + $0x50] sm:$0xf]
      %v345 = vld [vmem:[%s257 + $0x54] sm:$0xf]
      %v346 = vld [vmem:[%s257 + $0x58] sm:$0xf]
      %v347 = vld [vmem:[%s257 + $0x5c] sm:$0xf]
      %v348 = vld [vmem:[%s257 + $0x60] sm:$0xf]
      %v349 = vld [vmem:[%s257 + $0x64] sm:$0xf]
      %v350 = vld [vmem:[%s257 + $0x68] sm:$0xf]
      %v351 = vld [vmem:[%s257 + $0x6c] sm:$0xf]
      %v352 = vld [vmem:[%s257 + $0x70] sm:$0xf]
      %v353 = vld [vmem:[%s257 + $0x74] sm:$0xf]
      %v354 = vld [vmem:[%s257 + $0x78] sm:$0xf]
      %v355 = vld [vmem:[%s257 + $0x7c] sm:$0xf]
      %vm356 = vsmask.f32 256
      %vm357 = vsmask.f32 4368
      %vm358 = vmor %vm356, %vm357
      %v360 = vshrl.u32 %v324, 16
      %v362 = vrot.slane %v360, 7
      %v363 = vshll.u32 %v324, 16
      %v365 = vor.u32 %v362, %v363
      %v366 = vrot.slane %v362, 4
      %v368 = vshrl.u32 %v325, 16
      %v370 = vrot.slane %v368, 7
      %v371 = vshll.u32 %v325, 16
      %v373 = vor.u32 %v370, %v371
      %v374 = vsel %vm358, %v366, %v373
      %v375 = vrot.slane %v370, 4
      %v377 = vshrl.u32 %v326, 16
      %v379 = vrot.slane %v377, 7
      %v380 = vshll.u32 %v326, 16
      %v382 = vor.u32 %v379, %v380
      %v383 = vrot.slane %v379, 4
      %v385 = vshrl.u32 %v327, 16
      %v387 = vrot.slane %v385, 7
      %v388 = vshll.u32 %v327, 16
      %v390 = vor.u32 %v387, %v388
      %v391 = vsel %vm358, %v383, %v390
      %v392 = vrot.slane %v387, 4
      %v394 = vshrl.u32 %v328, 16
      %v396 = vrot.slane %v394, 7
      %v397 = vshll.u32 %v328, 16
      %v399 = vor.u32 %v396, %v397
      %v400 = vrot.slane %v396, 4
      %v402 = vshrl.u32 %v329, 16
      %v404 = vrot.slane %v402, 7
      %v405 = vshll.u32 %v329, 16
      %v407 = vor.u32 %v404, %v405
      %v408 = vsel %vm358, %v400, %v407
      %v409 = vrot.slane %v404, 4
      %v411 = vshrl.u32 %v330, 16
      %v413 = vrot.slane %v411, 7
      %v414 = vshll.u32 %v330, 16
      %v416 = vor.u32 %v413, %v414
      %v417 = vrot.slane %v413, 4
      %v419 = vshrl.u32 %v331, 16
      %v421 = vrot.slane %v419, 7
      %v422 = vshll.u32 %v331, 16
      %v424 = vor.u32 %v421, %v422
      %v425 = vsel %vm358, %v417, %v424
      %v426 = vrot.slane %v421, 4
      %v428 = vshrl.u32 %v332, 16
      %v430 = vrot.slane %v428, 7
      %v431 = vshll.u32 %v332, 16
      %v433 = vor.u32 %v430, %v431
      %v434 = vrot.slane %v430, 4
      %v436 = vshrl.u32 %v333, 16
      %v438 = vrot.slane %v436, 7
      %v439 = vshll.u32 %v333, 16
      %v441 = vor.u32 %v438, %v439
      %v442 = vsel %vm358, %v434, %v441
      %v443 = vrot.slane %v438, 4
      %v445 = vshrl.u32 %v334, 16
      %v447 = vrot.slane %v445, 7
      %v448 = vshll.u32 %v334, 16
      %v450 = vor.u32 %v447, %v448
      %v451 = vrot.slane %v447, 4
      %v453 = vshrl.u32 %v335, 16
      %v455 = vrot.slane %v453, 7
      %v456 = vshll.u32 %v335, 16
      %v458 = vor.u32 %v455, %v456
      %v459 = vsel %vm358, %v451, %v458
      %v460 = vrot.slane %v455, 4
      %v462 = vshrl.u32 %v336, 16
      %v464 = vrot.slane %v462, 7
      %v465 = vshll.u32 %v336, 16
      %v467 = vor.u32 %v464, %v465
      %v468 = vrot.slane %v464, 4
      %v470 = vshrl.u32 %v337, 16
      %v472 = vrot.slane %v470, 7
      %v473 = vshll.u32 %v337, 16
      %v475 = vor.u32 %v472, %v473
      %v476 = vsel %vm358, %v468, %v475
      %v477 = vrot.slane %v472, 4
      %v479 = vshrl.u32 %v338, 16
      %v481 = vrot.slane %v479, 7
      %v482 = vshll.u32 %v338, 16
      %v484 = vor.u32 %v481, %v482
      %v485 = vrot.slane %v481, 4
      %v487 = vshrl.u32 %v339, 16
      %v489 = vrot.slane %v487, 7
      %v490 = vshll.u32 %v339, 16
      %v492 = vor.u32 %v489, %v490
      %v493 = vsel %vm358, %v485, %v492
      %v494 = vrot.slane %v489, 4
      %v496 = vshrl.u32 %v340, 16
      %v498 = vrot.slane %v496, 7
      %v499 = vshll.u32 %v340, 16
      %v501 = vor.u32 %v498, %v499
      %v502 = vrot.slane %v498, 4
      %v504 = vshrl.u32 %v341, 16
      %v506 = vrot.slane %v504, 7
      %v507 = vshll.u32 %v341, 16
      %v509 = vor.u32 %v506, %v507
      %v510 = vsel %vm358, %v502, %v509
      %v511 = vrot.slane %v506, 4
      %v513 = vshrl.u32 %v342, 16
      %v515 = vrot.slane %v513, 7
      %v516 = vshll.u32 %v342, 16
      %v518 = vor.u32 %v515, %v516
      %v519 = vrot.slane %v515, 4
      %v521 = vshrl.u32 %v343, 16
      %v523 = vrot.slane %v521, 7
      %v524 = vshll.u32 %v343, 16
      %v526 = vor.u32 %v523, %v524
      %v527 = vsel %vm358, %v519, %v526
      %v528 = vrot.slane %v523, 4
      %v530 = vshrl.u32 %v344, 16
      %v532 = vrot.slane %v530, 7
      %v533 = vshll.u32 %v344, 16
      %v535 = vor.u32 %v532, %v533
      %v536 = vrot.slane %v532, 4
      %v538 = vshrl.u32 %v345, 16
      %v540 = vrot.slane %v538, 7
      %v541 = vshll.u32 %v345, 16
      %v543 = vor.u32 %v540, %v541
      %v544 = vsel %vm358, %v536, %v543
      %v545 = vrot.slane %v540, 4
      %v547 = vshrl.u32 %v346, 16
      %v549 = vrot.slane %v547, 7
      %v550 = vshll.u32 %v346, 16
      %v552 = vor.u32 %v549, %v550
      %v553 = vrot.slane %v549, 4
      %v555 = vshrl.u32 %v347, 16
      %v557 = vrot.slane %v555, 7
      %v558 = vshll.u32 %v347, 16
      %v560 = vor.u32 %v557, %v558
      %v561 = vsel %vm358, %v553, %v560
      %v562 = vrot.slane %v557, 4
      %v564 = vshrl.u32 %v348, 16
      %v566 = vrot.slane %v564, 7
      %v567 = vshll.u32 %v348, 16
      %v569 = vor.u32 %v566, %v567
      %v570 = vrot.slane %v566, 4
      %v572 = vshrl.u32 %v349, 16
      %v574 = vrot.slane %v572, 7
      %v575 = vshll.u32 %v349, 16
      %v577 = vor.u32 %v574, %v575
      %v578 = vsel %vm358, %v570, %v577
      %v579 = vrot.slane %v574, 4
      %v581 = vshrl.u32 %v350, 16
      %v583 = vrot.slane %v581, 7
      %v584 = vshll.u32 %v350, 16
      %v586 = vor.u32 %v583, %v584
      %v587 = vrot.slane %v583, 4
      %v589 = vshrl.u32 %v351, 16
      %v591 = vrot.slane %v589, 7
      %v592 = vshll.u32 %v351, 16
      %v594 = vor.u32 %v591, %v592
      %v595 = vsel %vm358, %v587, %v594
      %v596 = vrot.slane %v591, 4
      %v598 = vshrl.u32 %v352, 16
      %v600 = vrot.slane %v598, 7
      %v601 = vshll.u32 %v352, 16
      %v603 = vor.u32 %v600, %v601
      %v604 = vrot.slane %v600, 4
      %v606 = vshrl.u32 %v353, 16
      %v608 = vrot.slane %v606, 7
      %v609 = vshll.u32 %v353, 16
      %v611 = vor.u32 %v608, %v609
      %v612 = vsel %vm358, %v604, %v611
      %v613 = vrot.slane %v608, 4
      %v615 = vshrl.u32 %v354, 16
      %v617 = vrot.slane %v615, 7
      %v618 = vshll.u32 %v354, 16
      %v620 = vor.u32 %v617, %v618
      %v621 = vrot.slane %v617, 4
      %v623 = vshrl.u32 %v355, 16
      %v625 = vrot.slane %v623, 7
      %v626 = vshll.u32 %v355, 16
      %v628 = vor.u32 %v625, %v626
      %v629 = vsel %vm358, %v621, %v628
      %v630 = vrot.slane %v625, 4
      %s679 = scalar_lea.vmem [#allocation2], 12
      %vm680 = vcmask 3072
      %vm681 = vsmask.f32 7938
      %vm682 = vmand %vm680, %vm681
      %v683 = vld [vmem:[%s679] sm:$0xf]
      %v684 = vsel %vm682, %v365, %v683
      %685 = vst [vmem:[%s679] sm:$0xf] %v684
      %686 = vst.msk [vmem:[%s679 + $0x4] sm:$0xf] %vm268, %v374
      %vm687 = vcmask 0
      %vm688 = vmand %vm687, %vm356
      %v689 = vld [vmem:[%s679 + $0x8] sm:$0x1]
      %v690 = vsel %vm688, %v375, %v689
      %691 = vst [vmem:[%s679 + $0x8] sm:$0x1] %v690
      %v692 = vld [vmem:[%s679 + $0xc] sm:$0xf]
      %v693 = vsel %vm682, %v382, %v692
      %694 = vst [vmem:[%s679 + $0xc] sm:$0xf] %v693
      %695 = vst.msk [vmem:[%s679 + $0x10] sm:$0xf] %vm268, %v391
      %v696 = vld [vmem:[%s679 + $0x14] sm:$0x1]
      %v697 = vsel %vm688, %v392, %v696
      %698 = vst [vmem:[%s679 + $0x14] sm:$0x1] %v697
      %v699 = vld [vmem:[%s679 + $0x18] sm:$0xf]
      %v700 = vsel %vm682, %v399, %v699
      %701 = vst [vmem:[%s679 + $0x18] sm:$0xf] %v700
      %702 = vst.msk [vmem:[%s679 + $0x1c] sm:$0xf] %vm268, %v408
      %v703 = vld [vmem:[%s679 + $0x20] sm:$0x1]
      %v704 = vsel %vm688, %v409, %v703
      %705 = vst [vmem:[%s679 + $0x20] sm:$0x1] %v704
      %v706 = vld [vmem:[%s679 + $0x24] sm:$0xf]
      %v707 = vsel %vm682, %v416, %v706
      %708 = vst [vmem:[%s679 + $0x24] sm:$0xf] %v707
      %709 = vst.msk [vmem:[%s679 + $0x28] sm:$0xf] %vm268, %v425
      %v710 = vld [vmem:[%s679 + $0x2c] sm:$0x1]
      %v711 = vsel %vm688, %v426, %v710
      %712 = vst [vmem:[%s679 + $0x2c] sm:$0x1] %v711
      %v713 = vld [vmem:[%s679 + $0x30] sm:$0xf]
      %v714 = vsel %vm682, %v433, %v713
      %715 = vst [vmem:[%s679 + $0x30] sm:$0xf] %v714
      %716 = vst.msk [vmem:[%s679 + $0x34] sm:$0xf] %vm268, %v442
      %v717 = vld [vmem:[%s679 + $0x38] sm:$0x1]
      %v718 = vsel %vm688, %v443, %v717
      %719 = vst [vmem:[%s679 + $0x38] sm:$0x1] %v718
      %v720 = vld [vmem:[%s679 + $0x3c] sm:$0xf]
      %v721 = vsel %vm682, %v450, %v720
      %722 = vst [vmem:[%s679 + $0x3c] sm:$0xf] %v721
      %723 = vst.msk [vmem:[%s679 + $0x40] sm:$0xf] %vm268, %v459
      %v724 = vld [vmem:[%s679 + $0x44] sm:$0x1]
      %v725 = vsel %vm688, %v460, %v724
      %726 = vst [vmem:[%s679 + $0x44] sm:$0x1] %v725
      %v727 = vld [vmem:[%s679 + $0x48] sm:$0xf]
      %v728 = vsel %vm682, %v467, %v727
      %729 = vst [vmem:[%s679 + $0x48] sm:$0xf] %v728
      %730 = vst.msk [vmem:[%s679 + $0x4c] sm:$0xf] %vm268, %v476
      %v731 = vld [vmem:[%s679 + $0x50] sm:$0x1]
      %v732 = vsel %vm688, %v477, %v731
      %733 = vst [vmem:[%s679 + $0x50] sm:$0x1] %v732
      %v734 = vld [vmem:[%s679 + $0x54] sm:$0xf]
      %v735 = vsel %vm682, %v484, %v734
      %736 = vst [vmem:[%s679 + $0x54] sm:$0xf] %v735
      %737 = vst.msk [vmem:[%s679 + $0x58] sm:$0xf] %vm268, %v493
      %v738 = vld [vmem:[%s679 + $0x5c] sm:$0x1]
      %v739 = vsel %vm688, %v494, %v738
      %740 = vst [vmem:[%s679 + $0x5c] sm:$0x1] %v739
      %v741 = vld [vmem:[%s679 + $0x60] sm:$0xf]
      %v742 = vsel %vm682, %v501, %v741
      %743 = vst [vmem:[%s679 + $0x60] sm:$0xf] %v742
      %744 = vst.msk [vmem:[%s679 + $0x64] sm:$0xf] %vm268, %v510
      %v745 = vld [vmem:[%s679 + $0x68] sm:$0x1]
      %v746 = vsel %vm688, %v511, %v745
      %747 = vst [vmem:[%s679 + $0x68] sm:$0x1] %v746
      %v748 = vld [vmem:[%s679 + $0x6c] sm:$0xf]
      %v749 = vsel %vm682, %v518, %v748
      %750 = vst [vmem:[%s679 + $0x6c] sm:$0xf] %v749
      %751 = vst.msk [vmem:[%s679 + $0x70] sm:$0xf] %vm268, %v527
      %v752 = vld [vmem:[%s679 + $0x74] sm:$0x1]
      %v753 = vsel %vm688, %v528, %v752
      %754 = vst [vmem:[%s679 + $0x74] sm:$0x1] %v753
      %v755 = vld [vmem:[%s679 + $0x78] sm:$0xf]
      %v756 = vsel %vm682, %v535, %v755
      %757 = vst [vmem:[%s679 + $0x78] sm:$0xf] %v756
      %758 = vst.msk [vmem:[%s679 + $0x7c] sm:$0xf] %vm268, %v544
      %v759 = vld [vmem:[%s679 + $0x80] sm:$0x1]
      %v760 = vsel %vm688, %v545, %v759
      %761 = vst [vmem:[%s679 + $0x80] sm:$0x1] %v760
      %v762 = vld [vmem:[%s679 + $0x84] sm:$0xf]
      %v763 = vsel %vm682, %v552, %v762
      %764 = vst [vmem:[%s679 + $0x84] sm:$0xf] %v763
      %765 = vst.msk [vmem:[%s679 + $0x88] sm:$0xf] %vm268, %v561
      %v766 = vld [vmem:[%s679 + $0x8c] sm:$0x1]
      %v767 = vsel %vm688, %v562, %v766
      %768 = vst [vmem:[%s679 + $0x8c] sm:$0x1] %v767
      %v769 = vld [vmem:[%s679 + $0x90] sm:$0xf]
      %v770 = vsel %vm682, %v569, %v769
      %771 = vst [vmem:[%s679 + $0x90] sm:$0xf] %v770
      %772 = vst.msk [vmem:[%s679 + $0x94] sm:$0xf] %vm268, %v578
      %v773 = vld [vmem:[%s679 + $0x98] sm:$0x1]
      %v774 = vsel %vm688, %v579, %v773
      %775 = vst [vmem:[%s679 + $0x98] sm:$0x1] %v774
      %v776 = vld [vmem:[%s679 + $0x9c] sm:$0xf]
      %v777 = vsel %vm682, %v586, %v776
      %778 = vst [vmem:[%s679 + $0x9c] sm:$0xf] %v777
      %779 = vst.msk [vmem:[%s679 + $0xa0] sm:$0xf] %vm268, %v595
      %v780 = vld [vmem:[%s679 + $0xa4] sm:$0x1]
      %v781 = vsel %vm688, %v596, %v780
      %782 = vst [vmem:[%s679 + $0xa4] sm:$0x1] %v781
      %v783 = vld [vmem:[%s679 + $0xa8] sm:$0xf]
      %v784 = vsel %vm682, %v603, %v783
      %785 = vst [vmem:[%s679 + $0xa8] sm:$0xf] %v784
      %786 = vst.msk [vmem:[%s679 + $0xac] sm:$0xf] %vm268, %v612
      %v787 = vld [vmem:[%s679 + $0xb0] sm:$0x1]
      %v788 = vsel %vm688, %v613, %v787
      %789 = vst [vmem:[%s679 + $0xb0] sm:$0x1] %v788
      %v790 = vld [vmem:[%s679 + $0xb4] sm:$0xf]
      %v791 = vsel %vm682, %v620, %v790
      %792 = vst [vmem:[%s679 + $0xb4] sm:$0xf] %v791
      %793 = vst.msk [vmem:[%s679 + $0xb8] sm:$0xf] %vm268, %v629
      %v794 = vld [vmem:[%s679 + $0xbc] sm:$0x1]
      %v795 = vsel %vm688, %v630, %v794
      %796 = vst [vmem:[%s679 + $0xbc] sm:$0x1] %v795
      %v797 = vld [vmem:[#allocation2] sm:$0xf]
      %v798 = vld [vmem:[#allocation2 + $0x4] sm:$0xf]
      %v799 = vld [vmem:[#allocation2 + $0xc] sm:$0xf]
      %v800 = vld [vmem:[#allocation2 + $0x10] sm:$0xf]
      %v801 = vld [vmem:[#allocation2 + $0x18] sm:$0xf]
      %v802 = vld [vmem:[#allocation2 + $0x1c] sm:$0xf]
      %v803 = vld [vmem:[#allocation2 + $0x24] sm:$0xf]
      %v804 = vld [vmem:[#allocation2 + $0x28] sm:$0xf]
      %v805 = vld [vmem:[#allocation2 + $0x30] sm:$0xf]
      %v806 = vld [vmem:[#allocation2 + $0x34] sm:$0xf]
      %v807 = vld [vmem:[#allocation2 + $0x3c] sm:$0xf]
      %v808 = vld [vmem:[#allocation2 + $0x40] sm:$0xf]
      %v809 = vld [vmem:[#allocation2 + $0x48] sm:$0xf]
      %v810 = vld [vmem:[#allocation2 + $0x4c] sm:$0xf]
      %v811 = vld [vmem:[#allocation2 + $0x54] sm:$0xf]
      %v812 = vld [vmem:[#allocation2 + $0x58] sm:$0xf]
      %v813 = vld [vmem:[#allocation2 + $0x60] sm:$0xf]
      %v814 = vld [vmem:[#allocation2 + $0x64] sm:$0xf]
      %v815 = vld [vmem:[#allocation2 + $0x6c] sm:$0xf]
      %v816 = vld [vmem:[#allocation2 + $0x70] sm:$0xf]
      %v817 = vld [vmem:[#allocation2 + $0x78] sm:$0xf]
      %v818 = vld [vmem:[#allocation2 + $0x7c] sm:$0xf]
      %v819 = vld [vmem:[#allocation2 + $0x84] sm:$0xf]
      %v820 = vld [vmem:[#allocation2 + $0x88] sm:$0xf]
      %v821 = vld [vmem:[#allocation2 + $0x90] sm:$0xf]
      %v822 = vld [vmem:[#allocation2 + $0x94] sm:$0xf]
      %v823 = vld [vmem:[#allocation2 + $0x9c] sm:$0xf]
      %v824 = vld [vmem:[#allocation2 + $0xa0] sm:$0xf]
      %v825 = vld [vmem:[#allocation2 + $0xa8] sm:$0xf]
      %v826 = vld [vmem:[#allocation2 + $0xac] sm:$0xf]
      %v827 = vld [vmem:[#allocation2 + $0xb4] sm:$0xf]
      %v828 = vld [vmem:[#allocation2 + $0xb8] sm:$0xf]
      %v829 = vld [vmem:[#allocation2 + $0x8] sm:$0x1]
      %v830 = vld [vmem:[#allocation2 + $0x14] sm:$0x1]
      %v831 = vld [vmem:[#allocation2 + $0x20] sm:$0x1]
      %v832 = vld [vmem:[#allocation2 + $0x2c] sm:$0x1]
      %v833 = vld [vmem:[#allocation2 + $0x38] sm:$0x1]
      %v834 = vld [vmem:[#allocation2 + $0x44] sm:$0x1]
      %v835 = vld [vmem:[#allocation2 + $0x50] sm:$0x1]
      %v836 = vld [vmem:[#allocation2 + $0x5c] sm:$0x1]
      %v837 = vld [vmem:[#allocation2 + $0x68] sm:$0x1]
      %v838 = vld [vmem:[#allocation2 + $0x74] sm:$0x1]
      %v839 = vld [vmem:[#allocation2 + $0x80] sm:$0x1]
      %v840 = vld [vmem:[#allocation2 + $0x8c] sm:$0x1]
      %v841 = vld [vmem:[#allocation2 + $0x98] sm:$0x1]
      %v842 = vld [vmem:[#allocation2 + $0xa4] sm:$0x1]
      %v843 = vld [vmem:[#allocation2 + $0xb0] sm:$0x1]
      %v844 = vld [vmem:[#allocation2 + $0xbc] sm:$0x1]
      %vm845 = vsmask.f32 3328
      %vm846 = vsmask.f32 7440
      %vm847 = vmor %vm845, %vm846
      %v849 = vshrl.u32 %v797, 16
      %v851 = vrot.slane %v849, 4
      %v852 = vshll.u32 %v797, 16
      %v854 = vrot.slane %v852, 5
      %v855 = vor.u32 %v851, %v854
      %v856 = vrot.slane %v855, 4
      %v858 = vshll.u32 %v798, 16
      %v860 = vrot.slane %v858, 5
      %v861 = vsel %vm847, %v856, %v860
      %v862 = vshrl.u32 %v798, 16
      %v864 = vrot.slane %v862, 4
      %v865 = vor.u32 %v864, %v860
      %v866 = vrot.slane %v865, 4
      %v868 = vshll.u32 %v829, 16
      %v870 = vrot.slane %v868, 5
      %v871 = vsel %vm847, %v866, %v870
      %v873 = vshrl.u32 %v799, 16
      %v875 = vrot.slane %v873, 4
      %v876 = vshll.u32 %v799, 16
      %v878 = vrot.slane %v876, 5
      %v879 = vor.u32 %v875, %v878
      %v880 = vrot.slane %v879, 4
      %v882 = vshll.u32 %v800, 16
      %v884 = vrot.slane %v882, 5
      %v885 = vsel %vm847, %v880, %v884
      %v886 = vshrl.u32 %v800, 16
      %v888 = vrot.slane %v886, 4
      %v889 = vor.u32 %v888, %v884
      %v890 = vrot.slane %v889, 4
      %v892 = vshll.u32 %v830, 16
      %v894 = vrot.slane %v892, 5
      %v895 = vsel %vm847, %v890, %v894
      %v897 = vshrl.u32 %v801, 16
      %v899 = vrot.slane %v897, 4
      %v900 = vshll.u32 %v801, 16
      %v902 = vrot.slane %v900, 5
      %v903 = vor.u32 %v899, %v902
      %v904 = vrot.slane %v903, 4
      %v906 = vshll.u32 %v802, 16
      %v908 = vrot.slane %v906, 5
      %v909 = vsel %vm847, %v904, %v908
      %v910 = vshrl.u32 %v802, 16
      %v912 = vrot.slane %v910, 4
      %v913 = vor.u32 %v912, %v908
      %v914 = vrot.slane %v913, 4
      %v916 = vshll.u32 %v831, 16
      %v918 = vrot.slane %v916, 5
      %v919 = vsel %vm847, %v914, %v918
      %v921 = vshrl.u32 %v803, 16
      %v923 = vrot.slane %v921, 4
      %v924 = vshll.u32 %v803, 16
      %v926 = vrot.slane %v924, 5
      %v927 = vor.u32 %v923, %v926
      %v928 = vrot.slane %v927, 4
      %v930 = vshll.u32 %v804, 16
      %v932 = vrot.slane %v930, 5
      %v933 = vsel %vm847, %v928, %v932
      %v934 = vshrl.u32 %v804, 16
      %v936 = vrot.slane %v934, 4
      %v937 = vor.u32 %v936, %v932
      %v938 = vrot.slane %v937, 4
      %v940 = vshll.u32 %v832, 16
      %v942 = vrot.slane %v940, 5
      %v943 = vsel %vm847, %v938, %v942
      %v945 = vshrl.u32 %v805, 16
      %v947 = vrot.slane %v945, 4
      %v948 = vshll.u32 %v805, 16
      %v950 = vrot.slane %v948, 5
      %v951 = vor.u32 %v947, %v950
      %v952 = vrot.slane %v951, 4
      %v954 = vshll.u32 %v806, 16
      %v956 = vrot.slane %v954, 5
      %v957 = vsel %vm847, %v952, %v956
      %v958 = vshrl.u32 %v806, 16
      %v960 = vrot.slane %v958, 4
      %v961 = vor.u32 %v960, %v956
      %v962 = vrot.slane %v961, 4
      %v964 = vshll.u32 %v833, 16
      %v966 = vrot.slane %v964, 5
      %v967 = vsel %vm847, %v962, %v966
      %v969 = vshrl.u32 %v807, 16
      %v971 = vrot.slane %v969, 4
      %v972 = vshll.u32 %v807, 16
      %v974 = vrot.slane %v972, 5
      %v975 = vor.u32 %v971, %v974
      %v976 = vrot.slane %v975, 4
      %v978 = vshll.u32 %v808, 16
      %v980 = vrot.slane %v978, 5
      %v981 = vsel %vm847, %v976, %v980
      %v982 = vshrl.u32 %v808, 16
      %v984 = vrot.slane %v982, 4
      %v985 = vor.u32 %v984, %v980
      %v986 = vrot.slane %v985, 4
      %v988 = vshll.u32 %v834, 16
      %v990 = vrot.slane %v988, 5
      %v991 = vsel %vm847, %v986, %v990
      %v993 = vshrl.u32 %v809, 16
      %v995 = vrot.slane %v993, 4
      %v996 = vshll.u32 %v809, 16
      %v998 = vrot.slane %v996, 5
      %v999 = vor.u32 %v995, %v998
      %v1000 = vrot.slane %v999, 4
      %v1002 = vshll.u32 %v810, 16
      %v1004 = vrot.slane %v1002, 5
      %v1005 = vsel %vm847, %v1000, %v1004
      %v1006 = vshrl.u32 %v810, 16
      %v1008 = vrot.slane %v1006, 4
      %v1009 = vor.u32 %v1008, %v1004
      %v1010 = vrot.slane %v1009, 4
      %v1012 = vshll.u32 %v835, 16
      %v1014 = vrot.slane %v1012, 5
      %v1015 = vsel %vm847, %v1010, %v1014
      %v1017 = vshrl.u32 %v811, 16
      %v1019 = vrot.slane %v1017, 4
      %v1020 = vshll.u32 %v811, 16
      %v1022 = vrot.slane %v1020, 5
      %v1023 = vor.u32 %v1019, %v1022
      %v1024 = vrot.slane %v1023, 4
      %v1026 = vshll.u32 %v812, 16
      %v1028 = vrot.slane %v1026, 5
      %v1029 = vsel %vm847, %v1024, %v1028
      %v1030 = vshrl.u32 %v812, 16
      %v1032 = vrot.slane %v1030, 4
      %v1033 = vor.u32 %v1032, %v1028
      %v1034 = vrot.slane %v1033, 4
      %v1036 = vshll.u32 %v836, 16
      %v1038 = vrot.slane %v1036, 5
      %v1039 = vsel %vm847, %v1034, %v1038
      %v1041 = vshrl.u32 %v813, 16
      %v1043 = vrot.slane %v1041, 4
      %v1044 = vshll.u32 %v813, 16
      %v1046 = vrot.slane %v1044, 5
      %v1047 = vor.u32 %v1043, %v1046
      %v1048 = vrot.slane %v1047, 4
      %v1050 = vshll.u32 %v814, 16
      %v1052 = vrot.slane %v1050, 5
      %v1053 = vsel %vm847, %v1048, %v1052
      %v1054 = vshrl.u32 %v814, 16
      %v1056 = vrot.slane %v1054, 4
      %v1057 = vor.u32 %v1056, %v1052
      %v1058 = vrot.slane %v1057, 4
      %v1060 = vshll.u32 %v837, 16
      %v1062 = vrot.slane %v1060, 5
      %v1063 = vsel %vm847, %v1058, %v1062
      %v1065 = vshrl.u32 %v815, 16
      %v1067 = vrot.slane %v1065, 4
      %v1068 = vshll.u32 %v815, 16
      %v1070 = vrot.slane %v1068, 5
      %v1071 = vor.u32 %v1067, %v1070
      %v1072 = vrot.slane %v1071, 4
      %v1074 = vshll.u32 %v816, 16
      %v1076 = vrot.slane %v1074, 5
      %v1077 = vsel %vm847, %v1072, %v1076
      %v1078 = vshrl.u32 %v816, 16
      %v1080 = vrot.slane %v1078, 4
      %v1081 = vor.u32 %v1080, %v1076
      %v1082 = vrot.slane %v1081, 4
      %v1084 = vshll.u32 %v838, 16
      %v1086 = vrot.slane %v1084, 5
      %v1087 = vsel %vm847, %v1082, %v1086
      %v1089 = vshrl.u32 %v817, 16
      %v1091 = vrot.slane %v1089, 4
      %v1092 = vshll.u32 %v817, 16
      %v1094 = vrot.slane %v1092, 5
      %v1095 = vor.u32 %v1091, %v1094
      %v1096 = vrot.slane %v1095, 4
      %v1098 = vshll.u32 %v818, 16
      %v1100 = vrot.slane %v1098, 5
      %v1101 = vsel %vm847, %v1096, %v1100
      %v1102 = vshrl.u32 %v818, 16
      %v1104 = vrot.slane %v1102, 4
      %v1105 = vor.u32 %v1104, %v1100
      %v1106 = vrot.slane %v1105, 4
      %v1108 = vshll.u32 %v839, 16
      %v1110 = vrot.slane %v1108, 5
      %v1111 = vsel %vm847, %v1106, %v1110
      %v1113 = vshrl.u32 %v819, 16
      %v1115 = vrot.slane %v1113, 4
      %v1116 = vshll.u32 %v819, 16
      %v1118 = vrot.slane %v1116, 5
      %v1119 = vor.u32 %v1115, %v1118
      %v1120 = vrot.slane %v1119, 4
      %v1122 = vshll.u32 %v820, 16
      %v1124 = vrot.slane %v1122, 5
      %v1125 = vsel %vm847, %v1120, %v1124
      %v1126 = vshrl.u32 %v820, 16
      %v1128 = vrot.slane %v1126, 4
      %v1129 = vor.u32 %v1128, %v1124
      %v1130 = vrot.slane %v1129, 4
      %v1132 = vshll.u32 %v840, 16
      %v1134 = vrot.slane %v1132, 5
      %v1135 = vsel %vm847, %v1130, %v1134
      %v1137 = vshrl.u32 %v821, 16
      %v1139 = vrot.slane %v1137, 4
      %v1140 = vshll.u32 %v821, 16
      %v1142 = vrot.slane %v1140, 5
      %v1143 = vor.u32 %v1139, %v1142
      %v1144 = vrot.slane %v1143, 4
      %v1146 = vshll.u32 %v822, 16
      %v1148 = vrot.slane %v1146, 5
      %v1149 = vsel %vm847, %v1144, %v1148
      %v1150 = vshrl.u32 %v822, 16
      %v1152 = vrot.slane %v1150, 4
      %v1153 = vor.u32 %v1152, %v1148
      %v1154 = vrot.slane %v1153, 4
      %v1156 = vshll.u32 %v841, 16
      %v1158 = vrot.slane %v1156, 5
      %v1159 = vsel %vm847, %v1154, %v1158
      %v1161 = vshrl.u32 %v823, 16
      %v1163 = vrot.slane %v1161, 4
      %v1164 = vshll.u32 %v823, 16
      %v1166 = vrot.slane %v1164, 5
      %v1167 = vor.u32 %v1163, %v1166
      %v1168 = vrot.slane %v1167, 4
      %v1170 = vshll.u32 %v824, 16
      %v1172 = vrot.slane %v1170, 5
      %v1173 = vsel %vm847, %v1168, %v1172
      %v1174 = vshrl.u32 %v824, 16
      %v1176 = vrot.slane %v1174, 4
      %v1177 = vor.u32 %v1176, %v1172
      %v1178 = vrot.slane %v1177, 4
      %v1180 = vshll.u32 %v842, 16
      %v1182 = vrot.slane %v1180, 5
      %v1183 = vsel %vm847, %v1178, %v1182
      %v1185 = vshrl.u32 %v825, 16
      %v1187 = vrot.slane %v1185, 4
      %v1188 = vshll.u32 %v825, 16
      %v1190 = vrot.slane %v1188, 5
      %v1191 = vor.u32 %v1187, %v1190
      %v1192 = vrot.slane %v1191, 4
      %v1194 = vshll.u32 %v826, 16
      %v1196 = vrot.slane %v1194, 5
      %v1197 = vsel %vm847, %v1192, %v1196
      %v1198 = vshrl.u32 %v826, 16
      %v1200 = vrot.slane %v1198, 4
      %v1201 = vor.u32 %v1200, %v1196
      %v1202 = vrot.slane %v1201, 4
      %v1204 = vshll.u32 %v843, 16
      %v1206 = vrot.slane %v1204, 5
      %v1207 = vsel %vm847, %v1202, %v1206
      %v1209 = vshrl.u32 %v827, 16
      %v1211 = vrot.slane %v1209, 4
      %v1212 = vshll.u32 %v827, 16
      %v1214 = vrot.slane %v1212, 5
      %v1215 = vor.u32 %v1211, %v1214
      %v1216 = vrot.slane %v1215, 4
      %v1218 = vshll.u32 %v828, 16
      %v1220 = vrot.slane %v1218, 5
      %v1221 = vsel %vm847, %v1216, %v1220
      %v1222 = vshrl.u32 %v828, 16
      %v1224 = vrot.slane %v1222, 4
      %v1225 = vor.u32 %v1224, %v1220
      %v1226 = vrot.slane %v1225, 4
      %v1228 = vshll.u32 %v844, 16
      %v1230 = vrot.slane %v1228, 5
      %v1231 = vsel %vm847, %v1226, %v1230
      %v1232 = vld [vmem:[#allocation2] sm:$0xe]
      %v1233 = vld [vmem:[#allocation2 + $0xc] sm:$0xe]
      %v1234 = vld [vmem:[#allocation2 + $0x18] sm:$0xe]
      %v1235 = vld [vmem:[#allocation2 + $0x24] sm:$0xe]
      %v1236 = vld [vmem:[#allocation2 + $0x30] sm:$0xe]
      %v1237 = vld [vmem:[#allocation2 + $0x3c] sm:$0xe]
      %v1238 = vld [vmem:[#allocation2 + $0x48] sm:$0xe]
      %v1239 = vld [vmem:[#allocation2 + $0x54] sm:$0xe]
      %v1240 = vld [vmem:[#allocation2 + $0x60] sm:$0xe]
      %v1241 = vld [vmem:[#allocation2 + $0x6c] sm:$0xe]
      %v1242 = vld [vmem:[#allocation2 + $0x78] sm:$0xe]
      %v1243 = vld [vmem:[#allocation2 + $0x84] sm:$0xe]
      %v1244 = vld [vmem:[#allocation2 + $0x90] sm:$0xe]
      %v1245 = vld [vmem:[#allocation2 + $0x9c] sm:$0xe]
      %v1246 = vld [vmem:[#allocation2 + $0xa8] sm:$0xe]
      %v1247 = vld [vmem:[#allocation2 + $0xb4] sm:$0xe]
      %vm1296 = vcmask 1042432
      %vm1297 = vcmask 1046532
      %vm1298 = vmor %vm1296, %vm1297
      %v1299 = vrot.slane %v1232, 5
      %v1300 = vrot.slane %v1299, 4
      %v1301 = vrot.slane %v798, 5
      %v1302 = vsel %vm1298, %v1300, %v1301
      %v1303 = vrot.slane %v1301, 4
      %v1304 = vrot.slane %v829, 5
      %v1305 = vsel %vm1298, %v1303, %v1304
      %v1306 = vrot.slane %v1233, 5
      %v1307 = vrot.slane %v1306, 4
      %v1308 = vrot.slane %v800, 5
      %v1309 = vsel %vm1298, %v1307, %v1308
      %v1310 = vrot.slane %v1308, 4
      %v1311 = vrot.slane %v830, 5
      %v1312 = vsel %vm1298, %v1310, %v1311
      %v1313 = vrot.slane %v1234, 5
      %v1314 = vrot.slane %v1313, 4
      %v1315 = vrot.slane %v802, 5
      %v1316 = vsel %vm1298, %v1314, %v1315
      %v1317 = vrot.slane %v1315, 4
      %v1318 = vrot.slane %v831, 5
      %v1319 = vsel %vm1298, %v1317, %v1318
      %v1320 = vrot.slane %v1235, 5
      %v1321 = vrot.slane %v1320, 4
      %v1322 = vrot.slane %v804, 5
      %v1323 = vsel %vm1298, %v1321, %v1322
      %v1324 = vrot.slane %v1322, 4
      %v1325 = vrot.slane %v832, 5
      %v1326 = vsel %vm1298, %v1324, %v1325
      %v1327 = vrot.slane %v1236, 5
      %v1328 = vrot.slane %v1327, 4
      %v1329 = vrot.slane %v806, 5
      %v1330 = vsel %vm1298, %v1328, %v1329
      %v1331 = vrot.slane %v1329, 4
      %v1332 = vrot.slane %v833, 5
      %v1333 = vsel %vm1298, %v1331, %v1332
      %v1334 = vrot.slane %v1237, 5
      %v1335 = vrot.slane %v1334, 4
      %v1336 = vrot.slane %v808, 5
      %v1337 = vsel %vm1298, %v1335, %v1336
      %v1338 = vrot.slane %v1336, 4
      %v1339 = vrot.slane %v834, 5
      %v1340 = vsel %vm1298, %v1338, %v1339
      %v1341 = vrot.slane %v1238, 5
      %v1342 = vrot.slane %v1341, 4
      %v1343 = vrot.slane %v810, 5
      %v1344 = vsel %vm1298, %v1342, %v1343
      %v1345 = vrot.slane %v1343, 4
      %v1346 = vrot.slane %v835, 5
      %v1347 = vsel %vm1298, %v1345, %v1346
      %v1348 = vrot.slane %v1239, 5
      %v1349 = vrot.slane %v1348, 4
      %v1350 = vrot.slane %v812, 5
      %v1351 = vsel %vm1298, %v1349, %v1350
      %v1352 = vrot.slane %v1350, 4
      %v1353 = vrot.slane %v836, 5
      %v1354 = vsel %vm1298, %v1352, %v1353
      %v1355 = vrot.slane %v1240, 5
      %v1356 = vrot.slane %v1355, 4
      %v1357 = vrot.slane %v814, 5
      %v1358 = vsel %vm1298, %v1356, %v1357
      %v1359 = vrot.slane %v1357, 4
      %v1360 = vrot.slane %v837, 5
      %v1361 = vsel %vm1298, %v1359, %v1360
      %v1362 = vrot.slane %v1241, 5
      %v1363 = vrot.slane %v1362, 4
      %v1364 = vrot.slane %v816, 5
      %v1365 = vsel %vm1298, %v1363, %v1364
      %v1366 = vrot.slane %v1364, 4
      %v1367 = vrot.slane %v838, 5
      %v1368 = vsel %vm1298, %v1366, %v1367
      %v1369 = vrot.slane %v1242, 5
      %v1370 = vrot.slane %v1369, 4
      %v1371 = vrot.slane %v818, 5
      %v1372 = vsel %vm1298, %v1370, %v1371
      %v1373 = vrot.slane %v1371, 4
      %v1374 = vrot.slane %v839, 5
      %v1375 = vsel %vm1298, %v1373, %v1374
      %v1376 = vrot.slane %v1243, 5
      %v1377 = vrot.slane %v1376, 4
      %v1378 = vrot.slane %v820, 5
      %v1379 = vsel %vm1298, %v1377, %v1378
      %v1380 = vrot.slane %v1378, 4
      %v1381 = vrot.slane %v840, 5
      %v1382 = vsel %vm1298, %v1380, %v1381
      %v1383 = vrot.slane %v1244, 5
      %v1384 = vrot.slane %v1383, 4
      %v1385 = vrot.slane %v822, 5
      %v1386 = vsel %vm1298, %v1384, %v1385
      %v1387 = vrot.slane %v1385, 4
      %v1388 = vrot.slane %v841, 5
      %v1389 = vsel %vm1298, %v1387, %v1388
      %v1390 = vrot.slane %v1245, 5
      %v1391 = vrot.slane %v1390, 4
      %v1392 = vrot.slane %v824, 5
      %v1393 = vsel %vm1298, %v1391, %v1392
      %v1394 = vrot.slane %v1392, 4
      %v1395 = vrot.slane %v842, 5
      %v1396 = vsel %vm1298, %v1394, %v1395
      %v1397 = vrot.slane %v1246, 5
      %v1398 = vrot.slane %v1397, 4
      %v1399 = vrot.slane %v826, 5
      %v1400 = vsel %vm1298, %v1398, %v1399
      %v1401 = vrot.slane %v1399, 4
      %v1402 = vrot.slane %v843, 5
      %v1403 = vsel %vm1298, %v1401, %v1402
      %v1404 = vrot.slane %v1247, 5
      %v1405 = vrot.slane %v1404, 4
      %v1406 = vrot.slane %v828, 5
      %v1407 = vsel %vm1298, %v1405, %v1406
      %v1408 = vrot.slane %v1406, 4
      %v1409 = vrot.slane %v844, 5
      %v1410 = vsel %vm1298, %v1408, %v1409
      %v1411 = vld [vmem:[%s679] sm:$0xf]
      %v1412 = vld [vmem:[%s679 + $0x4] sm:$0xf]
      %v1413 = vld [vmem:[%s679 + $0xc] sm:$0xf]
      %v1414 = vld [vmem:[%s679 + $0x10] sm:$0xf]
      %v1415 = vld [vmem:[%s679 + $0x18] sm:$0xf]
      %v1416 = vld [vmem:[%s679 + $0x1c] sm:$0xf]
      %v1417 = vld [vmem:[%s679 + $0x24] sm:$0xf]
      %v1418 = vld [vmem:[%s679 + $0x28] sm:$0xf]
      %v1419 = vld [vmem:[%s679 + $0x30] sm:$0xf]
      %v1420 = vld [vmem:[%s679 + $0x34] sm:$0xf]
      %v1421 = vld [vmem:[%s679 + $0x3c] sm:$0xf]
      %v1422 = vld [vmem:[%s679 + $0x40] sm:$0xf]
      %v1423 = vld [vmem:[%s679 + $0x48] sm:$0xf]
      %v1424 = vld [vmem:[%s679 + $0x4c] sm:$0xf]
      %v1425 = vld [vmem:[%s679 + $0x54] sm:$0xf]
      %v1426 = vld [vmem:[%s679 + $0x58] sm:$0xf]
      %v1427 = vld [vmem:[%s679 + $0x60] sm:$0xf]
      %v1428 = vld [vmem:[%s679 + $0x64] sm:$0xf]
      %v1429 = vld [vmem:[%s679 + $0x6c] sm:$0xf]
      %v1430 = vld [vmem:[%s679 + $0x70] sm:$0xf]
      %v1431 = vld [vmem:[%s679 + $0x78] sm:$0xf]
      %v1432 = vld [vmem:[%s679 + $0x7c] sm:$0xf]
      %v1433 = vld [vmem:[%s679 + $0x84] sm:$0xf]
      %v1434 = vld [vmem:[%s679 + $0x88] sm:$0xf]
      %v1435 = vld [vmem:[%s679 + $0x90] sm:$0xf]
      %v1436 = vld [vmem:[%s679 + $0x94] sm:$0xf]
      %v1437 = vld [vmem:[%s679 + $0x9c] sm:$0xf]
      %v1438 = vld [vmem:[%s679 + $0xa0] sm:$0xf]
      %v1439 = vld [vmem:[%s679 + $0xa8] sm:$0xf]
      %v1440 = vld [vmem:[%s679 + $0xac] sm:$0xf]
      %v1441 = vld [vmem:[%s679 + $0xb4] sm:$0xf]
      %v1442 = vld [vmem:[%s679 + $0xb8] sm:$0xf]
      %v1443 = vld [vmem:[%s679 + $0x8] sm:$0x1]
      %v1444 = vld [vmem:[%s679 + $0x14] sm:$0x1]
      %v1445 = vld [vmem:[%s679 + $0x20] sm:$0x1]
      %v1446 = vld [vmem:[%s679 + $0x2c] sm:$0x1]
      %v1447 = vld [vmem:[%s679 + $0x38] sm:$0x1]
      %v1448 = vld [vmem:[%s679 + $0x44] sm:$0x1]
      %v1449 = vld [vmem:[%s679 + $0x50] sm:$0x1]
      %v1450 = vld [vmem:[%s679 + $0x5c] sm:$0x1]
      %v1451 = vld [vmem:[%s679 + $0x68] sm:$0x1]
      %v1452 = vld [vmem:[%s679 + $0x74] sm:$0x1]
      %v1453 = vld [vmem:[%s679 + $0x80] sm:$0x1]
      %v1454 = vld [vmem:[%s679 + $0x8c] sm:$0x1]
      %v1455 = vld [vmem:[%s679 + $0x98] sm:$0x1]
      %v1456 = vld [vmem:[%s679 + $0xa4] sm:$0x1]
      %v1457 = vld [vmem:[%s679 + $0xb0] sm:$0x1]
      %v1458 = vld [vmem:[%s679 + $0xbc] sm:$0x1]
      %v1460 = vshrl.u32 %v1411, 16
      %v1462 = vrot.slane %v1460, 4
      %v1463 = vshll.u32 %v1411, 16
      %v1465 = vrot.slane %v1463, 5
      %v1466 = vor.u32 %v1462, %v1465
      %v1467 = vrot.slane %v1466, 4
      %v1469 = vshll.u32 %v1412, 16
      %v1471 = vrot.slane %v1469, 5
      %v1472 = vsel %vm847, %v1467, %v1471
      %v1473 = vshrl.u32 %v1412, 16
      %v1475 = vrot.slane %v1473, 4
      %v1476 = vor.u32 %v1475, %v1471
      %v1477 = vrot.slane %v1476, 4
      %v1479 = vshll.u32 %v1443, 16
      %v1481 = vrot.slane %v1479, 5
      %v1482 = vsel %vm847, %v1477, %v1481
      %v1484 = vshrl.u32 %v1413, 16
      %v1486 = vrot.slane %v1484, 4
      %v1487 = vshll.u32 %v1413, 16
      %v1489 = vrot.slane %v1487, 5
      %v1490 = vor.u32 %v1486, %v1489
      %v1491 = vrot.slane %v1490, 4
      %v1493 = vshll.u32 %v1414, 16
      %v1495 = vrot.slane %v1493, 5
      %v1496 = vsel %vm847, %v1491, %v1495
      %v1497 = vshrl.u32 %v1414, 16
      %v1499 = vrot.slane %v1497, 4
      %v1500 = vor.u32 %v1499, %v1495
      %v1501 = vrot.slane %v1500, 4
      %v1503 = vshll.u32 %v1444, 16
      %v1505 = vrot.slane %v1503, 5
      %v1506 = vsel %vm847, %v1501, %v1505
      %v1508 = vshrl.u32 %v1415, 16
      %v1510 = vrot.slane %v1508, 4
      %v1511 = vshll.u32 %v1415, 16
      %v1513 = vrot.slane %v1511, 5
      %v1514 = vor.u32 %v1510, %v1513
      %v1515 = vrot.slane %v1514, 4
      %v1517 = vshll.u32 %v1416, 16
      %v1519 = vrot.slane %v1517, 5
      %v1520 = vsel %vm847, %v1515, %v1519
      %v1521 = vshrl.u32 %v1416, 16
      %v1523 = vrot.slane %v1521, 4
      %v1524 = vor.u32 %v1523, %v1519
      %v1525 = vrot.slane %v1524, 4
      %v1527 = vshll.u32 %v1445, 16
      %v1529 = vrot.slane %v1527, 5
      %v1530 = vsel %vm847, %v1525, %v1529
      %v1532 = vshrl.u32 %v1417, 16
      %v1534 = vrot.slane %v1532, 4
      %v1535 = vshll.u32 %v1417, 16
      %v1537 = vrot.slane %v1535, 5
      %v1538 = vor.u32 %v1534, %v1537
      %v1539 = vrot.slane %v1538, 4
      %v1541 = vshll.u32 %v1418, 16
      %v1543 = vrot.slane %v1541, 5
      %v1544 = vsel %vm847, %v1539, %v1543
      %v1545 = vshrl.u32 %v1418, 16
      %v1547 = vrot.slane %v1545, 4
      %v1548 = vor.u32 %v1547, %v1543
      %v1549 = vrot.slane %v1548, 4
      %v1551 = vshll.u32 %v1446, 16
      %v1553 = vrot.slane %v1551, 5
      %v1554 = vsel %vm847, %v1549, %v1553
      %v1556 = vshrl.u32 %v1419, 16
      %v1558 = vrot.slane %v1556, 4
      %v1559 = vshll.u32 %v1419, 16
      %v1561 = vrot.slane %v1559, 5
      %v1562 = vor.u32 %v1558, %v1561
      %v1563 = vrot.slane %v1562, 4
      %v1565 = vshll.u32 %v1420, 16
      %v1567 = vrot.slane %v1565, 5
      %v1568 = vsel %vm847, %v1563, %v1567
      %v1569 = vshrl.u32 %v1420, 16
      %v1571 = vrot.slane %v1569, 4
      %v1572 = vor.u32 %v1571, %v1567
      %v1573 = vrot.slane %v1572, 4
      %v1575 = vshll.u32 %v1447, 16
      %v1577 = vrot.slane %v1575, 5
      %v1578 = vsel %vm847, %v1573, %v1577
      %v1580 = vshrl.u32 %v1421, 16
      %v1582 = vrot.slane %v1580, 4
      %v1583 = vshll.u32 %v1421, 16
      %v1585 = vrot.slane %v1583, 5
      %v1586 = vor.u32 %v1582, %v1585
      %v1587 = vrot.slane %v1586, 4
      %v1589 = vshll.u32 %v1422, 16
      %v1591 = vrot.slane %v1589, 5
      %v1592 = vsel %vm847, %v1587, %v1591
      %v1593 = vshrl.u32 %v1422, 16
      %v1595 = vrot.slane %v1593, 4
      %v1596 = vor.u32 %v1595, %v1591
      %v1597 = vrot.slane %v1596, 4
      %v1599 = vshll.u32 %v1448, 16
      %v1601 = vrot.slane %v1599, 5
      %v1602 = vsel %vm847, %v1597, %v1601
      %v1604 = vshrl.u32 %v1423, 16
      %v1606 = vrot.slane %v1604, 4
      %v1607 = vshll.u32 %v1423, 16
      %v1609 = vrot.slane %v1607, 5
      %v1610 = vor.u32 %v1606, %v1609
      %v1611 = vrot.slane %v1610, 4
      %v1613 = vshll.u32 %v1424, 16
      %v1615 = vrot.slane %v1613, 5
      %v1616 = vsel %vm847, %v1611, %v1615
      %v1617 = vshrl.u32 %v1424, 16
      %v1619 = vrot.slane %v1617, 4
      %v1620 = vor.u32 %v1619, %v1615
      %v1621 = vrot.slane %v1620, 4
      %v1623 = vshll.u32 %v1449, 16
      %v1625 = vrot.slane %v1623, 5
      %v1626 = vsel %vm847, %v1621, %v1625
      %v1628 = vshrl.u32 %v1425, 16
      %v1630 = vrot.slane %v1628, 4
      %v1631 = vshll.u32 %v1425, 16
      %v1633 = vrot.slane %v1631, 5
      %v1634 = vor.u32 %v1630, %v1633
      %v1635 = vrot.slane %v1634, 4
      %v1637 = vshll.u32 %v1426, 16
      %v1639 = vrot.slane %v1637, 5
      %v1640 = vsel %vm847, %v1635, %v1639
      %v1641 = vshrl.u32 %v1426, 16
      %v1643 = vrot.slane %v1641, 4
      %v1644 = vor.u32 %v1643, %v1639
      %v1645 = vrot.slane %v1644, 4
      %v1647 = vshll.u32 %v1450, 16
      %v1649 = vrot.slane %v1647, 5
      %v1650 = vsel %vm847, %v1645, %v1649
      %v1652 = vshrl.u32 %v1427, 16
      %v1654 = vrot.slane %v1652, 4
      %v1655 = vshll.u32 %v1427, 16
      %v1657 = vrot.slane %v1655, 5
      %v1658 = vor.u32 %v1654, %v1657
      %v1659 = vrot.slane %v1658, 4
      %v1661 = vshll.u32 %v1428, 16
      %v1663 = vrot.slane %v1661, 5
      %v1664 = vsel %vm847, %v1659, %v1663
      %v1665 = vshrl.u32 %v1428, 16
      %v1667 = vrot.slane %v1665, 4
      %v1668 = vor.u32 %v1667, %v1663
      %v1669 = vrot.slane %v1668, 4
      %v1671 = vshll.u32 %v1451, 16
      %v1673 = vrot.slane %v1671, 5
      %v1674 = vsel %vm847, %v1669, %v1673
      %v1676 = vshrl.u32 %v1429, 16
      %v1678 = vrot.slane %v1676, 4
      %v1679 = vshll.u32 %v1429, 16
      %v1681 = vrot.slane %v1679, 5
      %v1682 = vor.u32 %v1678, %v1681
      %v1683 = vrot.slane %v1682, 4
      %v1685 = vshll.u32 %v1430, 16
      %v1687 = vrot.slane %v1685, 5
      %v1688 = vsel %vm847, %v1683, %v1687
      %v1689 = vshrl.u32 %v1430, 16
      %v1691 = vrot.slane %v1689, 4
      %v1692 = vor.u32 %v1691, %v1687
      %v1693 = vrot.slane %v1692, 4
      %v1695 = vshll.u32 %v1452, 16
      %v1697 = vrot.slane %v1695, 5
      %v1698 = vsel %vm847, %v1693, %v1697
      %v1700 = vshrl.u32 %v1431, 16
      %v1702 = vrot.slane %v1700, 4
      %v1703 = vshll.u32 %v1431, 16
      %v1705 = vrot.slane %v1703, 5
      %v1706 = vor.u32 %v1702, %v1705
      %v1707 = vrot.slane %v1706, 4
      %v1709 = vshll.u32 %v1432, 16
      %v1711 = vrot.slane %v1709, 5
      %v1712 = vsel %vm847, %v1707, %v1711
      %v1713 = vshrl.u32 %v1432, 16
      %v1715 = vrot.slane %v1713, 4
      %v1716 = vor.u32 %v1715, %v1711
      %v1717 = vrot.slane %v1716, 4
      %v1719 = vshll.u32 %v1453, 16
      %v1721 = vrot.slane %v1719, 5
      %v1722 = vsel %vm847, %v1717, %v1721
      %v1724 = vshrl.u32 %v1433, 16
      %v1726 = vrot.slane %v1724, 4
      %v1727 = vshll.u32 %v1433, 16
      %v1729 = vrot.slane %v1727, 5
      %v1730 = vor.u32 %v1726, %v1729
      %v1731 = vrot.slane %v1730, 4
      %v1733 = vshll.u32 %v1434, 16
      %v1735 = vrot.slane %v1733, 5
      %v1736 = vsel %vm847, %v1731, %v1735
      %v1737 = vshrl.u32 %v1434, 16
      %v1739 = vrot.slane %v1737, 4
      %v1740 = vor.u32 %v1739, %v1735
      %v1741 = vrot.slane %v1740, 4
      %v1743 = vshll.u32 %v1454, 16
      %v1745 = vrot.slane %v1743, 5
      %v1746 = vsel %vm847, %v1741, %v1745
      %v1748 = vshrl.u32 %v1435, 16
      %v1750 = vrot.slane %v1748, 4
      %v1751 = vshll.u32 %v1435, 16
      %v1753 = vrot.slane %v1751, 5
      %v1754 = vor.u32 %v1750, %v1753
      %v1755 = vrot.slane %v1754, 4
      %v1757 = vshll.u32 %v1436, 16
      %v1759 = vrot.slane %v1757, 5
      %v1760 = vsel %vm847, %v1755, %v1759
      %v1761 = vshrl.u32 %v1436, 16
      %v1763 = vrot.slane %v1761, 4
      %v1764 = vor.u32 %v1763, %v1759
      %v1765 = vrot.slane %v1764, 4
      %v1767 = vshll.u32 %v1455, 16
      %v1769 = vrot.slane %v1767, 5
      %v1770 = vsel %vm847, %v1765, %v1769
      %v1772 = vshrl.u32 %v1437, 16
      %v1774 = vrot.slane %v1772, 4
      %v1775 = vshll.u32 %v1437, 16
      %v1777 = vrot.slane %v1775, 5
      %v1778 = vor.u32 %v1774, %v1777
      %v1779 = vrot.slane %v1778, 4
      %v1781 = vshll.u32 %v1438, 16
      %v1783 = vrot.slane %v1781, 5
      %v1784 = vsel %vm847, %v1779, %v1783
      %v1785 = vshrl.u32 %v1438, 16
      %v1787 = vrot.slane %v1785, 4
      %v1788 = vor.u32 %v1787, %v1783
      %v1789 = vrot.slane %v1788, 4
      %v1791 = vshll.u32 %v1456, 16
      %v1793 = vrot.slane %v1791, 5
      %v1794 = vsel %vm847, %v1789, %v1793
      %v1796 = vshrl.u32 %v1439, 16
      %v1798 = vrot.slane %v1796, 4
      %v1799 = vshll.u32 %v1439, 16
      %v1801 = vrot.slane %v1799, 5
      %v1802 = vor.u32 %v1798, %v1801
      %v1803 = vrot.slane %v1802, 4
      %v1805 = vshll.u32 %v1440, 16
      %v1807 = vrot.slane %v1805, 5
      %v1808 = vsel %vm847, %v1803, %v1807
      %v1809 = vshrl.u32 %v1440, 16
      %v1811 = vrot.slane %v1809, 4
      %v1812 = vor.u32 %v1811, %v1807
      %v1813 = vrot.slane %v1812, 4
      %v1815 = vshll.u32 %v1457, 16
      %v1817 = vrot.slane %v1815, 5
      %v1818 = vsel %vm847, %v1813, %v1817
      %v1820 = vshrl.u32 %v1441, 16
      %v1822 = vrot.slane %v1820, 4
      %v1823 = vshll.u32 %v1441, 16
      %v1825 = vrot.slane %v1823, 5
      %v1826 = vor.u32 %v1822, %v1825
      %v1827 = vrot.slane %v1826, 4
      %v1829 = vshll.u32 %v1442, 16
      %v1831 = vrot.slane %v1829, 5
      %v1832 = vsel %vm847, %v1827, %v1831
      %v1833 = vshrl.u32 %v1442, 16
      %v1835 = vrot.slane %v1833, 4
      %v1836 = vor.u32 %v1835, %v1831
      %v1837 = vrot.slane %v1836, 4
      %v1839 = vshll.u32 %v1458, 16
      %v1841 = vrot.slane %v1839, 5
      %v1842 = vsel %vm847, %v1837, %v1841
      %v1843 = vld [vmem:[%s679] sm:$0xe]
      %v1844 = vld [vmem:[%s679 + $0xc] sm:$0xe]
      %v1845 = vld [vmem:[%s679 + $0x18] sm:$0xe]
      %v1846 = vld [vmem:[%s679 + $0x24] sm:$0xe]
      %v1847 = vld [vmem:[%s679 + $0x30] sm:$0xe]
      %v1848 = vld [vmem:[%s679 + $0x3c] sm:$0xe]
      %v1849 = vld [vmem:[%s679 + $0x48] sm:$0xe]
      %v1850 = vld [vmem:[%s679 + $0x54] sm:$0xe]
      %v1851 = vld [vmem:[%s679 + $0x60] sm:$0xe]
      %v1852 = vld [vmem:[%s679 + $0x6c] sm:$0xe]
      %v1853 = vld [vmem:[%s679 + $0x78] sm:$0xe]
      %v1854 = vld [vmem:[%s679 + $0x84] sm:$0xe]
      %v1855 = vld [vmem:[%s679 + $0x90] sm:$0xe]
      %v1856 = vld [vmem:[%s679 + $0x9c] sm:$0xe]
      %v1857 = vld [vmem:[%s679 + $0xa8] sm:$0xe]
      %v1858 = vld [vmem:[%s679 + $0xb4] sm:$0xe]
      %v1907 = vrot.slane %v1843, 5
      %v1908 = vrot.slane %v1907, 4
      %v1909 = vrot.slane %v1412, 5
      %v1910 = vsel %vm1298, %v1908, %v1909
      %v1911 = vrot.slane %v1909, 4
      %v1912 = vrot.slane %v1443, 5
      %v1913 = vsel %vm1298, %v1911, %v1912
      %v1914 = vrot.slane %v1844, 5
      %v1915 = vrot.slane %v1914, 4
      %v1916 = vrot.slane %v1414, 5
      %v1917 = vsel %vm1298, %v1915, %v1916
      %v1918 = vrot.slane %v1916, 4
      %v1919 = vrot.slane %v1444, 5
      %v1920 = vsel %vm1298, %v1918, %v1919
      %v1921 = vrot.slane %v1845, 5
      %v1922 = vrot.slane %v1921, 4
      %v1923 = vrot.slane %v1416, 5
      %v1924 = vsel %vm1298, %v1922, %v1923
      %v1925 = vrot.slane %v1923, 4
      %v1926 = vrot.slane %v1445, 5
      %v1927 = vsel %vm1298, %v1925, %v1926
      %v1928 = vrot.slane %v1846, 5
      %v1929 = vrot.slane %v1928, 4
      %v1930 = vrot.slane %v1418, 5
      %v1931 = vsel %vm1298, %v1929, %v1930
      %v1932 = vrot.slane %v1930, 4
      %v1933 = vrot.slane %v1446, 5
      %v1934 = vsel %vm1298, %v1932, %v1933
      %v1935 = vrot.slane %v1847, 5
      %v1936 = vrot.slane %v1935, 4
      %v1937 = vrot.slane %v1420, 5
      %v1938 = vsel %vm1298, %v1936, %v1937
      %v1939 = vrot.slane %v1937, 4
      %v1940 = vrot.slane %v1447, 5
      %v1941 = vsel %vm1298, %v1939, %v1940
      %v1942 = vrot.slane %v1848, 5
      %v1943 = vrot.slane %v1942, 4
      %v1944 = vrot.slane %v1422, 5
      %v1945 = vsel %vm1298, %v1943, %v1944
      %v1946 = vrot.slane %v1944, 4
      %v1947 = vrot.slane %v1448, 5
      %v1948 = vsel %vm1298, %v1946, %v1947
      %v1949 = vrot.slane %v1849, 5
      %v1950 = vrot.slane %v1949, 4
      %v1951 = vrot.slane %v1424, 5
      %v1952 = vsel %vm1298, %v1950, %v1951
      %v1953 = vrot.slane %v1951, 4
      %v1954 = vrot.slane %v1449, 5
      %v1955 = vsel %vm1298, %v1953, %v1954
      %v1956 = vrot.slane %v1850, 5
      %v1957 = vrot.slane %v1956, 4
      %v1958 = vrot.slane %v1426, 5
      %v1959 = vsel %vm1298, %v1957, %v1958
      %v1960 = vrot.slane %v1958, 4
      %v1961 = vrot.slane %v1450, 5
      %v1962 = vsel %vm1298, %v1960, %v1961
      %v1963 = vrot.slane %v1851, 5
      %v1964 = vrot.slane %v1963, 4
      %v1965 = vrot.slane %v1428, 5
      %v1966 = vsel %vm1298, %v1964, %v1965
      %v1967 = vrot.slane %v1965, 4
      %v1968 = vrot.slane %v1451, 5
      %v1969 = vsel %vm1298, %v1967, %v1968
      %v1970 = vrot.slane %v1852, 5
      %v1971 = vrot.slane %v1970, 4
      %v1972 = vrot.slane %v1430, 5
      %v1973 = vsel %vm1298, %v1971, %v1972
      %v1974 = vrot.slane %v1972, 4
      %v1975 = vrot.slane %v1452, 5
      %v1976 = vsel %vm1298, %v1974, %v1975
      %v1977 = vrot.slane %v1853, 5
      %v1978 = vrot.slane %v1977, 4
      %v1979 = vrot.slane %v1432, 5
      %v1980 = vsel %vm1298, %v1978, %v1979
      %v1981 = vrot.slane %v1979, 4
      %v1982 = vrot.slane %v1453, 5
      %v1983 = vsel %vm1298, %v1981, %v1982
      %v1984 = vrot.slane %v1854, 5
      %v1985 = vrot.slane %v1984, 4
      %v1986 = vrot.slane %v1434, 5
      %v1987 = vsel %vm1298, %v1985, %v1986
      %v1988 = vrot.slane %v1986, 4
      %v1989 = vrot.slane %v1454, 5
      %v1990 = vsel %vm1298, %v1988, %v1989
      %v1991 = vrot.slane %v1855, 5
      %v1992 = vrot.slane %v1991, 4
      %v1993 = vrot.slane %v1436, 5
      %v1994 = vsel %vm1298, %v1992, %v1993
      %v1995 = vrot.slane %v1993, 4
      %v1996 = vrot.slane %v1455, 5
      %v1997 = vsel %vm1298, %v1995, %v1996
      %v1998 = vrot.slane %v1856, 5
      %v1999 = vrot.slane %v1998, 4
      %v2000 = vrot.slane %v1438, 5
      %v2001 = vsel %vm1298, %v1999, %v2000
      %v2002 = vrot.slane %v2000, 4
      %v2003 = vrot.slane %v1456, 5
      %v2004 = vsel %vm1298, %v2002, %v2003
      %v2005 = vrot.slane %v1857, 5
      %v2006 = vrot.slane %v2005, 4
      %v2007 = vrot.slane %v1440, 5
      %v2008 = vsel %vm1298, %v2006, %v2007
      %v2009 = vrot.slane %v2007, 4
      %v2010 = vrot.slane %v1457, 5
      %v2011 = vsel %vm1298, %v2009, %v2010
      %v2012 = vrot.slane %v1858, 5
      %v2013 = vrot.slane %v2012, 4
      %v2014 = vrot.slane %v1442, 5
      %v2015 = vsel %vm1298, %v2013, %v2014
      %v2016 = vrot.slane %v2014, 4
      %v2017 = vrot.slane %v1458, 5
      %v2018 = vsel %vm1298, %v2016, %v2017
      %s2019 = scalar_lea.vmem [#allocation2], 24
      %v2020 = vld [vmem:[%s2019] sm:$0xf]
      %v2021 = vld [vmem:[%s2019 + $0x4] sm:$0xf]
      %v2022 = vld [vmem:[%s2019 + $0xc] sm:$0xf]
      %v2023 = vld [vmem:[%s2019 + $0x10] sm:$0xf]
      %v2024 = vld [vmem:[%s2019 + $0x18] sm:$0xf]
      %v2025 = vld [vmem:[%s2019 + $0x1c] sm:$0xf]
      %v2026 = vld [vmem:[%s2019 + $0x24] sm:$0xf]
      %v2027 = vld [vmem:[%s2019 + $0x28] sm:$0xf]
      %v2028 = vld [vmem:[%s2019 + $0x30] sm:$0xf]
      %v2029 = vld [vmem:[%s2019 + $0x34] sm:$0xf]
      %v2030 = vld [vmem:[%s2019 + $0x3c] sm:$0xf]
      %v2031 = vld [vmem:[%s2019 + $0x40] sm:$0xf]
      %v2032 = vld [vmem:[%s2019 + $0x48] sm:$0xf]
      %v2033 = vld [vmem:[%s2019 + $0x4c] sm:$0xf]
      %v2034 = vld [vmem:[%s2019 + $0x54] sm:$0xf]
      %v2035 = vld [vmem:[%s2019 + $0x58] sm:$0xf]
      %v2036 = vld [vmem:[%s2019 + $0x60] sm:$0xf]
      %v2037 = vld [vmem:[%s2019 + $0x64] sm:$0xf]
      %v2038 = vld [vmem:[%s2019 + $0x6c] sm:$0xf]
      %v2039 = vld [vmem:[%s2019 + $0x70] sm:$0xf]
      %v2040 = vld [vmem:[%s2019 + $0x78] sm:$0xf]
      %v2041 = vld [vmem:[%s2019 + $0x7c] sm:$0xf]
      %v2042 = vld [vmem:[%s2019 + $0x84] sm:$0xf]
      %v2043 = vld [vmem:[%s2019 + $0x88] sm:$0xf]
      %v2044 = vld [vmem:[%s2019 + $0x90] sm:$0xf]
      %v2045 = vld [vmem:[%s2019 + $0x94] sm:$0xf]
      %v2046 = vld [vmem:[%s2019 + $0x9c] sm:$0xf]
      %v2047 = vld [vmem:[%s2019 + $0xa0] sm:$0xf]
      %v2048 = vld [vmem:[%s2019 + $0xa8] sm:$0xf]
      %v2049 = vld [vmem:[%s2019 + $0xac] sm:$0xf]
      %v2050 = vld [vmem:[%s2019 + $0xb4] sm:$0xf]
      %v2051 = vld [vmem:[%s2019 + $0xb8] sm:$0xf]
      %v2052 = vld [vmem:[%s2019 + $0x8] sm:$0x1]
      %v2053 = vld [vmem:[%s2019 + $0x14] sm:$0x1]
      %v2054 = vld [vmem:[%s2019 + $0x20] sm:$0x1]
      %v2055 = vld [vmem:[%s2019 + $0x2c] sm:$0x1]
      %v2056 = vld [vmem:[%s2019 + $0x38] sm:$0x1]
      %v2057 = vld [vmem:[%s2019 + $0x44] sm:$0x1]
      %v2058 = vld [vmem:[%s2019 + $0x50] sm:$0x1]
      %v2059 = vld [vmem:[%s2019 + $0x5c] sm:$0x1]
      %v2060 = vld [vmem:[%s2019 + $0x68] sm:$0x1]
      %v2061 = vld [vmem:[%s2019 + $0x74] sm:$0x1]
      %v2062 = vld [vmem:[%s2019 + $0x80] sm:$0x1]
      %v2063 = vld [vmem:[%s2019 + $0x8c] sm:$0x1]
      %v2064 = vld [vmem:[%s2019 + $0x98] sm:$0x1]
      %v2065 = vld [vmem:[%s2019 + $0xa4] sm:$0x1]
      %v2066 = vld [vmem:[%s2019 + $0xb0] sm:$0x1]
      %v2067 = vld [vmem:[%s2019 + $0xbc] sm:$0x1]
      %v2069 = vshrl.u32 %v2020, 16
      %v2071 = vrot.slane %v2069, 4
      %v2072 = vshll.u32 %v2020, 16
      %v2074 = vrot.slane %v2072, 5
      %v2075 = vor.u32 %v2071, %v2074
      %v2076 = vrot.slane %v2075, 4
      %v2078 = vshll.u32 %v2021, 16
      %v2080 = vrot.slane %v2078, 5
      %v2081 = vsel %vm847, %v2076, %v2080
      %v2082 = vshrl.u32 %v2021, 16
      %v2084 = vrot.slane %v2082, 4
      %v2085 = vor.u32 %v2084, %v2080
      %v2086 = vrot.slane %v2085, 4
      %v2088 = vshll.u32 %v2052, 16
      %v2090 = vrot.slane %v2088, 5
      %v2091 = vsel %vm847, %v2086, %v2090
      %v2093 = vshrl.u32 %v2022, 16
      %v2095 = vrot.slane %v2093, 4
      %v2096 = vshll.u32 %v2022, 16
      %v2098 = vrot.slane %v2096, 5
      %v2099 = vor.u32 %v2095, %v2098
      %v2100 = vrot.slane %v2099, 4
      %v2102 = vshll.u32 %v2023, 16
      %v2104 = vrot.slane %v2102, 5
      %v2105 = vsel %vm847, %v2100, %v2104
      %v2106 = vshrl.u32 %v2023, 16
      %v2108 = vrot.slane %v2106, 4
      %v2109 = vor.u32 %v2108, %v2104
      %v2110 = vrot.slane %v2109, 4
      %v2112 = vshll.u32 %v2053, 16
      %v2114 = vrot.slane %v2112, 5
      %v2115 = vsel %vm847, %v2110, %v2114
      %v2117 = vshrl.u32 %v2024, 16
      %v2119 = vrot.slane %v2117, 4
      %v2120 = vshll.u32 %v2024, 16
      %v2122 = vrot.slane %v2120, 5
      %v2123 = vor.u32 %v2119, %v2122
      %v2124 = vrot.slane %v2123, 4
      %v2126 = vshll.u32 %v2025, 16
      %v2128 = vrot.slane %v2126, 5
      %v2129 = vsel %vm847, %v2124, %v2128
      %v2130 = vshrl.u32 %v2025, 16
      %v2132 = vrot.slane %v2130, 4
      %v2133 = vor.u32 %v2132, %v2128
      %v2134 = vrot.slane %v2133, 4
      %v2136 = vshll.u32 %v2054, 16
      %v2138 = vrot.slane %v2136, 5
      %v2139 = vsel %vm847, %v2134, %v2138
      %v2141 = vshrl.u32 %v2026, 16
      %v2143 = vrot.slane %v2141, 4
      %v2144 = vshll.u32 %v2026, 16
      %v2146 = vrot.slane %v2144, 5
      %v2147 = vor.u32 %v2143, %v2146
      %v2148 = vrot.slane %v2147, 4
      %v2150 = vshll.u32 %v2027, 16
      %v2152 = vrot.slane %v2150, 5
      %v2153 = vsel %vm847, %v2148, %v2152
      %v2154 = vshrl.u32 %v2027, 16
      %v2156 = vrot.slane %v2154, 4
      %v2157 = vor.u32 %v2156, %v2152
      %v2158 = vrot.slane %v2157, 4
      %v2160 = vshll.u32 %v2055, 16
      %v2162 = vrot.slane %v2160, 5
      %v2163 = vsel %vm847, %v2158, %v2162
      %v2165 = vshrl.u32 %v2028, 16
      %v2167 = vrot.slane %v2165, 4
      %v2168 = vshll.u32 %v2028, 16
      %v2170 = vrot.slane %v2168, 5
      %v2171 = vor.u32 %v2167, %v2170
      %v2172 = vrot.slane %v2171, 4
      %v2174 = vshll.u32 %v2029, 16
      %v2176 = vrot.slane %v2174, 5
      %v2177 = vsel %vm847, %v2172, %v2176
      %v2178 = vshrl.u32 %v2029, 16
      %v2180 = vrot.slane %v2178, 4
      %v2181 = vor.u32 %v2180, %v2176
      %v2182 = vrot.slane %v2181, 4
      %v2184 = vshll.u32 %v2056, 16
      %v2186 = vrot.slane %v2184, 5
      %v2187 = vsel %vm847, %v2182, %v2186
      %v2189 = vshrl.u32 %v2030, 16
      %v2191 = vrot.slane %v2189, 4
      %v2192 = vshll.u32 %v2030, 16
      %v2194 = vrot.slane %v2192, 5
      %v2195 = vor.u32 %v2191, %v2194
      %v2196 = vrot.slane %v2195, 4
      %v2198 = vshll.u32 %v2031, 16
      %v2200 = vrot.slane %v2198, 5
      %v2201 = vsel %vm847, %v2196, %v2200
      %v2202 = vshrl.u32 %v2031, 16
      %v2204 = vrot.slane %v2202, 4
      %v2205 = vor.u32 %v2204, %v2200
      %v2206 = vrot.slane %v2205, 4
      %v2208 = vshll.u32 %v2057, 16
      %v2210 = vrot.slane %v2208, 5
      %v2211 = vsel %vm847, %v2206, %v2210
      %v2213 = vshrl.u32 %v2032, 16
      %v2215 = vrot.slane %v2213, 4
      %v2216 = vshll.u32 %v2032, 16
      %v2218 = vrot.slane %v2216, 5
      %v2219 = vor.u32 %v2215, %v2218
      %v2220 = vrot.slane %v2219, 4
      %v2222 = vshll.u32 %v2033, 16
      %v2224 = vrot.slane %v2222, 5
      %v2225 = vsel %vm847, %v2220, %v2224
      %v2226 = vshrl.u32 %v2033, 16
      %v2228 = vrot.slane %v2226, 4
      %v2229 = vor.u32 %v2228, %v2224
      %v2230 = vrot.slane %v2229, 4
      %v2232 = vshll.u32 %v2058, 16
      %v2234 = vrot.slane %v2232, 5
      %v2235 = vsel %vm847, %v2230, %v2234
      %v2237 = vshrl.u32 %v2034, 16
      %v2239 = vrot.slane %v2237, 4
      %v2240 = vshll.u32 %v2034, 16
      %v2242 = vrot.slane %v2240, 5
      %v2243 = vor.u32 %v2239, %v2242
      %v2244 = vrot.slane %v2243, 4
      %v2246 = vshll.u32 %v2035, 16
      %v2248 = vrot.slane %v2246, 5
      %v2249 = vsel %vm847, %v2244, %v2248
      %v2250 = vshrl.u32 %v2035, 16
      %v2252 = vrot.slane %v2250, 4
      %v2253 = vor.u32 %v2252, %v2248
      %v2254 = vrot.slane %v2253, 4
      %v2256 = vshll.u32 %v2059, 16
      %v2258 = vrot.slane %v2256, 5
      %v2259 = vsel %vm847, %v2254, %v2258
      %v2261 = vshrl.u32 %v2036, 16
      %v2263 = vrot.slane %v2261, 4
      %v2264 = vshll.u32 %v2036, 16
      %v2266 = vrot.slane %v2264, 5
      %v2267 = vor.u32 %v2263, %v2266
      %v2268 = vrot.slane %v2267, 4
      %v2270 = vshll.u32 %v2037, 16
      %v2272 = vrot.slane %v2270, 5
      %v2273 = vsel %vm847, %v2268, %v2272
      %v2274 = vshrl.u32 %v2037, 16
      %v2276 = vrot.slane %v2274, 4
      %v2277 = vor.u32 %v2276, %v2272
      %v2278 = vrot.slane %v2277, 4
      %v2280 = vshll.u32 %v2060, 16
      %v2282 = vrot.slane %v2280, 5
      %v2283 = vsel %vm847, %v2278, %v2282
      %v2285 = vshrl.u32 %v2038, 16
      %v2287 = vrot.slane %v2285, 4
      %v2288 = vshll.u32 %v2038, 16
      %v2290 = vrot.slane %v2288, 5
      %v2291 = vor.u32 %v2287, %v2290
      %v2292 = vrot.slane %v2291, 4
      %v2294 = vshll.u32 %v2039, 16
      %v2296 = vrot.slane %v2294, 5
      %v2297 = vsel %vm847, %v2292, %v2296
      %v2298 = vshrl.u32 %v2039, 16
      %v2300 = vrot.slane %v2298, 4
      %v2301 = vor.u32 %v2300, %v2296
      %v2302 = vrot.slane %v2301, 4
      %v2304 = vshll.u32 %v2061, 16
      %v2306 = vrot.slane %v2304, 5
      %v2307 = vsel %vm847, %v2302, %v2306
      %v2309 = vshrl.u32 %v2040, 16
      %v2311 = vrot.slane %v2309, 4
      %v2312 = vshll.u32 %v2040, 16
      %v2314 = vrot.slane %v2312, 5
      %v2315 = vor.u32 %v2311, %v2314
      %v2316 = vrot.slane %v2315, 4
      %v2318 = vshll.u32 %v2041, 16
      %v2320 = vrot.slane %v2318, 5
      %v2321 = vsel %vm847, %v2316, %v2320
      %v2322 = vshrl.u32 %v2041, 16
      %v2324 = vrot.slane %v2322, 4
      %v2325 = vor.u32 %v2324, %v2320
      %v2326 = vrot.slane %v2325, 4
      %v2328 = vshll.u32 %v2062, 16
      %v2330 = vrot.slane %v2328, 5
      %v2331 = vsel %vm847, %v2326, %v2330
      %v2333 = vshrl.u32 %v2042, 16
      %v2335 = vrot.slane %v2333, 4
      %v2336 = vshll.u32 %v2042, 16
      %v2338 = vrot.slane %v2336, 5
      %v2339 = vor.u32 %v2335, %v2338
      %v2340 = vrot.slane %v2339, 4
      %v2342 = vshll.u32 %v2043, 16
      %v2344 = vrot.slane %v2342, 5
      %v2345 = vsel %vm847, %v2340, %v2344
      %v2346 = vshrl.u32 %v2043, 16
      %v2348 = vrot.slane %v2346, 4
      %v2349 = vor.u32 %v2348, %v2344
      %v2350 = vrot.slane %v2349, 4
      %v2352 = vshll.u32 %v2063, 16
      %v2354 = vrot.slane %v2352, 5
      %v2355 = vsel %vm847, %v2350, %v2354
      %v2357 = vshrl.u32 %v2044, 16
      %v2359 = vrot.slane %v2357, 4
      %v2360 = vshll.u32 %v2044, 16
      %v2362 = vrot.slane %v2360, 5
      %v2363 = vor.u32 %v2359, %v2362
      %v2364 = vrot.slane %v2363, 4
      %v2366 = vshll.u32 %v2045, 16
      %v2368 = vrot.slane %v2366, 5
      %v2369 = vsel %vm847, %v2364, %v2368
      %v2370 = vshrl.u32 %v2045, 16
      %v2372 = vrot.slane %v2370, 4
      %v2373 = vor.u32 %v2372, %v2368
      %v2374 = vrot.slane %v2373, 4
      %v2376 = vshll.u32 %v2064, 16
      %v2378 = vrot.slane %v2376, 5
      %v2379 = vsel %vm847, %v2374, %v2378
      %v2381 = vshrl.u32 %v2046, 16
      %v2383 = vrot.slane %v2381, 4
      %v2384 = vshll.u32 %v2046, 16
      %v2386 = vrot.slane %v2384, 5
      %v2387 = vor.u32 %v2383, %v2386
      %v2388 = vrot.slane %v2387, 4
      %v2390 = vshll.u32 %v2047, 16
      %v2392 = vrot.slane %v2390, 5
      %v2393 = vsel %vm847, %v2388, %v2392
      %v2394 = vshrl.u32 %v2047, 16
      %v2396 = vrot.slane %v2394, 4
      %v2397 = vor.u32 %v2396, %v2392
      %v2398 = vrot.slane %v2397, 4
      %v2400 = vshll.u32 %v2065, 16
      %v2402 = vrot.slane %v2400, 5
      %v2403 = vsel %vm847, %v2398, %v2402
      %v2405 = vshrl.u32 %v2048, 16
      %v2407 = vrot.slane %v2405, 4
      %v2408 = vshll.u32 %v2048, 16
      %v2410 = vrot.slane %v2408, 5
      %v2411 = vor.u32 %v2407, %v2410
      %v2412 = vrot.slane %v2411, 4
      %v2414 = vshll.u32 %v2049, 16
      %v2416 = vrot.slane %v2414, 5
      %v2417 = vsel %vm847, %v2412, %v2416
      %v2418 = vshrl.u32 %v2049, 16
      %v2420 = vrot.slane %v2418, 4
      %v2421 = vor.u32 %v2420, %v2416
      %v2422 = vrot.slane %v2421, 4
      %v2424 = vshll.u32 %v2066, 16
      %v2426 = vrot.slane %v2424, 5
      %v2427 = vsel %vm847, %v2422, %v2426
      %v2429 = vshrl.u32 %v2050, 16
      %v2431 = vrot.slane %v2429, 4
      %v2432 = vshll.u32 %v2050, 16
      %v2434 = vrot.slane %v2432, 5
      %v2435 = vor.u32 %v2431, %v2434
      %v2436 = vrot.slane %v2435, 4
      %v2438 = vshll.u32 %v2051, 16
      %v2440 = vrot.slane %v2438, 5
      %v2441 = vsel %vm847, %v2436, %v2440
      %v2442 = vshrl.u32 %v2051, 16
      %v2444 = vrot.slane %v2442, 4
      %v2445 = vor.u32 %v2444, %v2440
      %v2446 = vrot.slane %v2445, 4
      %v2448 = vshll.u32 %v2067, 16
      %v2450 = vrot.slane %v2448, 5
      %v2451 = vsel %vm847, %v2446, %v2450
      %v2452 = vld [vmem:[%s2019] sm:$0xe]
      %v2453 = vld [vmem:[%s2019 + $0xc] sm:$0xe]
      %v2454 = vld [vmem:[%s2019 + $0x18] sm:$0xe]
      %v2455 = vld [vmem:[%s2019 + $0x24] sm:$0xe]
      %v2456 = vld [vmem:[%s2019 + $0x30] sm:$0xe]
      %v2457 = vld [vmem:[%s2019 + $0x3c] sm:$0xe]
      %v2458 = vld [vmem:[%s2019 + $0x48] sm:$0xe]
      %v2459 = vld [vmem:[%s2019 + $0x54] sm:$0xe]
      %v2460 = vld [vmem:[%s2019 + $0x60] sm:$0xe]
      %v2461 = vld [vmem:[%s2019 + $0x6c] sm:$0xe]
      %v2462 = vld [vmem:[%s2019 + $0x78] sm:$0xe]
      %v2463 = vld [vmem:[%s2019 + $0x84] sm:$0xe]
      %v2464 = vld [vmem:[%s2019 + $0x90] sm:$0xe]
      %v2465 = vld [vmem:[%s2019 + $0x9c] sm:$0xe]
      %v2466 = vld [vmem:[%s2019 + $0xa8] sm:$0xe]
      %v2467 = vld [vmem:[%s2019 + $0xb4] sm:$0xe]
      %v2516 = vrot.slane %v2452, 5
      %v2517 = vrot.slane %v2516, 4
      %v2518 = vrot.slane %v2021, 5
      %v2519 = vsel %vm1298, %v2517, %v2518
      %v2520 = vrot.slane %v2518, 4
      %v2521 = vrot.slane %v2052, 5
      %v2522 = vsel %vm1298, %v2520, %v2521
      %v2523 = vrot.slane %v2453, 5
      %v2524 = vrot.slane %v2523, 4
      %v2525 = vrot.slane %v2023, 5
      %v2526 = vsel %vm1298, %v2524, %v2525
      %v2527 = vrot.slane %v2525, 4
      %v2528 = vrot.slane %v2053, 5
      %v2529 = vsel %vm1298, %v2527, %v2528
      %v2530 = vrot.slane %v2454, 5
      %v2531 = vrot.slane %v2530, 4
      %v2532 = vrot.slane %v2025, 5
      %v2533 = vsel %vm1298, %v2531, %v2532
      %v2534 = vrot.slane %v2532, 4
      %v2535 = vrot.slane %v2054, 5
      %v2536 = vsel %vm1298, %v2534, %v2535
      %v2537 = vrot.slane %v2455, 5
      %v2538 = vrot.slane %v2537, 4
      %v2539 = vrot.slane %v2027, 5
      %v2540 = vsel %vm1298, %v2538, %v2539
      %v2541 = vrot.slane %v2539, 4
      %v2542 = vrot.slane %v2055, 5
      %v2543 = vsel %vm1298, %v2541, %v2542
      %v2544 = vrot.slane %v2456, 5
      %v2545 = vrot.slane %v2544, 4
      %v2546 = vrot.slane %v2029, 5
      %v2547 = vsel %vm1298, %v2545, %v2546
      %v2548 = vrot.slane %v2546, 4
      %v2549 = vrot.slane %v2056, 5
      %v2550 = vsel %vm1298, %v2548, %v2549
      %v2551 = vrot.slane %v2457, 5
      %v2552 = vrot.slane %v2551, 4
      %v2553 = vrot.slane %v2031, 5
      %v2554 = vsel %vm1298, %v2552, %v2553
      %v2555 = vrot.slane %v2553, 4
      %v2556 = vrot.slane %v2057, 5
      %v2557 = vsel %vm1298, %v2555, %v2556
      %v2558 = vrot.slane %v2458, 5
      %v2559 = vrot.slane %v2558, 4
      %v2560 = vrot.slane %v2033, 5
      %v2561 = vsel %vm1298, %v2559, %v2560
      %v2562 = vrot.slane %v2560, 4
      %v2563 = vrot.slane %v2058, 5
      %v2564 = vsel %vm1298, %v2562, %v2563
      %v2565 = vrot.slane %v2459, 5
      %v2566 = vrot.slane %v2565, 4
      %v2567 = vrot.slane %v2035, 5
      %v2568 = vsel %vm1298, %v2566, %v2567
      %v2569 = vrot.slane %v2567, 4
      %v2570 = vrot.slane %v2059, 5
      %v2571 = vsel %vm1298, %v2569, %v2570
      %v2572 = vrot.slane %v2460, 5
      %v2573 = vrot.slane %v2572, 4
      %v2574 = vrot.slane %v2037, 5
      %v2575 = vsel %vm1298, %v2573, %v2574
      %v2576 = vrot.slane %v2574, 4
      %v2577 = vrot.slane %v2060, 5
      %v2578 = vsel %vm1298, %v2576, %v2577
      %v2579 = vrot.slane %v2461, 5
      %v2580 = vrot.slane %v2579, 4
      %v2581 = vrot.slane %v2039, 5
      %v2582 = vsel %vm1298, %v2580, %v2581
      %v2583 = vrot.slane %v2581, 4
      %v2584 = vrot.slane %v2061, 5
      %v2585 = vsel %vm1298, %v2583, %v2584
      %v2586 = vrot.slane %v2462, 5
      %v2587 = vrot.slane %v2586, 4
      %v2588 = vrot.slane %v2041, 5
      %v2589 = vsel %vm1298, %v2587, %v2588
      %v2590 = vrot.slane %v2588, 4
      %v2591 = vrot.slane %v2062, 5
      %v2592 = vsel %vm1298, %v2590, %v2591
      %v2593 = vrot.slane %v2463, 5
      %v2594 = vrot.slane %v2593, 4
      %v2595 = vrot.slane %v2043, 5
      %v2596 = vsel %vm1298, %v2594, %v2595
      %v2597 = vrot.slane %v2595, 4
      %v2598 = vrot.slane %v2063, 5
      %v2599 = vsel %vm1298, %v2597, %v2598
      %v2600 = vrot.slane %v2464, 5
      %v2601 = vrot.slane %v2600, 4
      %v2602 = vrot.slane %v2045, 5
      %v2603 = vsel %vm1298, %v2601, %v2602
      %v2604 = vrot.slane %v2602, 4
      %v2605 = vrot.slane %v2064, 5
      %v2606 = vsel %vm1298, %v2604, %v2605
      %v2607 = vrot.slane %v2465, 5
      %v2608 = vrot.slane %v2607, 4
      %v2609 = vrot.slane %v2047, 5
      %v2610 = vsel %vm1298, %v2608, %v2609
      %v2611 = vrot.slane %v2609, 4
      %v2612 = vrot.slane %v2065, 5
      %v2613 = vsel %vm1298, %v2611, %v2612
      %v2614 = vrot.slane %v2466, 5
      %v2615 = vrot.slane %v2614, 4
      %v2616 = vrot.slane %v2049, 5
      %v2617 = vsel %vm1298, %v2615, %v2616
      %v2618 = vrot.slane %v2616, 4
      %v2619 = vrot.slane %v2066, 5
      %v2620 = vsel %vm1298, %v2618, %v2619
      %v2621 = vrot.slane %v2467, 5
      %v2622 = vrot.slane %v2621, 4
      %v2623 = vrot.slane %v2051, 5
      %v2624 = vsel %vm1298, %v2622, %v2623
      %v2625 = vrot.slane %v2623, 4
      %v2626 = vrot.slane %v2067, 5
      %v2627 = vsel %vm1298, %v2625, %v2626
      %v2644 = vunpack.c.l.b16 %v797
      %v2645 = vunpack.c.l.b16 %v798
      %v2646 = vunpack.c.l.b16 %v799
      %v2647 = vunpack.c.l.b16 %v800
      %v2648 = vunpack.c.l.b16 %v801
      %v2649 = vunpack.c.l.b16 %v802
      %v2650 = vunpack.c.l.b16 %v803
      %v2651 = vunpack.c.l.b16 %v804
      %v2652 = vunpack.c.l.b16 %v805
      %v2653 = vunpack.c.l.b16 %v806
      %v2654 = vunpack.c.l.b16 %v807
      %v2655 = vunpack.c.l.b16 %v808
      %v2656 = vunpack.c.l.b16 %v809
      %v2657 = vunpack.c.l.b16 %v810
      %v2658 = vunpack.c.l.b16 %v811
      %v2659 = vunpack.c.l.b16 %v812
      %v2660 = vunpack.c.l.b16 %v813
      %v2661 = vunpack.c.l.b16 %v814
      %v2662 = vunpack.c.l.b16 %v815
      %v2663 = vunpack.c.l.b16 %v816
      %v2664 = vunpack.c.l.b16 %v817
      %v2665 = vunpack.c.l.b16 %v818
      %v2666 = vunpack.c.l.b16 %v819
      %v2667 = vunpack.c.l.b16 %v820
      %v2668 = vunpack.c.l.b16 %v821
      %v2669 = vunpack.c.l.b16 %v822
      %v2670 = vunpack.c.l.b16 %v823
      %v2671 = vunpack.c.l.b16 %v824
      %v2672 = vunpack.c.l.b16 %v825
      %v2673 = vunpack.c.l.b16 %v826
      %v2674 = vunpack.c.l.b16 %v827
      %v2675 = vunpack.c.l.b16 %v828
      %v2676 = vpack.c.b16 %v2645, %v2644
      %v2677 = vpack.c.b16 %v2647, %v2646
      %v2678 = vpack.c.b16 %v2649, %v2648
      %v2679 = vpack.c.b16 %v2651, %v2650
      %v2680 = vpack.c.b16 %v2653, %v2652
      %v2681 = vpack.c.b16 %v2655, %v2654
      %v2682 = vpack.c.b16 %v2657, %v2656
      %v2683 = vpack.c.b16 %v2659, %v2658
      %v2684 = vpack.c.b16 %v2661, %v2660
      %v2685 = vpack.c.b16 %v2663, %v2662
      %v2686 = vpack.c.b16 %v2665, %v2664
      %v2687 = vpack.c.b16 %v2667, %v2666
      %v2688 = vpack.c.b16 %v2669, %v2668
      %v2689 = vpack.c.b16 %v2671, %v2670
      %v2690 = vpack.c.b16 %v2673, %v2672
      %v2691 = vpack.c.b16 %v2675, %v2674
      %v2692 = vunpack.c.l.b16 %v861
      %v2693 = vunpack.c.l.b16 %v871
      %v2694 = vunpack.c.l.b16 %v885
      %v2695 = vunpack.c.l.b16 %v895
      %v2696 = vunpack.c.l.b16 %v909
      %v2697 = vunpack.c.l.b16 %v919
      %v2698 = vunpack.c.l.b16 %v933
      %v2699 = vunpack.c.l.b16 %v943
      %v2700 = vunpack.c.l.b16 %v957
      %v2701 = vunpack.c.l.b16 %v967
      %v2702 = vunpack.c.l.b16 %v981
      %v2703 = vunpack.c.l.b16 %v991
      %v2704 = vunpack.c.l.b16 %v1005
      %v2705 = vunpack.c.l.b16 %v1015
      %v2706 = vunpack.c.l.b16 %v1029
      %v2707 = vunpack.c.l.b16 %v1039
      %v2708 = vunpack.c.l.b16 %v1053
      %v2709 = vunpack.c.l.b16 %v1063
      %v2710 = vunpack.c.l.b16 %v1077
      %v2711 = vunpack.c.l.b16 %v1087
      %v2712 = vunpack.c.l.b16 %v1101
      %v2713 = vunpack.c.l.b16 %v1111
      %v2714 = vunpack.c.l.b16 %v1125
      %v2715 = vunpack.c.l.b16 %v1135
      %v2716 = vunpack.c.l.b16 %v1149
      %v2717 = vunpack.c.l.b16 %v1159
      %v2718 = vunpack.c.l.b16 %v1173
      %v2719 = vunpack.c.l.b16 %v1183
      %v2720 = vunpack.c.l.b16 %v1197
      %v2721 = vunpack.c.l.b16 %v1207
      %v2722 = vunpack.c.l.b16 %v1221
      %v2723 = vunpack.c.l.b16 %v1231
      %v2724 = vpack.c.b16 %v2693, %v2692
      %v2725 = vpack.c.b16 %v2695, %v2694
      %v2726 = vpack.c.b16 %v2697, %v2696
      %v2727 = vpack.c.b16 %v2699, %v2698
      %v2728 = vpack.c.b16 %v2701, %v2700
      %v2729 = vpack.c.b16 %v2703, %v2702
      %v2730 = vpack.c.b16 %v2705, %v2704
      %v2731 = vpack.c.b16 %v2707, %v2706
      %v2732 = vpack.c.b16 %v2709, %v2708
      %v2733 = vpack.c.b16 %v2711, %v2710
      %v2734 = vpack.c.b16 %v2713, %v2712
      %v2735 = vpack.c.b16 %v2715, %v2714
      %v2736 = vpack.c.b16 %v2717, %v2716
      %v2737 = vpack.c.b16 %v2719, %v2718
      %v2738 = vpack.c.b16 %v2721, %v2720
      %v2739 = vpack.c.b16 %v2723, %v2722
      %2740 = vrot.lane.b32.xlu0 %v2724, 1
      %v2741 = vpop.permute.xlu0 %2740
      %2742 = vrot.lane.b32.xlu0 %v2725, 1
      %v2743 = vpop.permute.xlu0 %2742
      %2744 = vrot.lane.b32.xlu0 %v2726, 1
      %v2745 = vpop.permute.xlu0 %2744
      %2746 = vrot.lane.b32.xlu0 %v2727, 1
      %v2747 = vpop.permute.xlu0 %2746
      %2748 = vrot.lane.b32.xlu0 %v2728, 1
      %v2749 = vpop.permute.xlu0 %2748
      %2750 = vrot.lane.b32.xlu0 %v2729, 1
      %v2751 = vpop.permute.xlu0 %2750
      %2752 = vrot.lane.b32.xlu0 %v2730, 1
      %v2753 = vpop.permute.xlu0 %2752
      %2754 = vrot.lane.b32.xlu0 %v2731, 1
      %v2755 = vpop.permute.xlu0 %2754
      %2756 = vrot.lane.b32.xlu0 %v2732, 1
      %v2757 = vpop.permute.xlu0 %2756
      %2758 = vrot.lane.b32.xlu0 %v2733, 1
      %v2759 = vpop.permute.xlu0 %2758
      %2760 = vrot.lane.b32.xlu0 %v2734, 1
      %v2761 = vpop.permute.xlu0 %2760
      %2762 = vrot.lane.b32.xlu0 %v2735, 1
      %v2763 = vpop.permute.xlu0 %2762
      %2764 = vrot.lane.b32.xlu0 %v2736, 1
      %v2765 = vpop.permute.xlu0 %2764
      %2766 = vrot.lane.b32.xlu0 %v2737, 1
      %v2767 = vpop.permute.xlu0 %2766
      %2768 = vrot.lane.b32.xlu0 %v2738, 1
      %v2769 = vpop.permute.xlu0 %2768
      %2770 = vrot.lane.b32.xlu0 %v2739, 1
      %v2771 = vpop.permute.xlu0 %2770
      %v2772 = vunpack.c.l.b16 %v1302
      %v2773 = vunpack.c.l.b16 %v1305
      %v2774 = vunpack.c.l.b16 %v1309
      %v2775 = vunpack.c.l.b16 %v1312
      %v2776 = vunpack.c.l.b16 %v1316
      %v2777 = vunpack.c.l.b16 %v1319
      %v2778 = vunpack.c.l.b16 %v1323
      %v2779 = vunpack.c.l.b16 %v1326
      %v2780 = vunpack.c.l.b16 %v1330
      %v2781 = vunpack.c.l.b16 %v1333
      %v2782 = vunpack.c.l.b16 %v1337
      %v2783 = vunpack.c.l.b16 %v1340
      %v2784 = vunpack.c.l.b16 %v1344
      %v2785 = vunpack.c.l.b16 %v1347
      %v2786 = vunpack.c.l.b16 %v1351
      %v2787 = vunpack.c.l.b16 %v1354
      %v2788 = vunpack.c.l.b16 %v1358
      %v2789 = vunpack.c.l.b16 %v1361
      %v2790 = vunpack.c.l.b16 %v1365
      %v2791 = vunpack.c.l.b16 %v1368
      %v2792 = vunpack.c.l.b16 %v1372
      %v2793 = vunpack.c.l.b16 %v1375
      %v2794 = vunpack.c.l.b16 %v1379
      %v2795 = vunpack.c.l.b16 %v1382
      %v2796 = vunpack.c.l.b16 %v1386
      %v2797 = vunpack.c.l.b16 %v1389
      %v2798 = vunpack.c.l.b16 %v1393
      %v2799 = vunpack.c.l.b16 %v1396
      %v2800 = vunpack.c.l.b16 %v1400
      %v2801 = vunpack.c.l.b16 %v1403
      %v2802 = vunpack.c.l.b16 %v1407
      %v2803 = vunpack.c.l.b16 %v1410
      %v2804 = vpack.c.b16 %v2773, %v2772
      %v2805 = vpack.c.b16 %v2775, %v2774
      %v2806 = vpack.c.b16 %v2777, %v2776
      %v2807 = vpack.c.b16 %v2779, %v2778
      %v2808 = vpack.c.b16 %v2781, %v2780
      %v2809 = vpack.c.b16 %v2783, %v2782
      %v2810 = vpack.c.b16 %v2785, %v2784
      %v2811 = vpack.c.b16 %v2787, %v2786
      %v2812 = vpack.c.b16 %v2789, %v2788
      %v2813 = vpack.c.b16 %v2791, %v2790
      %v2814 = vpack.c.b16 %v2793, %v2792
      %v2815 = vpack.c.b16 %v2795, %v2794
      %v2816 = vpack.c.b16 %v2797, %v2796
      %v2817 = vpack.c.b16 %v2799, %v2798
      %v2818 = vpack.c.b16 %v2801, %v2800
      %v2819 = vpack.c.b16 %v2803, %v2802
      %2820 = vrot.lane.b32.xlu0 %v2804, 2
      %v2821 = vpop.permute.xlu0 %2820
      %2822 = vrot.lane.b32.xlu0 %v2805, 2
      %v2823 = vpop.permute.xlu0 %2822
      %2824 = vrot.lane.b32.xlu0 %v2806, 2
      %v2825 = vpop.permute.xlu0 %2824
      %2826 = vrot.lane.b32.xlu0 %v2807, 2
      %v2827 = vpop.permute.xlu0 %2826
      %2828 = vrot.lane.b32.xlu0 %v2808, 2
      %v2829 = vpop.permute.xlu0 %2828
      %2830 = vrot.lane.b32.xlu0 %v2809, 2
      %v2831 = vpop.permute.xlu0 %2830
      %2832 = vrot.lane.b32.xlu0 %v2810, 2
      %v2833 = vpop.permute.xlu0 %2832
      %2834 = vrot.lane.b32.xlu0 %v2811, 2
      %v2835 = vpop.permute.xlu0 %2834
      %2836 = vrot.lane.b32.xlu0 %v2812, 2
      %v2837 = vpop.permute.xlu0 %2836
      %2838 = vrot.lane.b32.xlu0 %v2813, 2
      %v2839 = vpop.permute.xlu0 %2838
      %2840 = vrot.lane.b32.xlu0 %v2814, 2
      %v2841 = vpop.permute.xlu0 %2840
      %2842 = vrot.lane.b32.xlu0 %v2815, 2
      %v2843 = vpop.permute.xlu0 %2842
      %2844 = vrot.lane.b32.xlu0 %v2816, 2
      %v2845 = vpop.permute.xlu0 %2844
      %2846 = vrot.lane.b32.xlu0 %v2817, 2
      %v2847 = vpop.permute.xlu0 %2846
      %2848 = vrot.lane.b32.xlu0 %v2818, 2
      %v2849 = vpop.permute.xlu0 %2848
      %2850 = vrot.lane.b32.xlu0 %v2819, 2
      %v2851 = vpop.permute.xlu0 %2850
      %v2868 = vunpack.c.l.b16 %v1411
      %v2869 = vunpack.c.l.b16 %v1412
      %v2870 = vunpack.c.l.b16 %v1413
      %v2871 = vunpack.c.l.b16 %v1414
      %v2872 = vunpack.c.l.b16 %v1415
      %v2873 = vunpack.c.l.b16 %v1416
      %v2874 = vunpack.c.l.b16 %v1417
      %v2875 = vunpack.c.l.b16 %v1418
      %v2876 = vunpack.c.l.b16 %v1419
      %v2877 = vunpack.c.l.b16 %v1420
      %v2878 = vunpack.c.l.b16 %v1421
      %v2879 = vunpack.c.l.b16 %v1422
      %v2880 = vunpack.c.l.b16 %v1423
      %v2881 = vunpack.c.l.b16 %v1424
      %v2882 = vunpack.c.l.b16 %v1425
      %v2883 = vunpack.c.l.b16 %v1426
      %v2884 = vunpack.c.l.b16 %v1427
      %v2885 = vunpack.c.l.b16 %v1428
      %v2886 = vunpack.c.l.b16 %v1429
      %v2887 = vunpack.c.l.b16 %v1430
      %v2888 = vunpack.c.l.b16 %v1431
      %v2889 = vunpack.c.l.b16 %v1432
      %v2890 = vunpack.c.l.b16 %v1433
      %v2891 = vunpack.c.l.b16 %v1434
      %v2892 = vunpack.c.l.b16 %v1435
      %v2893 = vunpack.c.l.b16 %v1436
      %v2894 = vunpack.c.l.b16 %v1437
      %v2895 = vunpack.c.l.b16 %v1438
      %v2896 = vunpack.c.l.b16 %v1439
      %v2897 = vunpack.c.l.b16 %v1440
      %v2898 = vunpack.c.l.b16 %v1441
      %v2899 = vunpack.c.l.b16 %v1442
      %v2900 = vpack.c.b16 %v2869, %v2868
      %v2901 = vpack.c.b16 %v2871, %v2870
      %v2902 = vpack.c.b16 %v2873, %v2872
      %v2903 = vpack.c.b16 %v2875, %v2874
      %v2904 = vpack.c.b16 %v2877, %v2876
      %v2905 = vpack.c.b16 %v2879, %v2878
      %v2906 = vpack.c.b16 %v2881, %v2880
      %v2907 = vpack.c.b16 %v2883, %v2882
      %v2908 = vpack.c.b16 %v2885, %v2884
      %v2909 = vpack.c.b16 %v2887, %v2886
      %v2910 = vpack.c.b16 %v2889, %v2888
      %v2911 = vpack.c.b16 %v2891, %v2890
      %v2912 = vpack.c.b16 %v2893, %v2892
      %v2913 = vpack.c.b16 %v2895, %v2894
      %v2914 = vpack.c.b16 %v2897, %v2896
      %v2915 = vpack.c.b16 %v2899, %v2898
      %2916 = vrot.lane.b32.xlu0 %v2900, 3
      %v2917 = vpop.permute.xlu0 %2916
      %2918 = vrot.lane.b32.xlu0 %v2901, 3
      %v2919 = vpop.permute.xlu0 %2918
      %2920 = vrot.lane.b32.xlu0 %v2902, 3
      %v2921 = vpop.permute.xlu0 %2920
      %2922 = vrot.lane.b32.xlu0 %v2903, 3
      %v2923 = vpop.permute.xlu0 %2922
      %2924 = vrot.lane.b32.xlu0 %v2904, 3
      %v2925 = vpop.permute.xlu0 %2924
      %2926 = vrot.lane.b32.xlu0 %v2905, 3
      %v2927 = vpop.permute.xlu0 %2926
      %2928 = vrot.lane.b32.xlu0 %v2906, 3
      %v2929 = vpop.permute.xlu0 %2928
      %2930 = vrot.lane.b32.xlu0 %v2907, 3
      %v2931 = vpop.permute.xlu0 %2930
      %2932 = vrot.lane.b32.xlu0 %v2908, 3
      %v2933 = vpop.permute.xlu0 %2932
      %2934 = vrot.lane.b32.xlu0 %v2909, 3
      %v2935 = vpop.permute.xlu0 %2934
      %2936 = vrot.lane.b32.xlu0 %v2910, 3
      %v2937 = vpop.permute.xlu0 %2936
      %2938 = vrot.lane.b32.xlu0 %v2911, 3
      %v2939 = vpop.permute.xlu0 %2938
      %2940 = vrot.lane.b32.xlu0 %v2912, 3
      %v2941 = vpop.permute.xlu0 %2940
      %2942 = vrot.lane.b32.xlu0 %v2913, 3
      %v2943 = vpop.permute.xlu0 %2942
      %2944 = vrot.lane.b32.xlu0 %v2914, 3
      %v2945 = vpop.permute.xlu0 %2944
      %2946 = vrot.lane.b32.xlu0 %v2915, 3
      %v2947 = vpop.permute.xlu0 %2946
      %v2948 = vunpack.c.l.b16 %v1472
      %v2949 = vunpack.c.l.b16 %v1482
      %v2950 = vunpack.c.l.b16 %v1496
      %v2951 = vunpack.c.l.b16 %v1506
      %v2952 = vunpack.c.l.b16 %v1520
      %v2953 = vunpack.c.l.b16 %v1530
      %v2954 = vunpack.c.l.b16 %v1544
      %v2955 = vunpack.c.l.b16 %v1554
      %v2956 = vunpack.c.l.b16 %v1568
      %v2957 = vunpack.c.l.b16 %v1578
      %v2958 = vunpack.c.l.b16 %v1592
      %v2959 = vunpack.c.l.b16 %v1602
      %v2960 = vunpack.c.l.b16 %v1616
      %v2961 = vunpack.c.l.b16 %v1626
      %v2962 = vunpack.c.l.b16 %v1640
      %v2963 = vunpack.c.l.b16 %v1650
      %v2964 = vunpack.c.l.b16 %v1664
      %v2965 = vunpack.c.l.b16 %v1674
      %v2966 = vunpack.c.l.b16 %v1688
      %v2967 = vunpack.c.l.b16 %v1698
      %v2968 = vunpack.c.l.b16 %v1712
      %v2969 = vunpack.c.l.b16 %v1722
      %v2970 = vunpack.c.l.b16 %v1736
      %v2971 = vunpack.c.l.b16 %v1746
      %v2972 = vunpack.c.l.b16 %v1760
      %v2973 = vunpack.c.l.b16 %v1770
      %v2974 = vunpack.c.l.b16 %v1784
      %v2975 = vunpack.c.l.b16 %v1794
      %v2976 = vunpack.c.l.b16 %v1808
      %v2977 = vunpack.c.l.b16 %v1818
      %v2978 = vunpack.c.l.b16 %v1832
      %v2979 = vunpack.c.l.b16 %v1842
      %v2980 = vpack.c.b16 %v2949, %v2948
      %v2981 = vpack.c.b16 %v2951, %v2950
      %v2982 = vpack.c.b16 %v2953, %v2952
      %v2983 = vpack.c.b16 %v2955, %v2954
      %v2984 = vpack.c.b16 %v2957, %v2956
      %v2985 = vpack.c.b16 %v2959, %v2958
      %v2986 = vpack.c.b16 %v2961, %v2960
      %v2987 = vpack.c.b16 %v2963, %v2962
      %v2988 = vpack.c.b16 %v2965, %v2964
      %v2989 = vpack.c.b16 %v2967, %v2966
      %v2990 = vpack.c.b16 %v2969, %v2968
      %v2991 = vpack.c.b16 %v2971, %v2970
      %v2992 = vpack.c.b16 %v2973, %v2972
      %v2993 = vpack.c.b16 %v2975, %v2974
      %v2994 = vpack.c.b16 %v2977, %v2976
      %v2995 = vpack.c.b16 %v2979, %v2978
      %2996 = vrot.lane.b32.xlu0 %v2980, 4
      %v2997 = vpop.permute.xlu0 %2996
      %2998 = vrot.lane.b32.xlu0 %v2981, 4
      %v2999 = vpop.permute.xlu0 %2998
      %3000 = vrot.lane.b32.xlu0 %v2982, 4
      %v3001 = vpop.permute.xlu0 %3000
      %3002 = vrot.lane.b32.xlu0 %v2983, 4
      %v3003 = vpop.permute.xlu0 %3002
      %3004 = vrot.lane.b32.xlu0 %v2984, 4
      %v3005 = vpop.permute.xlu0 %3004
      %3006 = vrot.lane.b32.xlu0 %v2985, 4
      %v3007 = vpop.permute.xlu0 %3006
      %3008 = vrot.lane.b32.xlu0 %v2986, 4
      %v3009 = vpop.permute.xlu0 %3008
      %3010 = vrot.lane.b32.xlu0 %v2987, 4
      %v3011 = vpop.permute.xlu0 %3010
      %3012 = vrot.lane.b32.xlu0 %v2988, 4
      %v3013 = vpop.permute.xlu0 %3012
      %3014 = vrot.lane.b32.xlu0 %v2989, 4
      %v3015 = vpop.permute.xlu0 %3014
      %3016 = vrot.lane.b32.xlu0 %v2990, 4
      %v3017 = vpop.permute.xlu0 %3016
      %3018 = vrot.lane.b32.xlu0 %v2991, 4
      %v3019 = vpop.permute.xlu0 %3018
      %3020 = vrot.lane.b32.xlu0 %v2992, 4
      %v3021 = vpop.permute.xlu0 %3020
      %3022 = vrot.lane.b32.xlu0 %v2993, 4
      %v3023 = vpop.permute.xlu0 %3022
      %3024 = vrot.lane.b32.xlu0 %v2994, 4
      %v3025 = vpop.permute.xlu0 %3024
      %3026 = vrot.lane.b32.xlu0 %v2995, 4
      %v3027 = vpop.permute.xlu0 %3026
      %v3028 = vunpack.c.l.b16 %v1910
      %v3029 = vunpack.c.l.b16 %v1913
      %v3030 = vunpack.c.l.b16 %v1917
      %v3031 = vunpack.c.l.b16 %v1920
      %v3032 = vunpack.c.l.b16 %v1924
      %v3033 = vunpack.c.l.b16 %v1927
      %v3034 = vunpack.c.l.b16 %v1931
      %v3035 = vunpack.c.l.b16 %v1934
      %v3036 = vunpack.c.l.b16 %v1938
      %v3037 = vunpack.c.l.b16 %v1941
      %v3038 = vunpack.c.l.b16 %v1945
      %v3039 = vunpack.c.l.b16 %v1948
      %v3040 = vunpack.c.l.b16 %v1952
      %v3041 = vunpack.c.l.b16 %v1955
      %v3042 = vunpack.c.l.b16 %v1959
      %v3043 = vunpack.c.l.b16 %v1962
      %v3044 = vunpack.c.l.b16 %v1966
      %v3045 = vunpack.c.l.b16 %v1969
      %v3046 = vunpack.c.l.b16 %v1973
      %v3047 = vunpack.c.l.b16 %v1976
      %v3048 = vunpack.c.l.b16 %v1980
      %v3049 = vunpack.c.l.b16 %v1983
      %v3050 = vunpack.c.l.b16 %v1987
      %v3051 = vunpack.c.l.b16 %v1990
      %v3052 = vunpack.c.l.b16 %v1994
      %v3053 = vunpack.c.l.b16 %v1997
      %v3054 = vunpack.c.l.b16 %v2001
      %v3055 = vunpack.c.l.b16 %v2004
      %v3056 = vunpack.c.l.b16 %v2008
      %v3057 = vunpack.c.l.b16 %v2011
      %v3058 = vunpack.c.l.b16 %v2015
      %v3059 = vunpack.c.l.b16 %v2018
      %v3060 = vpack.c.b16 %v3029, %v3028
      %v3061 = vpack.c.b16 %v3031, %v3030
      %v3062 = vpack.c.b16 %v3033, %v3032
      %v3063 = vpack.c.b16 %v3035, %v3034
      %v3064 = vpack.c.b16 %v3037, %v3036
      %v3065 = vpack.c.b16 %v3039, %v3038
      %v3066 = vpack.c.b16 %v3041, %v3040
      %v3067 = vpack.c.b16 %v3043, %v3042
      %v3068 = vpack.c.b16 %v3045, %v3044
      %v3069 = vpack.c.b16 %v3047, %v3046
      %v3070 = vpack.c.b16 %v3049, %v3048
      %v3071 = vpack.c.b16 %v3051, %v3050
      %v3072 = vpack.c.b16 %v3053, %v3052
      %v3073 = vpack.c.b16 %v3055, %v3054
      %v3074 = vpack.c.b16 %v3057, %v3056
      %v3075 = vpack.c.b16 %v3059, %v3058
      %3076 = vrot.lane.b32.xlu0 %v3060, 5
      %v3077 = vpop.permute.xlu0 %3076
      %3078 = vrot.lane.b32.xlu0 %v3061, 5
      %v3079 = vpop.permute.xlu0 %3078
      %3080 = vrot.lane.b32.xlu0 %v3062, 5
      %v3081 = vpop.permute.xlu0 %3080
      %3082 = vrot.lane.b32.xlu0 %v3063, 5
      %v3083 = vpop.permute.xlu0 %3082
      %3084 = vrot.lane.b32.xlu0 %v3064, 5
      %v3085 = vpop.permute.xlu0 %3084
      %3086 = vrot.lane.b32.xlu0 %v3065, 5
      %v3087 = vpop.permute.xlu0 %3086
      %3088 = vrot.lane.b32.xlu0 %v3066, 5
      %v3089 = vpop.permute.xlu0 %3088
      %3090 = vrot.lane.b32.xlu0 %v3067, 5
      %v3091 = vpop.permute.xlu0 %3090
      %3092 = vrot.lane.b32.xlu0 %v3068, 5
      %v3093 = vpop.permute.xlu0 %3092
      %3094 = vrot.lane.b32.xlu0 %v3069, 5
      %v3095 = vpop.permute.xlu0 %3094
      %3096 = vrot.lane.b32.xlu0 %v3070, 5
      %v3097 = vpop.permute.xlu0 %3096
      %3098 = vrot.lane.b32.xlu0 %v3071, 5
      %v3099 = vpop.permute.xlu0 %3098
      %3100 = vrot.lane.b32.xlu0 %v3072, 5
      %v3101 = vpop.permute.xlu0 %3100
      %3102 = vrot.lane.b32.xlu0 %v3073, 5
      %v3103 = vpop.permute.xlu0 %3102
      %3104 = vrot.lane.b32.xlu0 %v3074, 5
      %v3105 = vpop.permute.xlu0 %3104
      %3106 = vrot.lane.b32.xlu0 %v3075, 5
      %v3107 = vpop.permute.xlu0 %3106
      %v3124 = vunpack.c.l.b16 %v2020
      %v3125 = vunpack.c.l.b16 %v2021
      %v3126 = vunpack.c.l.b16 %v2022
      %v3127 = vunpack.c.l.b16 %v2023
      %v3128 = vunpack.c.l.b16 %v2024
      %v3129 = vunpack.c.l.b16 %v2025
      %v3130 = vunpack.c.l.b16 %v2026
      %v3131 = vunpack.c.l.b16 %v2027
      %v3132 = vunpack.c.l.b16 %v2028
      %v3133 = vunpack.c.l.b16 %v2029
      %v3134 = vunpack.c.l.b16 %v2030
      %v3135 = vunpack.c.l.b16 %v2031
      %v3136 = vunpack.c.l.b16 %v2032
      %v3137 = vunpack.c.l.b16 %v2033
      %v3138 = vunpack.c.l.b16 %v2034
      %v3139 = vunpack.c.l.b16 %v2035
      %v3140 = vunpack.c.l.b16 %v2036
      %v3141 = vunpack.c.l.b16 %v2037
      %v3142 = vunpack.c.l.b16 %v2038
      %v3143 = vunpack.c.l.b16 %v2039
      %v3144 = vunpack.c.l.b16 %v2040
      %v3145 = vunpack.c.l.b16 %v2041
      %v3146 = vunpack.c.l.b16 %v2042
      %v3147 = vunpack.c.l.b16 %v2043
      %v3148 = vunpack.c.l.b16 %v2044
      %v3149 = vunpack.c.l.b16 %v2045
      %v3150 = vunpack.c.l.b16 %v2046
      %v3151 = vunpack.c.l.b16 %v2047
      %v3152 = vunpack.c.l.b16 %v2048
      %v3153 = vunpack.c.l.b16 %v2049
      %v3154 = vunpack.c.l.b16 %v2050
      %v3155 = vunpack.c.l.b16 %v2051
      %v3156 = vpack.c.b16 %v3125, %v3124
      %v3157 = vpack.c.b16 %v3127, %v3126
      %v3158 = vpack.c.b16 %v3129, %v3128
      %v3159 = vpack.c.b16 %v3131, %v3130
      %v3160 = vpack.c.b16 %v3133, %v3132
      %v3161 = vpack.c.b16 %v3135, %v3134
      %v3162 = vpack.c.b16 %v3137, %v3136
      %v3163 = vpack.c.b16 %v3139, %v3138
      %v3164 = vpack.c.b16 %v3141, %v3140
      %v3165 = vpack.c.b16 %v3143, %v3142
      %v3166 = vpack.c.b16 %v3145, %v3144
      %v3167 = vpack.c.b16 %v3147, %v3146
      %v3168 = vpack.c.b16 %v3149, %v3148
      %v3169 = vpack.c.b16 %v3151, %v3150
      %v3170 = vpack.c.b16 %v3153, %v3152
      %v3171 = vpack.c.b16 %v3155, %v3154
      %3172 = vrot.lane.b32.xlu0 %v3156, 6
      %v3173 = vpop.permute.xlu0 %3172
      %3174 = vrot.lane.b32.xlu0 %v3157, 6
      %v3175 = vpop.permute.xlu0 %3174
      %3176 = vrot.lane.b32.xlu0 %v3158, 6
      %v3177 = vpop.permute.xlu0 %3176
      %3178 = vrot.lane.b32.xlu0 %v3159, 6
      %v3179 = vpop.permute.xlu0 %3178
      %3180 = vrot.lane.b32.xlu0 %v3160, 6
      %v3181 = vpop.permute.xlu0 %3180
      %3182 = vrot.lane.b32.xlu0 %v3161, 6
      %v3183 = vpop.permute.xlu0 %3182
      %3184 = vrot.lane.b32.xlu0 %v3162, 6
      %v3185 = vpop.permute.xlu0 %3184
      %3186 = vrot.lane.b32.xlu0 %v3163, 6
      %v3187 = vpop.permute.xlu0 %3186
      %3188 = vrot.lane.b32.xlu0 %v3164, 6
      %v3189 = vpop.permute.xlu0 %3188
      %3190 = vrot.lane.b32.xlu0 %v3165, 6
      %v3191 = vpop.permute.xlu0 %3190
      %3192 = vrot.lane.b32.xlu0 %v3166, 6
      %v3193 = vpop.permute.xlu0 %3192
      %3194 = vrot.lane.b32.xlu0 %v3167, 6
      %v3195 = vpop.permute.xlu0 %3194
      %3196 = vrot.lane.b32.xlu0 %v3168, 6
      %v3197 = vpop.permute.xlu0 %3196
      %3198 = vrot.lane.b32.xlu0 %v3169, 6
      %v3199 = vpop.permute.xlu0 %3198
      %3200 = vrot.lane.b32.xlu0 %v3170, 6
      %v3201 = vpop.permute.xlu0 %3200
      %3202 = vrot.lane.b32.xlu0 %v3171, 6
      %v3203 = vpop.permute.xlu0 %3202
      %v3204 = vunpack.c.l.b16 %v2081
      %v3205 = vunpack.c.l.b16 %v2091
      %v3206 = vunpack.c.l.b16 %v2105
      %v3207 = vunpack.c.l.b16 %v2115
      %v3208 = vunpack.c.l.b16 %v2129
      %v3209 = vunpack.c.l.b16 %v2139
      %v3210 = vunpack.c.l.b16 %v2153
      %v3211 = vunpack.c.l.b16 %v2163
      %v3212 = vunpack.c.l.b16 %v2177
      %v3213 = vunpack.c.l.b16 %v2187
      %v3214 = vunpack.c.l.b16 %v2201
      %v3215 = vunpack.c.l.b16 %v2211
      %v3216 = vunpack.c.l.b16 %v2225
      %v3217 = vunpack.c.l.b16 %v2235
      %v3218 = vunpack.c.l.b16 %v2249
      %v3219 = vunpack.c.l.b16 %v2259
      %v3220 = vunpack.c.l.b16 %v2273
      %v3221 = vunpack.c.l.b16 %v2283
      %v3222 = vunpack.c.l.b16 %v2297
      %v3223 = vunpack.c.l.b16 %v2307
      %v3224 = vunpack.c.l.b16 %v2321
      %v3225 = vunpack.c.l.b16 %v2331
      %v3226 = vunpack.c.l.b16 %v2345
      %v3227 = vunpack.c.l.b16 %v2355
      %v3228 = vunpack.c.l.b16 %v2369
      %v3229 = vunpack.c.l.b16 %v2379
      %v3230 = vunpack.c.l.b16 %v2393
      %v3231 = vunpack.c.l.b16 %v2403
      %v3232 = vunpack.c.l.b16 %v2417
      %v3233 = vunpack.c.l.b16 %v2427
      %v3234 = vunpack.c.l.b16 %v2441
      %v3235 = vunpack.c.l.b16 %v2451
      %v3236 = vpack.c.b16 %v3205, %v3204
      %v3237 = vpack.c.b16 %v3207, %v3206
      %v3238 = vpack.c.b16 %v3209, %v3208
      %v3239 = vpack.c.b16 %v3211, %v3210
      %v3240 = vpack.c.b16 %v3213, %v3212
      %v3241 = vpack.c.b16 %v3215, %v3214
      %v3242 = vpack.c.b16 %v3217, %v3216
      %v3243 = vpack.c.b16 %v3219, %v3218
      %v3244 = vpack.c.b16 %v3221, %v3220
      %v3245 = vpack.c.b16 %v3223, %v3222
      %v3246 = vpack.c.b16 %v3225, %v3224
      %v3247 = vpack.c.b16 %v3227, %v3226
      %v3248 = vpack.c.b16 %v3229, %v3228
      %v3249 = vpack.c.b16 %v3231, %v3230
      %v3250 = vpack.c.b16 %v3233, %v3232
      %v3251 = vpack.c.b16 %v3235, %v3234
      %3252 = vrot.lane.b32.xlu0 %v3236, 7
      %v3253 = vpop.permute.xlu0 %3252
      %3254 = vrot.lane.b32.xlu0 %v3237, 7
      %v3255 = vpop.permute.xlu0 %3254
      %3256 = vrot.lane.b32.xlu0 %v3238, 7
      %v3257 = vpop.permute.xlu0 %3256
      %3258 = vrot.lane.b32.xlu0 %v3239, 7
      %v3259 = vpop.permute.xlu0 %3258
      %3260 = vrot.lane.b32.xlu0 %v3240, 7
      %v3261 = vpop.permute.xlu0 %3260
      %3262 = vrot.lane.b32.xlu0 %v3241, 7
      %v3263 = vpop.permute.xlu0 %3262
      %3264 = vrot.lane.b32.xlu0 %v3242, 7
      %v3265 = vpop.permute.xlu0 %3264
      %3266 = vrot.lane.b32.xlu0 %v3243, 7
      %v3267 = vpop.permute.xlu0 %3266
      %3268 = vrot.lane.b32.xlu0 %v3244, 7
      %v3269 = vpop.permute.xlu0 %3268
      %3270 = vrot.lane.b32.xlu0 %v3245, 7
      %v3271 = vpop.permute.xlu0 %3270
      %3272 = vrot.lane.b32.xlu0 %v3246, 7
      %v3273 = vpop.permute.xlu0 %3272
      %3274 = vrot.lane.b32.xlu0 %v3247, 7
      %v3275 = vpop.permute.xlu0 %3274
      %3276 = vrot.lane.b32.xlu0 %v3248, 7
      %v3277 = vpop.permute.xlu0 %3276
      %3278 = vrot.lane.b32.xlu0 %v3249, 7
      %v3279 = vpop.permute.xlu0 %3278
      %3280 = vrot.lane.b32.xlu0 %v3250, 7
      %v3281 = vpop.permute.xlu0 %3280
      %3282 = vrot.lane.b32.xlu0 %v3251, 7
      %v3283 = vpop.permute.xlu0 %3282
      %v3284 = vunpack.c.l.b16 %v2519
      %v3285 = vunpack.c.l.b16 %v2522
      %v3286 = vunpack.c.l.b16 %v2526
      %v3287 = vunpack.c.l.b16 %v2529
      %v3288 = vunpack.c.l.b16 %v2533
      %v3289 = vunpack.c.l.b16 %v2536
      %v3290 = vunpack.c.l.b16 %v2540
      %v3291 = vunpack.c.l.b16 %v2543
      %v3292 = vunpack.c.l.b16 %v2547
      %v3293 = vunpack.c.l.b16 %v2550
      %v3294 = vunpack.c.l.b16 %v2554
      %v3295 = vunpack.c.l.b16 %v2557
      %v3296 = vunpack.c.l.b16 %v2561
      %v3297 = vunpack.c.l.b16 %v2564
      %v3298 = vunpack.c.l.b16 %v2568
      %v3299 = vunpack.c.l.b16 %v2571
      %v3300 = vunpack.c.l.b16 %v2575
      %v3301 = vunpack.c.l.b16 %v2578
      %v3302 = vunpack.c.l.b16 %v2582
      %v3303 = vunpack.c.l.b16 %v2585
      %v3304 = vunpack.c.l.b16 %v2589
      %v3305 = vunpack.c.l.b16 %v2592
      %v3306 = vunpack.c.l.b16 %v2596
      %v3307 = vunpack.c.l.b16 %v2599
      %v3308 = vunpack.c.l.b16 %v2603
      %v3309 = vunpack.c.l.b16 %v2606
      %v3310 = vunpack.c.l.b16 %v2610
      %v3311 = vunpack.c.l.b16 %v2613
      %v3312 = vunpack.c.l.b16 %v2617
      %v3313 = vunpack.c.l.b16 %v2620
      %v3314 = vunpack.c.l.b16 %v2624
      %v3315 = vunpack.c.l.b16 %v2627
      %v3316 = vpack.c.b16 %v3285, %v3284
      %v3317 = vpack.c.b16 %v3287, %v3286
      %v3318 = vpack.c.b16 %v3289, %v3288
      %v3319 = vpack.c.b16 %v3291, %v3290
      %v3320 = vpack.c.b16 %v3293, %v3292
      %v3321 = vpack.c.b16 %v3295, %v3294
      %v3322 = vpack.c.b16 %v3297, %v3296
      %v3323 = vpack.c.b16 %v3299, %v3298
      %v3324 = vpack.c.b16 %v3301, %v3300
      %v3325 = vpack.c.b16 %v3303, %v3302
      %v3326 = vpack.c.b16 %v3305, %v3304
      %v3327 = vpack.c.b16 %v3307, %v3306
      %v3328 = vpack.c.b16 %v3309, %v3308
      %v3329 = vpack.c.b16 %v3311, %v3310
      %v3330 = vpack.c.b16 %v3313, %v3312
      %v3331 = vpack.c.b16 %v3315, %v3314
      %3332 = vrot.lane.b32.xlu0 %v3316, 8
      %v3333 = vpop.permute.xlu0 %3332
      %3334 = vrot.lane.b32.xlu0 %v3317, 8
      %v3335 = vpop.permute.xlu0 %3334
      %3336 = vrot.lane.b32.xlu0 %v3318, 8
      %v3337 = vpop.permute.xlu0 %3336
      %3338 = vrot.lane.b32.xlu0 %v3319, 8
      %v3339 = vpop.permute.xlu0 %3338
      %3340 = vrot.lane.b32.xlu0 %v3320, 8
      %v3341 = vpop.permute.xlu0 %3340
      %3342 = vrot.lane.b32.xlu0 %v3321, 8
      %v3343 = vpop.permute.xlu0 %3342
      %3344 = vrot.lane.b32.xlu0 %v3322, 8
      %v3345 = vpop.permute.xlu0 %3344
      %3346 = vrot.lane.b32.xlu0 %v3323, 8
      %v3347 = vpop.permute.xlu0 %3346
      %3348 = vrot.lane.b32.xlu0 %v3324, 8
      %v3349 = vpop.permute.xlu0 %3348
      %3350 = vrot.lane.b32.xlu0 %v3325, 8
      %v3351 = vpop.permute.xlu0 %3350
      %3352 = vrot.lane.b32.xlu0 %v3326, 8
      %v3353 = vpop.permute.xlu0 %3352
      %3354 = vrot.lane.b32.xlu0 %v3327, 8
      %v3355 = vpop.permute.xlu0 %3354
      %3356 = vrot.lane.b32.xlu0 %v3328, 8
      %v3357 = vpop.permute.xlu0 %3356
      %3358 = vrot.lane.b32.xlu0 %v3329, 8
      %v3359 = vpop.permute.xlu0 %3358
      %3360 = vrot.lane.b32.xlu0 %v3330, 8
      %v3361 = vpop.permute.xlu0 %3360
      %3362 = vrot.lane.b32.xlu0 %v3331, 8
      %v3363 = vpop.permute.xlu0 %3362
      %vm3364 = vcmask 7168
      %v3367 = vsel %vm3364, %v2676, %v2741
      %v3370 = vsel %vm3364, %v2677, %v2743
      %v3373 = vsel %vm3364, %v2678, %v2745
      %v3376 = vsel %vm3364, %v2679, %v2747
      %v3379 = vsel %vm3364, %v2680, %v2749
      %v3382 = vsel %vm3364, %v2681, %v2751
      %v3385 = vsel %vm3364, %v2682, %v2753
      %v3388 = vsel %vm3364, %v2683, %v2755
      %v3391 = vsel %vm3364, %v2684, %v2757
      %v3394 = vsel %vm3364, %v2685, %v2759
      %v3397 = vsel %vm3364, %v2686, %v2761
      %v3400 = vsel %vm3364, %v2687, %v2763
      %v3403 = vsel %vm3364, %v2688, %v2765
      %v3406 = vsel %vm3364, %v2689, %v2767
      %v3409 = vsel %vm3364, %v2690, %v2769
      %v3412 = vsel %vm3364, %v2691, %v2771
      %vm3413 = vcmask 15360
      %v3415 = vsel %vm3413, %v3367, %v2821
      %v3417 = vsel %vm3413, %v3370, %v2823
      %v3419 = vsel %vm3413, %v3373, %v2825
      %v3421 = vsel %vm3413, %v3376, %v2827
      %v3423 = vsel %vm3413, %v3379, %v2829
      %v3425 = vsel %vm3413, %v3382, %v2831
      %v3427 = vsel %vm3413, %v3385, %v2833
      %v3429 = vsel %vm3413, %v3388, %v2835
      %v3431 = vsel %vm3413, %v3391, %v2837
      %v3433 = vsel %vm3413, %v3394, %v2839
      %v3435 = vsel %vm3413, %v3397, %v2841
      %v3437 = vsel %vm3413, %v3400, %v2843
      %v3439 = vsel %vm3413, %v3403, %v2845
      %v3441 = vsel %vm3413, %v3406, %v2847
      %v3443 = vsel %vm3413, %v3409, %v2849
      %v3445 = vsel %vm3413, %v3412, %v2851
      %vm3446 = vcmask 23552
      %v3448 = vsel %vm3446, %v3415, %v2917
      %v3450 = vsel %vm3446, %v3417, %v2919
      %v3452 = vsel %vm3446, %v3419, %v2921
      %v3454 = vsel %vm3446, %v3421, %v2923
      %v3456 = vsel %vm3446, %v3423, %v2925
      %v3458 = vsel %vm3446, %v3425, %v2927
      %v3460 = vsel %vm3446, %v3427, %v2929
      %v3462 = vsel %vm3446, %v3429, %v2931
      %v3464 = vsel %vm3446, %v3431, %v2933
      %v3466 = vsel %vm3446, %v3433, %v2935
      %v3468 = vsel %vm3446, %v3435, %v2937
      %v3470 = vsel %vm3446, %v3437, %v2939
      %v3472 = vsel %vm3446, %v3439, %v2941
      %v3474 = vsel %vm3446, %v3441, %v2943
      %v3476 = vsel %vm3446, %v3443, %v2945
      %v3478 = vsel %vm3446, %v3445, %v2947
      %vm3479 = vcmask 31744
      %v3481 = vsel %vm3479, %v3448, %v2997
      %v3483 = vsel %vm3479, %v3450, %v2999
      %v3485 = vsel %vm3479, %v3452, %v3001
      %v3487 = vsel %vm3479, %v3454, %v3003
      %v3489 = vsel %vm3479, %v3456, %v3005
      %v3491 = vsel %vm3479, %v3458, %v3007
      %v3493 = vsel %vm3479, %v3460, %v3009
      %v3495 = vsel %vm3479, %v3462, %v3011
      %v3497 = vsel %vm3479, %v3464, %v3013
      %v3499 = vsel %vm3479, %v3466, %v3015
      %v3501 = vsel %vm3479, %v3468, %v3017
      %v3503 = vsel %vm3479, %v3470, %v3019
      %v3505 = vsel %vm3479, %v3472, %v3021
      %v3507 = vsel %vm3479, %v3474, %v3023
      %v3509 = vsel %vm3479, %v3476, %v3025
      %v3511 = vsel %vm3479, %v3478, %v3027
      %vm3512 = vcmask 39936
      %v3514 = vsel %vm3512, %v3481, %v3077
      %v3516 = vsel %vm3512, %v3483, %v3079
      %v3518 = vsel %vm3512, %v3485, %v3081
      %v3520 = vsel %vm3512, %v3487, %v3083
      %v3522 = vsel %vm3512, %v3489, %v3085
      %v3524 = vsel %vm3512, %v3491, %v3087
      %v3526 = vsel %vm3512, %v3493, %v3089
      %v3528 = vsel %vm3512, %v3495, %v3091
      %v3530 = vsel %vm3512, %v3497, %v3093
      %v3532 = vsel %vm3512, %v3499, %v3095
      %v3534 = vsel %vm3512, %v3501, %v3097
      %v3536 = vsel %vm3512, %v3503, %v3099
      %v3538 = vsel %vm3512, %v3505, %v3101
      %v3540 = vsel %vm3512, %v3507, %v3103
      %v3542 = vsel %vm3512, %v3509, %v3105
      %v3544 = vsel %vm3512, %v3511, %v3107
      %vm3545 = vcmask 48128
      %v3547 = vsel %vm3545, %v3514, %v3173
      %v3549 = vsel %vm3545, %v3516, %v3175
      %v3551 = vsel %vm3545, %v3518, %v3177
      %v3553 = vsel %vm3545, %v3520, %v3179
      %v3555 = vsel %vm3545, %v3522, %v3181
      %v3557 = vsel %vm3545, %v3524, %v3183
      %v3559 = vsel %vm3545, %v3526, %v3185
      %v3561 = vsel %vm3545, %v3528, %v3187
      %v3563 = vsel %vm3545, %v3530, %v3189
      %v3565 = vsel %vm3545, %v3532, %v3191
      %v3567 = vsel %vm3545, %v3534, %v3193
      %v3569 = vsel %vm3545, %v3536, %v3195
      %v3571 = vsel %vm3545, %v3538, %v3197
      %v3573 = vsel %vm3545, %v3540, %v3199
      %v3575 = vsel %vm3545, %v3542, %v3201
      %v3577 = vsel %vm3545, %v3544, %v3203
      %vm3578 = vcmask 56320
      %v3580 = vsel %vm3578, %v3547, %v3253
      %v3582 = vsel %vm3578, %v3549, %v3255
      %v3584 = vsel %vm3578, %v3551, %v3257
      %v3586 = vsel %vm3578, %v3553, %v3259
      %v3588 = vsel %vm3578, %v3555, %v3261
      %v3590 = vsel %vm3578, %v3557, %v3263
      %v3592 = vsel %vm3578, %v3559, %v3265
      %v3594 = vsel %vm3578, %v3561, %v3267
      %v3596 = vsel %vm3578, %v3563, %v3269
      %v3598 = vsel %vm3578, %v3565, %v3271
      %v3600 = vsel %vm3578, %v3567, %v3273
      %v3602 = vsel %vm3578, %v3569, %v3275
      %v3604 = vsel %vm3578, %v3571, %v3277
      %v3606 = vsel %vm3578, %v3573, %v3279
      %v3608 = vsel %vm3578, %v3575, %v3281
      %v3610 = vsel %vm3578, %v3577, %v3283
      %vm3611 = vcmask 64512
      %v3613 = vsel %vm3611, %v3580, %v3333
      %v3615 = vsel %vm3611, %v3582, %v3335
      %v3617 = vsel %vm3611, %v3584, %v3337
      %v3619 = vsel %vm3611, %v3586, %v3339
      %v3621 = vsel %vm3611, %v3588, %v3341
      %v3623 = vsel %vm3611, %v3590, %v3343
      %v3625 = vsel %vm3611, %v3592, %v3345
      %v3627 = vsel %vm3611, %v3594, %v3347
      %v3629 = vsel %vm3611, %v3596, %v3349
      %v3631 = vsel %vm3611, %v3598, %v3351
      %v3633 = vsel %vm3611, %v3600, %v3353
      %v3635 = vsel %vm3611, %v3602, %v3355
      %v3637 = vsel %vm3611, %v3604, %v3357
      %v3639 = vsel %vm3611, %v3606, %v3359
      %v3641 = vsel %vm3611, %v3608, %v3361
      %v3643 = vsel %vm3611, %v3610, %v3363
      %v3644 = vld [vmem:[%s3] sm:$0xf]
      %v3645 = vld [vmem:[%s3 + $0x4] sm:$0x1]
      %v3646 = vld [vmem:[%s4] sm:$0x1]
      %v3648 = vlaneseq
      %v3649 = vshrl.u32 %v3648, 7
      %v3650 = vsub.s32 0, %v3649
      %v3651 = vrot.slane %v3646, %v3650
      %v3655 = vunpack.c.l.b16 %v3644
      %v3656 = vunpack.c.l.b16 %v3645
      %v3657 = vpack.c.b16 %v3656, %v3655
      %vm3658 = vcmask 72704
      %v3659 = vsel %vm3658, %v3613, 0
      %v3661 = vsel %vm3658, %v3615, 0
      %v3663 = vsel %vm3658, %v3617, 0
      %v3665 = vsel %vm3658, %v3619, 0
      %v3667 = vsel %vm3658, %v3621, 0
      %v3669 = vsel %vm3658, %v3623, 0
      %v3671 = vsel %vm3658, %v3625, 0
      %v3673 = vsel %vm3658, %v3627, 0
      %v3675 = vsel %vm3658, %v3629, 0
      %v3677 = vsel %vm3658, %v3631, 0
      %v3679 = vsel %vm3658, %v3633, 0
      %v3681 = vsel %vm3658, %v3635, 0
      %v3683 = vsel %vm3658, %v3637, 0
      %v3685 = vsel %vm3658, %v3639, 0
      %v3687 = vsel %vm3658, %v3641, 0
      %v3689 = vsel %vm3658, %v3643, 0
      %vm3691 = vcmask 1043456
      %vm3692 = vcmask 1044480
      %v3693 = vsel %vm3691, 4294967295, 65535
      %v3694 = vsel %vm3692, %v3693, 0
      %v3696 = vand.u32 %v3657, %v3694
      %3698 = vmatprep.subr.bf16.mxu0 0
      %3699 = vmatpush1.bf16.msra.mxu0 %v3696
      %3700 = vmatprep.subr.bf16.mxu0 0
      %3701 = vmatpush1.bf16.msra.mxu0 0
      %3702 = vmatprep.subr.bf16.mxu0 0
      %3703 = vmatpush1.bf16.msra.mxu0 0
      %3704 = vmatprep.subr.bf16.mxu0 0
      %3705 = vmatpush1.bf16.msra.mxu0 0
      %3706 = vmatprep.subr.bf16.mxu0 0
      %3707 = vmatpush1.bf16.msra.mxu0 0
      %3708 = vmatprep.subr.bf16.mxu0 0
      %3709 = vmatpush1.bf16.msra.mxu0 0
      %3710 = vmatprep.subr.bf16.mxu0 0
      %3711 = vmatpush1.bf16.msra.mxu0 0
      %3712 = vmatprep.subr.bf16.mxu0 0
      %3713 = vmatpush1.bf16.msra.mxu0 0
      %3714 = vmatprep.subr.bf16.mxu0 0
      %3715 = vmatpush1.bf16.msra.mxu0 0
      %3716 = vmatprep.subr.bf16.mxu0 0
      %3717 = vmatpush1.bf16.msra.mxu0 0
      %3718 = vmatprep.subr.bf16.mxu0 0
      %3719 = vmatpush1.bf16.msra.mxu0 0
      %3720 = vmatprep.subr.bf16.mxu0 0
      %3721 = vmatpush1.bf16.msra.mxu0 0
      %3722 = vmatprep.subr.bf16.mxu0 0
      %3723 = vmatpush1.bf16.msra.mxu0 0
      %3724 = vmatprep.subr.bf16.mxu0 0
      %3725 = vmatpush1.bf16.msra.mxu0 0
      %3726 = vmatprep.subr.bf16.mxu0 0
      %3727 = vmatpush1.bf16.msra.mxu0 0
      %3728 = vmatprep.subr.bf16.mxu0 0
      %3729 = vmatpush1.bf16.msra.mxu0 0
      %3730 = vmatprep.mubr.bf16.mxu0 0
      %3731 = vmatmul.mubr.bf16.gmra.mrb[0].mxu0 %v3659
      %v3732 = vpop.f32.mrb[0].mxu0
      %v3733 = vadd.f32 %v3651, %v3732
      %v3734 = vpop.f32.mrb[0].mxu0
      %v3735 = vpop.f32.mrb[0].mxu0
      %v3736 = vadd.f32 %v3651, %v3735
      %v3737 = vpop.f32.mrb[0].mxu0
      %3738 = vmatprep.mubr.bf16.mxu0 0
      %3739 = vmatmul.mubr.bf16.gmra.mrb[0].mxu0 %v3661
      %v3740 = vpop.f32.mrb[0].mxu0
      %v3741 = vadd.f32 %v3651, %v3740
      %v3742 = vpop.f32.mrb[0].mxu0
      %v3743 = vpop.f32.mrb[0].mxu0
      %v3744 = vadd.f32 %v3651, %v3743
      %v3745 = vpop.f32.mrb[0].mxu0
      %3746 = vmatprep.mubr.bf16.mxu0 0
      %3747 = vmatmul.mubr.bf16.gmra.mrb[0].mxu0 %v3663
      %v3748 = vpop.f32.mrb[0].mxu0
      %v3749 = vadd.f32 %v3651, %v3748
      %v3750 = vpop.f32.mrb[0].mxu0
      %v3751 = vpop.f32.mrb[0].mxu0
      %v3752 = vadd.f32 %v3651, %v3751
      %v3753 = vpop.f32.mrb[0].mxu0
      %3754 = vmatprep.mubr.bf16.mxu0 0
      %3755 = vmatmul.mubr.bf16.gmra.mrb[0].mxu0 %v3665
      %v3756 = vpop.f32.mrb[0].mxu0
      %v3757 = vadd.f32 %v3651, %v3756
      %v3758 = vpop.f32.mrb[0].mxu0
      %v3759 = vpop.f32.mrb[0].mxu0
      %v3760 = vadd.f32 %v3651, %v3759
      %v3761 = vpop.f32.mrb[0].mxu0
      %3762 = vmatprep.mubr.bf16.mxu0 0
      %3763 = vmatmul.mubr.bf16.gmra.mrb[0].mxu0 %v3667
      %v3764 = vpop.f32.mrb[0].mxu0
      %v3765 = vadd.f32 %v3651, %v3764
      %v3766 = vpop.f32.mrb[0].mxu0
      %v3767 = vpop.f32.mrb[0].mxu0
      %v3768 = vadd.f32 %v3651, %v3767
      %v3769 = vpop.f32.mrb[0].mxu0
      %3770 = vmatprep.mubr.bf16.mxu0 0
      %3771 = vmatmul.mubr.bf16.gmra.mrb[0].mxu0 %v3669
      %v3772 = vpop.f32.mrb[0].mxu0
      %v3773 = vadd.f32 %v3651, %v3772
      %v3774 = vpop.f32.mrb[0].mxu0
      %v3775 = vpop.f32.mrb[0].mxu0
      %v3776 = vadd.f32 %v3651, %v3775
      %v3777 = vpop.f32.mrb[0].mxu0
      %3778 = vmatprep.mubr.bf16.mxu0 0
      %3779 = vmatmul.mubr.bf16.gmra.mrb[0].mxu0 %v3671
      %v3780 = vpop.f32.mrb[0].mxu0
      %v3781 = vadd.f32 %v3651, %v3780
      %v3782 = vpop.f32.mrb[0].mxu0
      %v3783 = vpop.f32.mrb[0].mxu0
      %v3784 = vadd.f32 %v3651, %v3783
      %v3785 = vpop.f32.mrb[0].mxu0
      %3786 = vmatprep.mubr.bf16.mxu0 0
      %3787 = vmatmul.mubr.bf16.gmra.mrb[0].mxu0 %v3673
      %v3788 = vpop.f32.mrb[0].mxu0
      %v3789 = vadd.f32 %v3651, %v3788
      %v3790 = vpop.f32.mrb[0].mxu0
      %v3791 = vpop.f32.mrb[0].mxu0
      %v3792 = vadd.f32 %v3651, %v3791
      %v3793 = vpop.f32.mrb[0].mxu0
      %3794 = vmatprep.mubr.bf16.mxu0 0
      %3795 = vmatmul.mubr.bf16.gmra.mrb[0].mxu0 %v3675
      %v3796 = vpop.f32.mrb[0].mxu0
      %v3797 = vadd.f32 %v3651, %v3796
      %v3798 = vpop.f32.mrb[0].mxu0
      %v3799 = vpop.f32.mrb[0].mxu0
      %v3800 = vadd.f32 %v3651, %v3799
      %v3801 = vpop.f32.mrb[0].mxu0
      %3802 = vmatprep.mubr.bf16.mxu0 0
      %3803 = vmatmul.mubr.bf16.gmra.mrb[0].mxu0 %v3677
      %v3804 = vpop.f32.mrb[0].mxu0
      %v3805 = vadd.f32 %v3651, %v3804
      %v3806 = vpop.f32.mrb[0].mxu0
      %v3807 = vpop.f32.mrb[0].mxu0
      %v3808 = vadd.f32 %v3651, %v3807
      %v3809 = vpop.f32.mrb[0].mxu0
      %3810 = vmatprep.mubr.bf16.mxu0 0
      %3811 = vmatmul.mubr.bf16.gmra.mrb[0].mxu0 %v3679
      %v3812 = vpop.f32.mrb[0].mxu0
      %v3813 = vadd.f32 %v3651, %v3812
      %v3814 = vpop.f32.mrb[0].mxu0
      %v3815 = vpop.f32.mrb[0].mxu0
      %v3816 = vadd.f32 %v3651, %v3815
      %v3817 = vpop.f32.mrb[0].mxu0
      %3818 = vmatprep.mubr.bf16.mxu0 0
      %3819 = vmatmul.mubr.bf16.gmra.mrb[0].mxu0 %v3681
      %v3820 = vpop.f32.mrb[0].mxu0
      %v3821 = vadd.f32 %v3651, %v3820
      %v3822 = vpop.f32.mrb[0].mxu0
      %v3823 = vpop.f32.mrb[0].mxu0
      %v3824 = vadd.f32 %v3651, %v3823
      %v3825 = vpop.f32.mrb[0].mxu0
      %3826 = vmatprep.mubr.bf16.mxu0 0
      %3827 = vmatmul.mubr.bf16.gmra.mrb[0].mxu0 %v3683
      %v3828 = vpop.f32.mrb[0].mxu0
      %v3829 = vadd.f32 %v3651, %v3828
      %v3830 = vpop.f32.mrb[0].mxu0
      %v3831 = vpop.f32.mrb[0].mxu0
      %v3832 = vadd.f32 %v3651, %v3831
      %v3833 = vpop.f32.mrb[0].mxu0
      %3834 = vmatprep.mubr.bf16.mxu0 0
      %3835 = vmatmul.mubr.bf16.gmra.mrb[0].mxu0 %v3685
      %v3836 = vpop.f32.mrb[0].mxu0
      %v3837 = vadd.f32 %v3651, %v3836
      %v3838 = vpop.f32.mrb[0].mxu0
      %v3839 = vpop.f32.mrb[0].mxu0
      %v3840 = vadd.f32 %v3651, %v3839
      %v3841 = vpop.f32.mrb[0].mxu0
      %3842 = vmatprep.mubr.bf16.mxu0 0
      %3843 = vmatmul.mubr.bf16.gmra.mrb[0].mxu0 %v3687
      %v3844 = vpop.f32.mrb[0].mxu0
      %v3845 = vadd.f32 %v3651, %v3844
      %v3846 = vpop.f32.mrb[0].mxu0
      %v3847 = vpop.f32.mrb[0].mxu0
      %v3848 = vadd.f32 %v3651, %v3847
      %v3849 = vpop.f32.mrb[0].mxu0
      %3850 = vmatprep.mubr.bf16.mxu0 0
      %3851 = vmatmul.mubr.bf16.gmra.mrb[0].mxu0 %v3689
      %v3852 = vpop.f32.mrb[0].mxu0
      %v3853 = vadd.f32 %v3651, %v3852
      %v3854 = vpop.f32.mrb[0].mxu0
      %v3855 = vpop.f32.mrb[0].mxu0
      %v3856 = vadd.f32 %v3651, %v3855
      %v3857 = vpop.f32.mrb[0].mxu0
      %3858 = vdwg.mxu0
      %v3859 = vmax.f32 %v3733, %v3741
      %v3860 = vmax.f32 %v3736, %v3744
      %v3861 = vmax.f32 %v3749, %v3757
      %v3862 = vmax.f32 %v3752, %v3760
      %v3863 = vmax.f32 %v3765, %v3773
      %v3864 = vmax.f32 %v3768, %v3776
      %v3865 = vmax.f32 %v3781, %v3789
      %v3866 = vmax.f32 %v3784, %v3792
      %v3867 = vmax.f32 %v3797, %v3805
      %v3868 = vmax.f32 %v3800, %v3808
      %v3869 = vmax.f32 %v3813, %v3821
      %v3870 = vmax.f32 %v3816, %v3824
      %v3871 = vmax.f32 %v3829, %v3837
      %v3872 = vmax.f32 %v3832, %v3840
      %v3873 = vmax.f32 %v3845, %v3853
      %v3874 = vmax.f32 %v3848, %v3856
      %vm3875 = vcmask 130048
      %3876 = vst.msk [vmem:[#allocation3] sm:$0xff] %vm3875, %v3859
      %3877 = vst.msk [vmem:[#allocation3 + $0x8] sm:$0xff] %vm3875, %v3860
      %3878 = vst.msk [vmem:[#allocation3 + $0x10] sm:$0xff] %vm3875, %v3861
      %3879 = vst.msk [vmem:[#allocation3 + $0x18] sm:$0xff] %vm3875, %v3862
      %3880 = vst.msk [vmem:[#allocation3 + $0x20] sm:$0xff] %vm3875, %v3863
      %3881 = vst.msk [vmem:[#allocation3 + $0x28] sm:$0xff] %vm3875, %v3864
      %3882 = vst.msk [vmem:[#allocation3 + $0x30] sm:$0xff] %vm3875, %v3865
      %3883 = vst.msk [vmem:[#allocation3 + $0x38] sm:$0xff] %vm3875, %v3866
      %3884 = vst.msk [vmem:[#allocation3 + $0x40] sm:$0xff] %vm3875, %v3867
      %3885 = vst.msk [vmem:[#allocation3 + $0x48] sm:$0xff] %vm3875, %v3868
      %3886 = vst.msk [vmem:[#allocation3 + $0x50] sm:$0xff] %vm3875, %v3869
      %3887 = vst.msk [vmem:[#allocation3 + $0x58] sm:$0xff] %vm3875, %v3870
      %3888 = vst.msk [vmem:[#allocation3 + $0x60] sm:$0xff] %vm3875, %v3871
      %3889 = vst.msk [vmem:[#allocation3 + $0x68] sm:$0xff] %vm3875, %v3872
      %3890 = vst.msk [vmem:[#allocation3 + $0x70] sm:$0xff] %vm3875, %v3873
      %3891 = vst.msk [vmem:[#allocation3 + $0x78] sm:$0xff] %vm3875, %v3874
      %v3892 = vld [vmem:[#allocation3] ss:$2 sm:$0xff]
      %s3893 = scalar_lea.vmem [#allocation3], 16
      %v3894 = vld [vmem:[%s3893] ss:$2 sm:$0xff]
      %s3895 = scalar_lea.vmem [#allocation3], 32
      %v3896 = vld [vmem:[%s3895] ss:$2 sm:$0xff]
      %s3897 = scalar_lea.vmem [#allocation3], 48
      %v3898 = vld [vmem:[%s3897] ss:$2 sm:$0xff]
      %s3899 = scalar_lea.vmem [#allocation3], 64
      %v3900 = vld [vmem:[%s3899] ss:$2 sm:$0xff]
      %s3901 = scalar_lea.vmem [#allocation3], 80
      %v3902 = vld [vmem:[%s3901] ss:$2 sm:$0xff]
      %s3903 = scalar_lea.vmem [#allocation3], 96
      %v3904 = vld [vmem:[%s3903] ss:$2 sm:$0xff]
      %s3905 = scalar_lea.vmem [#allocation3], 112
      %v3906 = vld [vmem:[%s3905] ss:$2 sm:$0xff]
      %s3907 = scalar_lea.vmem [#allocation3], 1
      %v3908 = vld [vmem:[%s3907] ss:$2 sm:$0xff]
      %s3909 = scalar_lea.vmem [#allocation3], 17
      %v3910 = vld [vmem:[%s3909] ss:$2 sm:$0xff]
      %s3911 = scalar_lea.vmem [#allocation3], 33
      %v3912 = vld [vmem:[%s3911] ss:$2 sm:$0xff]
      %s3913 = scalar_lea.vmem [#allocation3], 49
      %v3914 = vld [vmem:[%s3913] ss:$2 sm:$0xff]
      %s3915 = scalar_lea.vmem [#allocation3], 65
      %v3916 = vld [vmem:[%s3915] ss:$2 sm:$0xff]
      %s3917 = scalar_lea.vmem [#allocation3], 81
      %v3918 = vld [vmem:[%s3917] ss:$2 sm:$0xff]
      %s3919 = scalar_lea.vmem [#allocation3], 97
      %v3920 = vld [vmem:[%s3919] ss:$2 sm:$0xff]
      %s3921 = scalar_lea.vmem [#allocation3], 113
      %v3922 = vld [vmem:[%s3921] ss:$2 sm:$0xff]
      %v3923 = vmax.f32 %v3892, %v3908
      %v3924 = vmax.f32 %v3894, %v3910
      %v3925 = vmax.f32 %v3896, %v3912
      %v3926 = vmax.f32 %v3898, %v3914
      %v3927 = vmax.f32 %v3900, %v3916
      %v3928 = vmax.f32 %v3902, %v3918
      %v3929 = vmax.f32 %v3904, %v3920
      %v3930 = vmax.f32 %v3906, %v3922
      %v3931 = vpack.c.bf16 %v3923, %v3923
      %v3932 = vpack.c.bf16 %v3924, %v3924
      %v3933 = vpack.c.bf16 %v3925, %v3925
      %v3934 = vpack.c.bf16 %v3926, %v3926
      %v3935 = vpack.c.bf16 %v3927, %v3927
      %v3936 = vpack.c.bf16 %v3928, %v3928
      %v3937 = vpack.c.bf16 %v3929, %v3929
      %v3938 = vpack.c.bf16 %v3930, %v3930
      %vm3939 = vcmask 125952
      %3940 = vst.msk [vmem:[%s262] sm:$0xf] %vm3939, %v3931
      %3941 = vst.msk [vmem:[%s262 + $0x4] sm:$0xf] %vm3939, %v3932
      %3942 = vst.msk [vmem:[%s262 + $0x8] sm:$0xf] %vm3939, %v3933
      %3943 = vst.msk [vmem:[%s262 + $0xc] sm:$0xf] %vm3939, %v3934
      %3944 = vst.msk [vmem:[%s262 + $0x10] sm:$0xf] %vm3939, %v3935
      %3945 = vst.msk [vmem:[%s262 + $0x14] sm:$0xf] %vm3939, %v3936
      %3946 = vst.msk [vmem:[%s262 + $0x18] sm:$0xf] %vm3939, %v3937
      %3947 = vst.msk [vmem:[%s262 + $0x1c] sm:$0xf] %vm3939, %v3938
      %v3948 = vunpack.c.l.bf16 %v3931
      %v3949 = vunpack.c.l.bf16 %v3932
      %v3950 = vunpack.c.l.bf16 %v3933
      %v3951 = vunpack.c.l.bf16 %v3934
      %v3952 = vunpack.c.l.bf16 %v3935
      %v3953 = vunpack.c.l.bf16 %v3936
      %v3954 = vunpack.c.l.bf16 %v3937
      %v3955 = vunpack.c.l.bf16 %v3938
      %v3956 = vsel %vm3875, %v3948, 0.0
      %v3957 = vsel %vm3875, %v3949, 0.0
      %v3958 = vadd.f32 %v3956, %v3957
      %v3959 = vsel %vm3875, %v3950, 0.0
      %v3960 = vadd.f32 %v3958, %v3959
      %v3961 = vsel %vm3875, %v3951, 0.0
      %v3962 = vadd.f32 %v3960, %v3961
      %v3963 = vsel %vm3875, %v3952, 0.0
      %v3964 = vadd.f32 %v3962, %v3963
      %v3965 = vsel %vm3875, %v3953, 0.0
      %v3966 = vadd.f32 %v3964, %v3965
      %v3967 = vsel %vm3875, %v3954, 0.0
      %v3968 = vadd.f32 %v3966, %v3967
      %v3969 = vsel %vm3875, %v3955, 0.0
      %v3970 = vadd.f32 %v3968, %v3969
      %v3971 = vsel %vm3875, %v3970, 0.0
      %v3972 = vrot.slane %v3971, 4
      %v3973 = vadd.f32 %v3971, %v3972
      %v3974 = vrot.slane %v3973, 2
      %v3975 = vadd.f32 %v3973, %v3974
      %v3976 = vrot.slane %v3975, 1
      %v3977 = vadd.f32 %v3975, %v3976
      %v3978 = vmul.f32 %v3948, %v3948
      %v3979 = vmul.f32 %v3949, %v3949
      %v3980 = vmul.f32 %v3950, %v3950
      %v3981 = vmul.f32 %v3951, %v3951
      %v3982 = vmul.f32 %v3952, %v3952
      %v3983 = vmul.f32 %v3953, %v3953
      %v3984 = vmul.f32 %v3954, %v3954
      %v3985 = vmul.f32 %v3955, %v3955
      %v3986 = vsel %vm3875, %v3978, 0.0
      %v3987 = vsel %vm3875, %v3979, 0.0
      %v3988 = vadd.f32 %v3986, %v3987
      %v3989 = vsel %vm3875, %v3980, 0.0
      %v3990 = vadd.f32 %v3988, %v3989
      %v3991 = vsel %vm3875, %v3981, 0.0
      %v3992 = vadd.f32 %v3990, %v3991
      %v3993 = vsel %vm3875, %v3982, 0.0
      %v3994 = vadd.f32 %v3992, %v3993
      %v3995 = vsel %vm3875, %v3983, 0.0
      %v3996 = vadd.f32 %v3994, %v3995
      %v3997 = vsel %vm3875, %v3984, 0.0
      %v3998 = vadd.f32 %v3996, %v3997
      %v3999 = vsel %vm3875, %v3985, 0.0
      %v4000 = vadd.f32 %v3998, %v3999
      %v4001 = vsel %vm3875, %v4000, 0.0
      %v4002 = vrot.slane %v4001, 4
      %v4003 = vadd.f32 %v4001, %v4002
      %v4004 = vrot.slane %v4003, 2
      %v4005 = vadd.f32 %v4003, %v4004
      %v4006 = vrot.slane %v4005, 1
      %v4007 = vadd.f32 %v4005, %v4006
      %vm4008 = vcmask 1040384
      %v4009 = vsel %vm4008, %v3977, %v4007
      %vm4010 = vcmask 123904
      %4011 = vst.msk [vmem:[%s266] sm:$0x3] %vm4010, %v4009
      %p4012 = scmp.lt.s32.totalorder %s22, 1
      %s4013 = scalar_select %p4012, %s22, 1
      %s4014 = smul.addr %s4013, 8
      %s4015 = smul.addr %s4014, 4
      %s4016 = scalar_lea.vmem %s5, %s4015
      %p4017 = scmp.lt.s32.totalorder %s22, 1
      %s4018 = scalar_select %p4017, %s22, 1
      %s4019 = smul.addr %s4018, 2
      %s4020 = scalar_lea.vmem %s6, %s4019
      // Predicated region
      $region41: #{_lambda_.3} parent=39 // pred_check
        %p4021 = pneg %p150
      $region42: #{_lambda_.3} parent=39 // pred_check_branch
        %4023 = sbr.rel (%p4021) target = $region44
      $region43: #{_lambda_.3} parent=39 // pred_region
        _
      $region44: #{_lambda_.3} parent=39 // pred_fallthru
        _
      // Predicated region
      $region45: #{_lambda_.3} parent=39 // pred_check
        %p4024 = pneg %p176
      $region46: #{_lambda_.3} parent=39 // pred_check_branch
        %4026 = sbr.rel (%p4024) target = $region48
      $region47: #{_lambda_.3} parent=39 // pred_region
        _
      $region48: #{_lambda_.3} parent=39 // pred_fallthru
        _
    $region40: #{_lambda_.3} parent=5 // pred_fallthru
      _
    %p4027 = scmp.le.s32.totalorder 2, %s17
    // Predicated region
    $region49: #{_lambda_.3} parent=5 // pred_check
      %p4028 = pneg %p4027
    $region50: #{_lambda_.3} parent=5 // pred_check_branch
      %4030 = sbr.rel (%p4028) target = $region52
    $region51: #{_lambda_.3} parent=5 // pred_region
      %s4031 = ssub.s32 %s17, 2
      // Predicated region
      $region53: #{_lambda_.3} parent=51 // pred_check
        %p4032 = pneg %p156
      $region54: #{_lambda_.3} parent=51 // pred_check_branch
        %4034 = sbr.rel (%p4032) target = $region56
      $region55: #{_lambda_.3} parent=51 // pred_region
        %p4035 = scmp.lt.s32.totalorder %s23, 1
        %s4036 = scalar_select %p4035, %s23, 1
        %s4037 = smul.addr %s4036, 8
        %s4038 = smul.addr %s4037, 4
        %s4039 = scalar_lea.vmem %s5, %s4038
      $region56: #{_lambda_.3} parent=51 // pred_fallthru
        _
      // Predicated region
      $region57: #{_lambda_.3} parent=51 // pred_check
        %p4040 = pneg %p182
      $region58: #{_lambda_.3} parent=51 // pred_check_branch
        %4042 = sbr.rel (%p4040) target = $region60
      $region59: #{_lambda_.3} parent=51 // pred_region
        %p4043 = scmp.lt.s32.totalorder %s23, 1
        %s4044 = scalar_select %p4043, %s23, 1
        %s4045 = smul.addr %s4044, 2
        %s4046 = scalar_lea.vmem %s6, %s4045
      $region60: #{_lambda_.3} parent=51 // pred_fallthru
        _
    $region52: #{_lambda_.3} parent=5 // pred_fallthru
      _
  $region6: #{_lambda_.3} parent=0 // loop_footer
    %s21 = sadd.s32 1, %s17
  $region7: #{_lambda_.3} parent=0 // loop_footer_branch
    %16 = sbr.rel target = $region3
  $region8: #{_lambda_.3} parent=0 // loop_exit
    _

</llo_original>
